<compile_context>
chip_gen: v7x
topology: tpu7x:2x2x1
jax: 0.10.0
libtpu: 0.0.40
codegen_flags: <defaults>
</compile_context>

<pallas_src>
import numpy as np
import jax
import jax.numpy as jnp
from jax.experimental import pallas as pl
from jax.experimental.pallas import tpu as pltpu

MASK_FILL = -1e10      # fp16=False branch of MultiheadAttentionLayer
LN_EPS = 1e-5          # torch.nn.LayerNorm default eps


# --------------------------- decoder stack kernel -----------------------------

def _decoder_stack_kernel(
        emb_ref, enc_ref, trg_amask_ref, src_amask_ref,
        sa_wqkv, sa_bqkv, sa_wo, sa_bo,
        ea_wq, ea_bq, ea_wkv, ea_bkv, ea_wo, ea_bo,
        ln1_g, ln1_b, ln2_g, ln2_b, ln3_g, ln3_b,
        ff_w1, ff_b1, ff_w2, ff_b2,
        hid_ref, attn_ref,
        ctx_ref):
    """grid = (layer,).  One full decoder layer per step; the (B*S, H) activation
    is carried across the layer axis in the resident hid_ref output block."""
    l = pl.program_id(0)
    is_last = l == pl.num_programs(0) - 1

    B, NH, S, Skv = attn_ref.shape          # static
    BS, H = hid_ref.shape
    hd = H // NH
    bf16 = jnp.bfloat16
    f32 = jnp.float32

    # initialize the carried activation from the embeddings at the first layer
    @pl.when(l == 0)
    def _():
        hid_ref[...] = emb_ref[...]

    x = hid_ref[...]            # (B*S, H)   fp32 carried activation
    enc = enc_ref[...]          # (B*Skv, H) bf16 encoder stream

    def add_ln(a, b, g_ref, beta_ref):
        v = a + b
        mu = jnp.mean(v, axis=-1, keepdims=True)
        var = jnp.mean(jnp.square(v - mu), axis=-1, keepdims=True)
        return (v - mu) * jax.lax.rsqrt(var + LN_EPS) * g_ref[0] + beta_ref[0]

    def attention(get_q, get_kv, amask_ref, wo_ref, bo_ref, write_attn):
        # per-(batch, head) static loop; per-head contexts go straight into
        # slices of the ctx VMEM scratch (no concatenate).
        for b in range(B):
            amask = amask_ref[b]                       # (S, kv_len) additive mask
            for h in range(NH):
                qh = get_q(b, h)                       # (S, hd)      bf16, pre-scaled
                kh, vh = get_kv(b, h)                  # (kv_len, hd) bf16
                energy = jax.lax.dot_general(
                    qh, kh, (((1,), (1,)), ((), ())),
                    preferred_element_type=f32) + amask
                energy = energy - jnp.max(energy, axis=-1, keepdims=True)
                p = jnp.exp(energy)
                p = p * pl.reciprocal(jnp.sum(p, axis=-1, keepdims=True), approx=True)
                ctx_ref[b * S:(b + 1) * S, h * hd:(h + 1) * hd] = jnp.dot(
                    p.astype(bf16), vh, preferred_element_type=f32)
                if write_attn:
                    # only the final layer's encoder-attention map is returned
                    @pl.when(is_last)
                    def _store(p=p, b=b, h=h):
                        attn_ref[b, h, :, :] = p
        ctx = ctx_ref[...].astype(bf16)                # (B*S, H)
        return jnp.dot(ctx, wo_ref[0], preferred_element_type=f32) + bo_ref[0]

    # ---- self-attention (fused QKV projection, M = B*S) ----------------------
    xb = x.astype(bf16)
    qkv = (jnp.dot(xb, sa_wqkv[0], preferred_element_type=f32) + sa_bqkv[0]).astype(bf16)

    def q_sa(b, h):
        return qkv[b * S:(b + 1) * S, h * hd:(h + 1) * hd]

    def kv_sa(b, h):
        return (qkv[b * S:(b + 1) * S, H + h * hd:H + (h + 1) * hd],
                qkv[b * S:(b + 1) * S, 2 * H + h * hd:2 * H + (h + 1) * hd])

    sa_out = attention(q_sa, kv_sa, trg_amask_ref, sa_wo, sa_bo, write_attn=False)
    h1 = add_ln(x, sa_out, ln1_g, ln1_b)

    # ---- encoder attention (fused KV projection over encoder stream) ---------
    q_e = (jnp.dot(h1.astype(bf16), ea_wq[0], preferred_element_type=f32)
           + ea_bq[0]).astype(bf16)
    kv_e = (jnp.dot(enc, ea_wkv[0], preferred_element_type=f32)
            + ea_bkv[0]).astype(bf16)

    def q_ea(b, h):
        return q_e[b * S:(b + 1) * S, h * hd:(h + 1) * hd]

    def kv_ea(b, h):
        return (kv_e[b * Skv:(b + 1) * Skv, h * hd:(h + 1) * hd],
                kv_e[b * Skv:(b + 1) * Skv, H + h * hd:H + (h + 1) * hd])

    ea_out = attention(q_ea, kv_ea, src_amask_ref, ea_wo, ea_bo, write_attn=True)
    h2 = add_ln(h1, ea_out, ln2_g, ln2_b)

    # ---- position-wise feed-forward -------------------------------------------
    ff = jnp.maximum(
        jnp.dot(h2.astype(bf16), ff_w1[0], preferred_element_type=f32) + ff_b1[0], 0.0)
    ff = jnp.dot(ff.astype(bf16), ff_w2[0], preferred_element_type=f32) + ff_b2[0]
    h3 = add_ln(h2, ff, ln3_g, ln3_b)

    hid_ref[...] = h3    # carry to next layer; written back to HBM at grid end


# --------------------------- vocab projection kernel --------------------------

def _vocab_proj_kernel(x_ref, w_ref, b_ref, out_ref):
    out_ref[...] = (jnp.dot(x_ref[...], w_ref[...],
                            preferred_element_type=jnp.float32) + b_ref[...])


# --------------------------- wrappers ------------------------------------------

_STACK_ORDER = ("sa_wqkv", "sa_bqkv", "sa_wo", "sa_bo",
                "ea_wq", "ea_bq", "ea_wkv", "ea_bkv", "ea_wo", "ea_bo",
                "ln1_g", "ln1_b", "ln2_g", "ln2_b", "ln3_g", "ln3_b",
                "ff_w1", "ff_b1", "ff_w2", "ff_b2")


def decoder_stack_pallas(emb2d, enc2d, trg_amask, src_amask, stacked, n_heads):
    BS, H = emb2d.shape
    B, S = trg_amask.shape[0], trg_amask.shape[1]
    Skv = src_amask.shape[2]
    L = stacked["sa_wqkv"].shape[0]

    def full_spec(shape):
        nd = len(shape)
        return pl.BlockSpec(tuple(shape), lambda l, _nd=nd: (0,) * _nd)

    def layer_spec(tail):
        nd = len(tail)
        return pl.BlockSpec((1,) + tuple(tail), lambda l, _nd=nd: (l,) + (0,) * _nd)

    in_specs = [full_spec(emb2d.shape), full_spec(enc2d.shape),
                full_spec(trg_amask.shape), full_spec(src_amask.shape)]
    args = [emb2d, enc2d, trg_amask, src_amask]
    per_layer_bytes = 0
    for name in _STACK_ORDER:
        arr = stacked[name]
        in_specs.append(layer_spec(arr.shape[1:]))
        args.append(arr)
        per_layer_bytes += int(np.prod(arr.shape[1:])) * arr.dtype.itemsize

    # explicit scoped-VMEM budget: 2x (double-buffered) per-layer weights
    # + resident activations/masks/outputs/scratch + headroom, clamped to 64MiB
    resident = sum(int(np.prod(a.shape)) * a.dtype.itemsize for a in args[:4])
    resident += 2 * BS * H * 4 + B * n_heads * S * Skv * 4
    vmem_limit = int(min(64 << 20,
                         max(32 << 20, 2 * per_layer_bytes + resident + (8 << 20))))

    hid, attn = pl.pallas_call(
        _decoder_stack_kernel,
        out_shape=(jax.ShapeDtypeStruct((BS, H), jnp.float32),
                   jax.ShapeDtypeStruct((B, n_heads, S, Skv), jnp.float32)),
        grid=(L,),
        in_specs=in_specs,
        out_specs=(full_spec((BS, H)),
                   full_spec((B, n_heads, S, Skv))),
        scratch_shapes=[pltpu.VMEM((BS, H), jnp.float32)],   # per-head context slab
        compiler_params=pltpu.CompilerParams(
            dimension_semantics=("arbitrary",),               # layer carry is sequential
            vmem_limit_bytes=vmem_limit),
    )(*args)
    return hid, attn


def vocab_proj_pallas(hid2d, fc1_w, fc1_b):
    BS, H = hid2d.shape
    V = fc1_w.shape[1]
    TV = V if V <= 512 else 512                     # lane-dense tile (multiple of 128 when padded)
    Vp = ((V + TV - 1) // TV) * TV
    if Vp != V:
        fc1_w = jnp.pad(fc1_w, ((0, 0), (0, Vp - V)))
        fc1_b = jnp.pad(fc1_b, ((0, 0), (0, Vp - V)))
    x = hid2d.astype(jnp.bfloat16)
    w = fc1_w.astype(jnp.bfloat16)

    est = 2 * (H * TV * 2 + TV * 4 + BS * TV * 4) + BS * H * 2 + (4 << 20)
    logits = pl.pallas_call(
        _vocab_proj_kernel,
        out_shape=jax.ShapeDtypeStruct((BS, Vp), jnp.float32),
        grid=(Vp // TV,),
        in_specs=[pl.BlockSpec((BS, H), lambda j: (0, 0)),
                  pl.BlockSpec((H, TV), lambda j: (0, j)),
                  pl.BlockSpec((1, TV), lambda j: (0, j))],
        out_specs=pl.BlockSpec((BS, TV), lambda j: (0, j)),
        compiler_params=pltpu.CompilerParams(
            dimension_semantics=("parallel",),
            vmem_limit_bytes=int(min(64 << 20, max(32 << 20, est)))),
    )(x, w, fc1_b)
    if Vp != V:
        logits = logits[:, :V]
    return logits


def decoder_forward(params, y_tokens, enc_src, src_mask, trg_mask, n_heads):
    B, S = y_tokens.shape
    H = params["tok_emb"].shape[1]
    Skv = enc_src.shape[1]
    inv_scale = float(1.0 / np.sqrt(H // n_heads))
    emb_scale = float(np.sqrt(H))
    bf16 = jnp.bfloat16

    # embedding gathers are glue (not the hot path); dropout = identity (eval)
    pos = jnp.arange(S)
    emb = (jnp.take(params["tok_emb"], y_tokens, axis=0) * emb_scale
           + jnp.take(params["pos_emb"], pos, axis=0)[None, :, :])
    emb2d = emb.reshape(B * S, H)
    enc2d = enc_src.reshape(B * Skv, H).astype(bf16)

    # additive masks: 0 keep / -1e10 masked  (one vadd per head inside kernel)
    trg_amask = jnp.where(trg_mask == 0.0, MASK_FILL, 0.0).astype(jnp.float32)
    src_amask = jnp.where(src_mask == 0.0, MASK_FILL, 0.0).astype(jnp.float32)

    layers = params["layers"]

    def stack(fn, dtype=None):
        a = jnp.stack([fn(lp) for lp in layers])
        return a.astype(dtype) if dtype is not None else a

    sa, ea = "self_attn", "enc_attn"
    stacked = {
        # fused QKV with 1/sqrt(head_dim) folded into the Q weights/bias
        "sa_wqkv": stack(lambda lp: jnp.concatenate(
            [lp[sa]["wq"] * inv_scale, lp[sa]["wk"], lp[sa]["wv"]], axis=1), bf16),
        "sa_bqkv": stack(lambda lp: jnp.concatenate(
            [lp[sa]["bq"] * inv_scale, lp[sa]["bk"], lp[sa]["bv"]], axis=1)),
        "sa_wo": stack(lambda lp: lp[sa]["wo"], bf16),
        "sa_bo": stack(lambda lp: lp[sa]["bo"]),
        "ea_wq": stack(lambda lp: lp[ea]["wq"] * inv_scale, bf16),
        "ea_bq": stack(lambda lp: lp[ea]["bq"] * inv_scale),
        "ea_wkv": stack(lambda lp: jnp.concatenate(
            [lp[ea]["wk"], lp[ea]["wv"]], axis=1), bf16),
        "ea_bkv": stack(lambda lp: jnp.concatenate(
            [lp[ea]["bk"], lp[ea]["bv"]], axis=1)),
        "ea_wo": stack(lambda lp: lp[ea]["wo"], bf16),
        "ea_bo": stack(lambda lp: lp[ea]["bo"]),
        "ff_w1": stack(lambda lp: lp["ff_w1"], bf16),
        "ff_b1": stack(lambda lp: lp["ff_b1"]),
        "ff_w2": stack(lambda lp: lp["ff_w2"], bf16),
        "ff_b2": stack(lambda lp: lp["ff_b2"]),
    }
    for name in ("ln1_g", "ln1_b", "ln2_g", "ln2_b", "ln3_g", "ln3_b"):
        stacked[name] = stack(lambda lp, n=name: lp[n])          # LN stays fp32

    hid, attn = decoder_stack_pallas(emb2d, enc2d, trg_amask, src_amask,
                                     stacked, n_heads)
    logits = vocab_proj_pallas(hid, params["fc1_w"], params["fc1_b"])
    return logits.reshape(B, S, -1), attn


# --------------------------- pure-JAX reference (fp32) ------------------------

def _ref_mha(q, kv, mask, p, n_heads, scale):
    B, S, H = q.shape
    Skv = kv.shape[1]
    hd = H // n_heads
    Q = (q @ p["wq"] + p["bq"]).reshape(B, S, n_heads, hd).transpose(0, 2, 1, 3)
    K = (kv @ p["wk"] + p["bk"]).reshape(B, Skv, n_heads, hd).transpose(0, 2, 1, 3)
    V = (kv @ p["wv"] + p["bv"]).reshape(B, Skv, n_heads, hd).transpose(0, 2, 1, 3)
    energy = jnp.einsum("bhqd,bhkd->bhqk", Q, K) / scale
    energy = jnp.where(mask[:, None] == 0, MASK_FILL, energy)
    attn = jax.nn.softmax(energy, axis=-1)
    x = jnp.einsum("bhqk,bhkd->bhqd", attn, V)
    x = x.transpose(0, 2, 1, 3).reshape(B, S, H)
    return x @ p["wo"] + p["bo"], attn


def _ref_ln(x, g, b):
    mu = jnp.mean(x, axis=-1, keepdims=True)
    var = jnp.mean(jnp.square(x - mu), axis=-1, keepdims=True)
    return (x - mu) * jax.lax.rsqrt(var + LN_EPS) * g + b


def ref_decoder(params, y_tokens, enc_src, src_mask, trg_mask, n_heads):
    B, S = y_tokens.shape
    H = params["tok_emb"].shape[1]
    head_scale = float(np.sqrt(H // n_heads))
    out = jnp.take(params["tok_emb"], y_tokens, axis=0) * float(np.sqrt(H)) \
        + params["pos_emb"][None, :S, :]
    attention = None
    for lp in params["layers"]:
        sa, _ = _ref_mha(out, out, trg_mask, lp["self_attn"], n_heads, head_scale)
        out = _ref_ln(out + sa, lp["ln1_g"], lp["ln1_b"])
        ea, attention = _ref_mha(out, enc_src, src_mask, lp["enc_attn"], n_heads, head_scale)
        out = _ref_ln(out + ea, lp["ln2_g"], lp["ln2_b"])
        ff = jnp.maximum(out @ lp["ff_w1"] + lp["ff_b1"], 0.0) @ lp["ff_w2"] + lp["ff_b2"]
        out = _ref_ln(out + ff, lp["ln3_g"], lp["ln3_b"])
    return out @ params["fc1_w"] + params["fc1_b"], attention


# --------------------------- deterministic params ----------------------------

def init_params(key, vocab_sz, hidden_dim, n_layers, n_heads, pf_dim, msl):
    keys = jax.random.split(key, 4 + n_layers)

    def dense(k, din, dout):
        k1, k2 = jax.random.split(k)
        return (jax.random.normal(k1, (din, dout), jnp.float32) * 0.05,
                jax.random.normal(k2, (1, dout), jnp.float32) * 0.02)

    params = {
        "tok_emb": jax.random.normal(keys[0], (vocab_sz, hidden_dim), jnp.float32),
        "pos_emb": jax.random.normal(keys[1], (msl, hidden_dim), jnp.float32),
    }
    params["fc1_w"], params["fc1_b"] = dense(keys[2], hidden_dim, vocab_sz)

    layers = []
    for li in range(n_layers):
        lk = jax.random.split(keys[4 + li], 16)

        def attn_params(kk):
            wq, bq = dense(kk[0], hidden_dim, hidden_dim)
            wk, bk = dense(kk[1], hidden_dim, hidden_dim)
            wv, bv = dense(kk[2], hidden_dim, hidden_dim)
            wo, bo = dense(kk[3], hidden_dim, hidden_dim)
            return dict(wq=wq, bq=bq, wk=wk, bk=bk, wv=wv, bv=bv, wo=wo, bo=bo)

        lp = {"self_attn": attn_params(lk[0:4]), "enc_attn": attn_params(lk[4:8])}
        lp["ff_w1"], lp["ff_b1"] = dense(lk[8], hidden_dim, pf_dim)
        lp["ff_w2"], lp["ff_b2"] = dense(lk[9], pf_dim, hidden_dim)
        for i, name in enumerate(["ln1", "ln2", "ln3"]):
            lp[name + "_g"] = (jnp.ones((1, hidden_dim), jnp.float32)
                               + 0.02 * jax.random.normal(lk[10 + i], (1, hidden_dim)))
            lp[name + "_b"] = 0.02 * jax.random.normal(lk[13 + i], (1, hidden_dim))
        layers.append(lp)
    params["layers"] = layers
    return params


# --------------------------- main ---------------------------------------------

if __name__ == "__main__":
    B, S_trg, S_src = 2, 8, 10
    vocab_sz, hidden_dim, n_layers, n_heads, pf_dim, msl = 50, 32, 2, 4, 64, 16

    key = jax.random.PRNGKey(0)
    kp, ky, ke = jax.random.split(key, 3)
    params = init_params(kp, vocab_sz, hidden_dim, n_layers, n_heads, pf_dim, msl)

    y_tokens = jax.random.randint(ky, (B, S_trg), 0, vocab_sz, dtype=jnp.int32)
    enc_src = jax.random.normal(ke, (B, S_src, hidden_dim), jnp.float32)
    # masks: 1.0 keep / 0.0 masked; causal target mask, all-ones source mask
    trg_mask = jnp.tril(jnp.ones((S_trg, S_trg), jnp.float32))[None].repeat(B, axis=0)
    src_mask = jnp.ones((B, S_trg, S_src), jnp.float32)

    logits, attention = decoder_forward(params, y_tokens, enc_src, src_mask, trg_mask, n_heads)
    logits, attention = jax.block_until_ready((logits, attention))

    # correctness check vs fp32 pure-JAX reference; kernel matmuls run in bf16
    # (MXU-native) with fp32 accumulation, so tolerance is loosened accordingly.
    ref_logits, ref_attn = ref_decoder(params, y_tokens, enc_src, src_mask, trg_mask, n_heads)
    np.testing.assert_allclose(np.asarray(logits), np.asarray(ref_logits), atol=3e-2, rtol=3e-2)
    np.testing.assert_allclose(np.asarray(attention), np.asarray(ref_attn), atol=3e-2, rtol=3e-2)
    assert logits.shape == (B, S_trg, vocab_sz)
    assert attention.shape == (B, n_heads, S_trg, S_src)

    # TODO(synk): training-mode stochastic dropout would use pltpu.prng_seed /
    #             prng_random_bits; here dropout is identity (eval mode).
    print("KERNEL_OK")
</pallas_src>

<mosaic_0001>
module attributes {stable_mosaic.version = 11 : i64} {
  func.func @_decoder_stack_kernel(%arg0: i32, %arg1: memref<16x32xf32, #tpu.memory_space<vmem>>, %arg2: memref<20x32xbf16, #tpu.memory_space<vmem>>, %arg3: memref<2x8x8xf32, #tpu.memory_space<vmem>>, %arg4: memref<2x8x10xf32, #tpu.memory_space<vmem>>, %arg5: memref<1x32x96xbf16, #tpu.memory_space<vmem>>, %arg6: memref<1x1x96xf32, #tpu.memory_space<vmem>>, %arg7: memref<1x32x32xbf16, #tpu.memory_space<vmem>>, %arg8: memref<1x1x32xf32, #tpu.memory_space<vmem>>, %arg9: memref<1x32x32xbf16, #tpu.memory_space<vmem>>, %arg10: memref<1x1x32xf32, #tpu.memory_space<vmem>>, %arg11: memref<1x32x64xbf16, #tpu.memory_space<vmem>>, %arg12: memref<1x1x64xf32, #tpu.memory_space<vmem>>, %arg13: memref<1x32x32xbf16, #tpu.memory_space<vmem>>, %arg14: memref<1x1x32xf32, #tpu.memory_space<vmem>>, %arg15: memref<1x1x32xf32, #tpu.memory_space<vmem>>, %arg16: memref<1x1x32xf32, #tpu.memory_space<vmem>>, %arg17: memref<1x1x32xf32, #tpu.memory_space<vmem>>, %arg18: memref<1x1x32xf32, #tpu.memory_space<vmem>>, %arg19: memref<1x1x32xf32, #tpu.memory_space<vmem>>, %arg20: memref<1x1x32xf32, #tpu.memory_space<vmem>>, %arg21: memref<1x32x64xbf16, #tpu.memory_space<vmem>>, %arg22: memref<1x1x64xf32, #tpu.memory_space<vmem>>, %arg23: memref<1x64x32xbf16, #tpu.memory_space<vmem>>, %arg24: memref<1x1x32xf32, #tpu.memory_space<vmem>>, %arg25: memref<16x32xf32, #tpu.memory_space<vmem>>, %arg26: memref<2x4x8x10xf32, #tpu.memory_space<vmem>>, %arg27: memref<16x32xf32, #tpu.memory_space<vmem>>) attributes {dimension_semantics = [#tpu.dimension_semantics<arbitrary>], iteration_bounds = array<i64: 2>, scalar_prefetch = 0 : i64, scratch_operands = 1 : i64, tpu.core_type = #tpu.core_type<tc>, window_params = [{pipeline_mode = #tpu.pipeline_mode<synchronous>, transform_indices = @transform_0, window_bounds = array<i64: 16, 32>}, {pipeline_mode = #tpu.pipeline_mode<synchronous>, transform_indices = @transform_1, window_bounds = array<i64: 20, 32>}, {pipeline_mode = #tpu.pipeline_mode<synchronous>, transform_indices = @transform_2, window_bounds = array<i64: 2, 8, 8>}, {pipeline_mode = #tpu.pipeline_mode<synchronous>, transform_indices = @transform_3, window_bounds = array<i64: 2, 8, 10>}, {transform_indices = @transform_4, window_bounds = array<i64: 1, 32, 96>}, {transform_indices = @transform_5, window_bounds = array<i64: 1, 1, 96>}, {transform_indices = @transform_6, window_bounds = array<i64: 1, 32, 32>}, {transform_indices = @transform_7, window_bounds = array<i64: 1, 1, 32>}, {transform_indices = @transform_8, window_bounds = array<i64: 1, 32, 32>}, {transform_indices = @transform_9, window_bounds = array<i64: 1, 1, 32>}, {transform_indices = @transform_10, window_bounds = array<i64: 1, 32, 64>}, {transform_indices = @transform_11, window_bounds = array<i64: 1, 1, 64>}, {transform_indices = @transform_12, window_bounds = array<i64: 1, 32, 32>}, {transform_indices = @transform_13, window_bounds = array<i64: 1, 1, 32>}, {transform_indices = @transform_14, window_bounds = array<i64: 1, 1, 32>}, {transform_indices = @transform_15, window_bounds = array<i64: 1, 1, 32>}, {transform_indices = @transform_16, window_bounds = array<i64: 1, 1, 32>}, {transform_indices = @transform_17, window_bounds = array<i64: 1, 1, 32>}, {transform_indices = @transform_18, window_bounds = array<i64: 1, 1, 32>}, {transform_indices = @transform_19, window_bounds = array<i64: 1, 1, 32>}, {transform_indices = @transform_20, window_bounds = array<i64: 1, 32, 64>}, {transform_indices = @transform_21, window_bounds = array<i64: 1, 1, 64>}, {transform_indices = @transform_22, window_bounds = array<i64: 1, 64, 32>}, {transform_indices = @transform_23, window_bounds = array<i64: 1, 1, 32>}, {pipeline_mode = #tpu.pipeline_mode<synchronous>, transform_indices = @transform_24, window_bounds = array<i64: 16, 32>}, {pipeline_mode = #tpu.pipeline_mode<synchronous>, transform_indices = @transform_25, window_bounds = array<i64: 2, 4, 8, 10>}]} {
    %c1_i32 = arith.constant 1 : i32
    %0 = arith.cmpi eq, %arg0, %c1_i32 : i32
    %c0_i32 = arith.constant 0 : i32
    %1 = arith.cmpi eq, %arg0, %c0_i32 : i32
    %2 = arith.extui %1 : i1 to i32
    %c0_i32_0 = arith.constant 0 : i32
    %3 = arith.cmpi ne, %2, %c0_i32_0 : i32
    scf.if %3 {
      %c0_204 = arith.constant 0 : index
      %c0_205 = arith.constant 0 : index
      %462 = vector.load %arg1[%c0_204, %c0_205] : memref<16x32xf32, #tpu.memory_space<vmem>>, vector<16x32xf32>
      %c0_206 = arith.constant 0 : index
      %c0_207 = arith.constant 0 : index
      %463 = vector.load %arg25[%c0_206, %c0_207] : memref<16x32xf32, #tpu.memory_space<vmem>>, vector<16x32xf32>
      tpu.vector_store %arg25[%c0_206, %c0_207], %462 {strides = array<i32>} : memref<16x32xf32, #tpu.memory_space<vmem>>, vector<16x32xf32>,
    } else {
    }
    %c0 = arith.constant 0 : index
    %c0_1 = arith.constant 0 : index
    %4 = vector.load %arg25[%c0, %c0_1] : memref<16x32xf32, #tpu.memory_space<vmem>>, vector<16x32xf32>
    %c0_2 = arith.constant 0 : index
    %c0_3 = arith.constant 0 : index
    %5 = vector.load %arg2[%c0_2, %c0_3] : memref<20x32xbf16, #tpu.memory_space<vmem>>, vector<20x32xbf16>
    %6 = arith.truncf %4 : vector<16x32xf32> to vector<16x32xbf16>
    %c0_4 = arith.constant 0 : index
    %c0_5 = arith.constant 0 : index
    %c0_6 = arith.constant 0 : index
    %7 = vector.load %arg5[%c0_4, %c0_5, %c0_6] : memref<1x32x96xbf16, #tpu.memory_space<vmem>>, vector<1x32x96xbf16>
    %8 = vector.shape_cast %7 : vector<1x32x96xbf16> to vector<32x96xbf16>
    %cst = arith.constant dense<0.000000e+00> : vector<16x96xf32>
    %9 = tpu.matmul %6, %8, %cst {dimension_numbers = #tpu.dot_dimension_numbers<[1], [0], [0], [1], [0, 0, 1, 1], [], []>} : vector<16x32xbf16>, vector<32x96xbf16>, vector<16x96xf32> -> vector<16x96xf32>
    %c0_7 = arith.constant 0 : index
    %c0_8 = arith.constant 0 : index
    %c0_9 = arith.constant 0 : index
    %10 = vector.load %arg6[%c0_7, %c0_8, %c0_9] : memref<1x1x96xf32, #tpu.memory_space<vmem>>, vector<1x1x96xf32>
    %11 = vector.shape_cast %10 : vector<1x1x96xf32> to vector<1x96xf32>
    %12 = vector.broadcast %11 : vector<1x96xf32> to vector<16x96xf32>
    %13 = arith.addf %9, %12 : vector<16x96xf32>
    %14 = arith.truncf %13 : vector<16x96xf32> to vector<16x96xbf16>
    %c0_10 = arith.constant 0 : index
    %c0_11 = arith.constant 0 : index
    %c0_12 = arith.constant 0 : index
    %15 = vector.load %arg3[%c0_10, %c0_11, %c0_12] : memref<2x8x8xf32, #tpu.memory_space<vmem>>, vector<1x8x8xf32>
    %16 = vector.shape_cast %15 : vector<1x8x8xf32> to vector<8x8xf32>
    %17 = vector.extract_strided_slice %14 {offsets = [0, 0], sizes = [8, 8], strides = [1, 1]} : vector<16x96xbf16> to vector<8x8xbf16>
    %18 = vector.extract_strided_slice %14 {offsets = [0, 32], sizes = [8, 8], strides = [1, 1]} : vector<16x96xbf16> to vector<8x8xbf16>
    %19 = vector.extract_strided_slice %14 {offsets = [0, 64], sizes = [8, 8], strides = [1, 1]} : vector<16x96xbf16> to vector<8x8xbf16>
    %cst_13 = arith.constant dense<0.000000e+00> : vector<8x8xf32>
    %20 = tpu.matmul %17, %18, %cst_13 {dimension_numbers = #tpu.dot_dimension_numbers<[1], [1], [0], [0], [0, 0, 1, 0], [], []>} : vector<8x8xbf16>, vector<8x8xbf16>, vector<8x8xf32> -> vector<8x8xf32>
    %21 = arith.addf %20, %16 : vector<8x8xf32>
    %cst_14 = arith.constant dense<0xFF800000> : vector<8xf32>
    %22 = vector.multi_reduction <maximumf>, %21, %cst_14 [1] : vector<8x8xf32> to vector<8xf32>
    %23 = vector.shape_cast %22 : vector<8xf32> to vector<8x1xf32>
    %24 = vector.broadcast %23 : vector<8x1xf32> to vector<8x8xf32>
    %25 = arith.subf %21, %24 : vector<8x8xf32>
    %26 = math.exp %25 : vector<8x8xf32>
    %cst_15 = arith.constant dense<0.000000e+00> : vector<8xf32>
    %27 = vector.multi_reduction <add>, %26, %cst_15 [1] : vector<8x8xf32> to vector<8xf32>
    %28 = vector.shape_cast %27 : vector<8xf32> to vector<8x1xf32>
    %29 = tpu.reciprocal %28 {approx = true} : vector<8x1xf32> -> vector<8x1xf32>
    %30 = vector.broadcast %29 : vector<8x1xf32> to vector<8x8xf32>
    %31 = arith.mulf %26, %30 : vector<8x8xf32>
    %32 = arith.truncf %31 : vector<8x8xf32> to vector<8x8xbf16>
    %cst_16 = arith.constant dense<0.000000e+00> : vector<8x8xf32>
    %33 = tpu.matmul %32, %19, %cst_16 {dimension_numbers = #tpu.dot_dimension_numbers<[1], [0], [0], [1], [0, 0, 1, 1], [], []>} : vector<8x8xbf16>, vector<8x8xbf16>, vector<8x8xf32> -> vector<8x8xf32>
    %c0_17 = arith.constant 0 : index
    %c0_18 = arith.constant 0 : index
    %34 = vector.load %arg27[%c0_17, %c0_18] : memref<16x32xf32, #tpu.memory_space<vmem>>, vector<8x8xf32>
    tpu.vector_store %arg27[%c0_17, %c0_18], %33 {strides = array<i32>} : memref<16x32xf32, #tpu.memory_space<vmem>>, vector<8x8xf32>,
    %35 = vector.extract_strided_slice %14 {offsets = [0, 8], sizes = [8, 8], strides = [1, 1]} : vector<16x96xbf16> to vector<8x8xbf16>
    %36 = vector.extract_strided_slice %14 {offsets = [0, 40], sizes = [8, 8], strides = [1, 1]} : vector<16x96xbf16> to vector<8x8xbf16>
    %37 = vector.extract_strided_slice %14 {offsets = [0, 72], sizes = [8, 8], strides = [1, 1]} : vector<16x96xbf16> to vector<8x8xbf16>
    %cst_19 = arith.constant dense<0.000000e+00> : vector<8x8xf32>
    %38 = tpu.matmul %35, %36, %cst_19 {dimension_numbers = #tpu.dot_dimension_numbers<[1], [1], [0], [0], [0, 0, 1, 0], [], []>} : vector<8x8xbf16>, vector<8x8xbf16>, vector<8x8xf32> -> vector<8x8xf32>
    %39 = arith.addf %38, %16 : vector<8x8xf32>
    %cst_20 = arith.constant dense<0xFF800000> : vector<8xf32>
    %40 = vector.multi_reduction <maximumf>, %39, %cst_20 [1] : vector<8x8xf32> to vector<8xf32>
    %41 = vector.shape_cast %40 : vector<8xf32> to vector<8x1xf32>
    %42 = vector.broadcast %41 : vector<8x1xf32> to vector<8x8xf32>
    %43 = arith.subf %39, %42 : vector<8x8xf32>
    %44 = math.exp %43 : vector<8x8xf32>
    %cst_21 = arith.constant dense<0.000000e+00> : vector<8xf32>
    %45 = vector.multi_reduction <add>, %44, %cst_21 [1] : vector<8x8xf32> to vector<8xf32>
    %46 = vector.shape_cast %45 : vector<8xf32> to vector<8x1xf32>
    %47 = tpu.reciprocal %46 {approx = true} : vector<8x1xf32> -> vector<8x1xf32>
    %48 = vector.broadcast %47 : vector<8x1xf32> to vector<8x8xf32>
    %49 = arith.mulf %44, %48 : vector<8x8xf32>
    %50 = arith.truncf %49 : vector<8x8xf32> to vector<8x8xbf16>
    %cst_22 = arith.constant dense<0.000000e+00> : vector<8x8xf32>
    %51 = tpu.matmul %50, %37, %cst_22 {dimension_numbers = #tpu.dot_dimension_numbers<[1], [0], [0], [1], [0, 0, 1, 1], [], []>} : vector<8x8xbf16>, vector<8x8xbf16>, vector<8x8xf32> -> vector<8x8xf32>
    %c0_23 = arith.constant 0 : index
    %c8 = arith.constant 8 : index
    %52 = vector.load %arg27[%c0_23, %c8] : memref<16x32xf32, #tpu.memory_space<vmem>>, vector<8x8xf32>
    tpu.vector_store %arg27[%c0_23, %c8], %51 {strides = array<i32>} : memref<16x32xf32, #tpu.memory_space<vmem>>, vector<8x8xf32>,
    %53 = vector.extract_strided_slice %14 {offsets = [0, 16], sizes = [8, 8], strides = [1, 1]} : vector<16x96xbf16> to vector<8x8xbf16>
    %54 = vector.extract_strided_slice %14 {offsets = [0, 48], sizes = [8, 8], strides = [1, 1]} : vector<16x96xbf16> to vector<8x8xbf16>
    %55 = vector.extract_strided_slice %14 {offsets = [0, 80], sizes = [8, 8], strides = [1, 1]} : vector<16x96xbf16> to vector<8x8xbf16>
    %cst_24 = arith.constant dense<0.000000e+00> : vector<8x8xf32>
    %56 = tpu.matmul %53, %54, %cst_24 {dimension_numbers = #tpu.dot_dimension_numbers<[1], [1], [0], [0], [0, 0, 1, 0], [], []>} : vector<8x8xbf16>, vector<8x8xbf16>, vector<8x8xf32> -> vector<8x8xf32>
    %57 = arith.addf %56, %16 : vector<8x8xf32>
    %cst_25 = arith.constant dense<0xFF800000> : vector<8xf32>
    %58 = vector.multi_reduction <maximumf>, %57, %cst_25 [1] : vector<8x8xf32> to vector<8xf32>
    %59 = vector.shape_cast %58 : vector<8xf32> to vector<8x1xf32>
    %60 = vector.broadcast %59 : vector<8x1xf32> to vector<8x8xf32>
    %61 = arith.subf %57, %60 : vector<8x8xf32>
    %62 = math.exp %61 : vector<8x8xf32>
    %cst_26 = arith.constant dense<0.000000e+00> : vector<8xf32>
    %63 = vector.multi_reduction <add>, %62, %cst_26 [1] : vector<8x8xf32> to vector<8xf32>
    %64 = vector.shape_cast %63 : vector<8xf32> to vector<8x1xf32>
    %65 = tpu.reciprocal %64 {approx = true} : vector<8x1xf32> -> vector<8x1xf32>
    %66 = vector.broadcast %65 : vector<8x1xf32> to vector<8x8xf32>
    %67 = arith.mulf %62, %66 : vector<8x8xf32>
    %68 = arith.truncf %67 : vector<8x8xf32> to vector<8x8xbf16>
    %cst_27 = arith.constant dense<0.000000e+00> : vector<8x8xf32>
    %69 = tpu.matmul %68, %55, %cst_27 {dimension_numbers = #tpu.dot_dimension_numbers<[1], [0], [0], [1], [0, 0, 1, 1], [], []>} : vector<8x8xbf16>, vector<8x8xbf16>, vector<8x8xf32> -> vector<8x8xf32>
    %c0_28 = arith.constant 0 : index
    %c16 = arith.constant 16 : index
    %70 = vector.load %arg27[%c0_28, %c16] : memref<16x32xf32, #tpu.memory_space<vmem>>, vector<8x8xf32>
    tpu.vector_store %arg27[%c0_28, %c16], %69 {strides = array<i32>} : memref<16x32xf32, #tpu.memory_space<vmem>>, vector<8x8xf32>,
    %71 = vector.extract_strided_slice %14 {offsets = [0, 24], sizes = [8, 8], strides = [1, 1]} : vector<16x96xbf16> to vector<8x8xbf16>
    %72 = vector.extract_strided_slice %14 {offsets = [0, 56], sizes = [8, 8], strides = [1, 1]} : vector<16x96xbf16> to vector<8x8xbf16>
    %73 = vector.extract_strided_slice %14 {offsets = [0, 88], sizes = [8, 8], strides = [1, 1]} : vector<16x96xbf16> to vector<8x8xbf16>
    %cst_29 = arith.constant dense<0.000000e+00> : vector<8x8xf32>
    %74 = tpu.matmul %71, %72, %cst_29 {dimension_numbers = #tpu.dot_dimension_numbers<[1], [1], [0], [0], [0, 0, 1, 0], [], []>} : vector<8x8xbf16>, vector<8x8xbf16>, vector<8x8xf32> -> vector<8x8xf32>
    %75 = arith.addf %74, %16 : vector<8x8xf32>
    %cst_30 = arith.constant dense<0xFF800000> : vector<8xf32>
    %76 = vector.multi_reduction <maximumf>, %75, %cst_30 [1] : vector<8x8xf32> to vector<8xf32>
    %77 = vector.shape_cast %76 : vector<8xf32> to vector<8x1xf32>
    %78 = vector.broadcast %77 : vector<8x1xf32> to vector<8x8xf32>
    %79 = arith.subf %75, %78 : vector<8x8xf32>
    %80 = math.exp %79 : vector<8x8xf32>
    %cst_31 = arith.constant dense<0.000000e+00> : vector<8xf32>
    %81 = vector.multi_reduction <add>, %80, %cst_31 [1] : vector<8x8xf32> to vector<8xf32>
    %82 = vector.shape_cast %81 : vector<8xf32> to vector<8x1xf32>
    %83 = tpu.reciprocal %82 {approx = true} : vector<8x1xf32> -> vector<8x1xf32>
    %84 = vector.broadcast %83 : vector<8x1xf32> to vector<8x8xf32>
    %85 = arith.mulf %80, %84 : vector<8x8xf32>
    %86 = arith.truncf %85 : vector<8x8xf32> to vector<8x8xbf16>
    %cst_32 = arith.constant dense<0.000000e+00> : vector<8x8xf32>
    %87 = tpu.matmul %86, %73, %cst_32 {dimension_numbers = #tpu.dot_dimension_numbers<[1], [0], [0], [1], [0, 0, 1, 1], [], []>} : vector<8x8xbf16>, vector<8x8xbf16>, vector<8x8xf32> -> vector<8x8xf32>
    %c0_33 = arith.constant 0 : index
    %c24 = arith.constant 24 : index
    %88 = vector.load %arg27[%c0_33, %c24] : memref<16x32xf32, #tpu.memory_space<vmem>>, vector<8x8xf32>
    tpu.vector_store %arg27[%c0_33, %c24], %87 {strides = array<i32>} : memref<16x32xf32, #tpu.memory_space<vmem>>, vector<8x8xf32>,
    %c1 = arith.constant 1 : index
    %c0_34 = arith.constant 0 : index
    %c0_35 = arith.constant 0 : index
    %89 = vector.load %arg3[%c1, %c0_34, %c0_35] : memref<2x8x8xf32, #tpu.memory_space<vmem>>, vector<1x8x8xf32>
    %90 = vector.shape_cast %89 : vector<1x8x8xf32> to vector<8x8xf32>
    %91 = vector.extract_strided_slice %14 {offsets = [8, 0], sizes = [8, 8], strides = [1, 1]} : vector<16x96xbf16> to vector<8x8xbf16>
    %92 = vector.extract_strided_slice %14 {offsets = [8, 32], sizes = [8, 8], strides = [1, 1]} : vector<16x96xbf16> to vector<8x8xbf16>
    %93 = vector.extract_strided_slice %14 {offsets = [8, 64], sizes = [8, 8], strides = [1, 1]} : vector<16x96xbf16> to vector<8x8xbf16>
    %cst_36 = arith.constant dense<0.000000e+00> : vector<8x8xf32>
    %94 = tpu.matmul %91, %92, %cst_36 {dimension_numbers = #tpu.dot_dimension_numbers<[1], [1], [0], [0], [0, 0, 1, 0], [], []>} : vector<8x8xbf16>, vector<8x8xbf16>, vector<8x8xf32> -> vector<8x8xf32>
    %95 = arith.addf %94, %90 : vector<8x8xf32>
    %cst_37 = arith.constant dense<0xFF800000> : vector<8xf32>
    %96 = vector.multi_reduction <maximumf>, %95, %cst_37 [1] : vector<8x8xf32> to vector<8xf32>
    %97 = vector.shape_cast %96 : vector<8xf32> to vector<8x1xf32>
    %98 = vector.broadcast %97 : vector<8x1xf32> to vector<8x8xf32>
    %99 = arith.subf %95, %98 : vector<8x8xf32>
    %100 = math.exp %99 : vector<8x8xf32>
    %cst_38 = arith.constant dense<0.000000e+00> : vector<8xf32>
    %101 = vector.multi_reduction <add>, %100, %cst_38 [1] : vector<8x8xf32> to vector<8xf32>
    %102 = vector.shape_cast %101 : vector<8xf32> to vector<8x1xf32>
    %103 = tpu.reciprocal %102 {approx = true} : vector<8x1xf32> -> vector<8x1xf32>
    %104 = vector.broadcast %103 : vector<8x1xf32> to vector<8x8xf32>
    %105 = arith.mulf %100, %104 : vector<8x8xf32>
    %106 = arith.truncf %105 : vector<8x8xf32> to vector<8x8xbf16>
    %cst_39 = arith.constant dense<0.000000e+00> : vector<8x8xf32>
    %107 = tpu.matmul %106, %93, %cst_39 {dimension_numbers = #tpu.dot_dimension_numbers<[1], [0], [0], [1], [0, 0, 1, 1], [], []>} : vector<8x8xbf16>, vector<8x8xbf16>, vector<8x8xf32> -> vector<8x8xf32>
    %c8_40 = arith.constant 8 : index
    %c0_41 = arith.constant 0 : index
    %108 = vector.load %arg27[%c8_40, %c0_41] : memref<16x32xf32, #tpu.memory_space<vmem>>, vector<8x8xf32>
    tpu.vector_store %arg27[%c8_40, %c0_41], %107 {strides = array<i32>} : memref<16x32xf32, #tpu.memory_space<vmem>>, vector<8x8xf32>,
    %109 = vector.extract_strided_slice %14 {offsets = [8, 8], sizes = [8, 8], strides = [1, 1]} : vector<16x96xbf16> to vector<8x8xbf16>
    %110 = vector.extract_strided_slice %14 {offsets = [8, 40], sizes = [8, 8], strides = [1, 1]} : vector<16x96xbf16> to vector<8x8xbf16>
    %111 = vector.extract_strided_slice %14 {offsets = [8, 72], sizes = [8, 8], strides = [1, 1]} : vector<16x96xbf16> to vector<8x8xbf16>
    %cst_42 = arith.constant dense<0.000000e+00> : vector<8x8xf32>
    %112 = tpu.matmul %109, %110, %cst_42 {dimension_numbers = #tpu.dot_dimension_numbers<[1], [1], [0], [0], [0, 0, 1, 0], [], []>} : vector<8x8xbf16>, vector<8x8xbf16>, vector<8x8xf32> -> vector<8x8xf32>
    %113 = arith.addf %112, %90 : vector<8x8xf32>
    %cst_43 = arith.constant dense<0xFF800000> : vector<8xf32>
    %114 = vector.multi_reduction <maximumf>, %113, %cst_43 [1] : vector<8x8xf32> to vector<8xf32>
    %115 = vector.shape_cast %114 : vector<8xf32> to vector<8x1xf32>
    %116 = vector.broadcast %115 : vector<8x1xf32> to vector<8x8xf32>
    %117 = arith.subf %113, %116 : vector<8x8xf32>
    %118 = math.exp %117 : vector<8x8xf32>
    %cst_44 = arith.constant dense<0.000000e+00> : vector<8xf32>
    %119 = vector.multi_reduction <add>, %118, %cst_44 [1] : vector<8x8xf32> to vector<8xf32>
    %120 = vector.shape_cast %119 : vector<8xf32> to vector<8x1xf32>
    %121 = tpu.reciprocal %120 {approx = true} : vector<8x1xf32> -> vector<8x1xf32>
    %122 = vector.broadcast %121 : vector<8x1xf32> to vector<8x8xf32>
    %123 = arith.mulf %118, %122 : vector<8x8xf32>
    %124 = arith.truncf %123 : vector<8x8xf32> to vector<8x8xbf16>
    %cst_45 = arith.constant dense<0.000000e+00> : vector<8x8xf32>
    %125 = tpu.matmul %124, %111, %cst_45 {dimension_numbers = #tpu.dot_dimension_numbers<[1], [0], [0], [1], [0, 0, 1, 1], [], []>} : vector<8x8xbf16>, vector<8x8xbf16>, vector<8x8xf32> -> vector<8x8xf32>
    %c8_46 = arith.constant 8 : index
    %c8_47 = arith.constant 8 : index
    %126 = vector.load %arg27[%c8_46, %c8_47] : memref<16x32xf32, #tpu.memory_space<vmem>>, vector<8x8xf32>
    tpu.vector_store %arg27[%c8_46, %c8_47], %125 {strides = array<i32>} : memref<16x32xf32, #tpu.memory_space<vmem>>, vector<8x8xf32>,
    %127 = vector.extract_strided_slice %14 {offsets = [8, 16], sizes = [8, 8], strides = [1, 1]} : vector<16x96xbf16> to vector<8x8xbf16>
    %128 = vector.extract_strided_slice %14 {offsets = [8, 48], sizes = [8, 8], strides = [1, 1]} : vector<16x96xbf16> to vector<8x8xbf16>
    %129 = vector.extract_strided_slice %14 {offsets = [8, 80], sizes = [8, 8], strides = [1, 1]} : vector<16x96xbf16> to vector<8x8xbf16>
    %cst_48 = arith.constant dense<0.000000e+00> : vector<8x8xf32>
    %130 = tpu.matmul %127, %128, %cst_48 {dimension_numbers = #tpu.dot_dimension_numbers<[1], [1], [0], [0], [0, 0, 1, 0], [], []>} : vector<8x8xbf16>, vector<8x8xbf16>, vector<8x8xf32> -> vector<8x8xf32>
    %131 = arith.addf %130, %90 : vector<8x8xf32>
    %cst_49 = arith.constant dense<0xFF800000> : vector<8xf32>
    %132 = vector.multi_reduction <maximumf>, %131, %cst_49 [1] : vector<8x8xf32> to vector<8xf32>
    %133 = vector.shape_cast %132 : vector<8xf32> to vector<8x1xf32>
    %134 = vector.broadcast %133 : vector<8x1xf32> to vector<8x8xf32>
    %135 = arith.subf %131, %134 : vector<8x8xf32>
    %136 = math.exp %135 : vector<8x8xf32>
    %cst_50 = arith.constant dense<0.000000e+00> : vector<8xf32>
    %137 = vector.multi_reduction <add>, %136, %cst_50 [1] : vector<8x8xf32> to vector<8xf32>
    %138 = vector.shape_cast %137 : vector<8xf32> to vector<8x1xf32>
    %139 = tpu.reciprocal %138 {approx = true} : vector<8x1xf32> -> vector<8x1xf32>
    %140 = vector.broadcast %139 : vector<8x1xf32> to vector<8x8xf32>
    %141 = arith.mulf %136, %140 : vector<8x8xf32>
    %142 = arith.truncf %141 : vector<8x8xf32> to vector<8x8xbf16>
    %cst_51 = arith.constant dense<0.000000e+00> : vector<8x8xf32>
    %143 = tpu.matmul %142, %129, %cst_51 {dimension_numbers = #tpu.dot_dimension_numbers<[1], [0], [0], [1], [0, 0, 1, 1], [], []>} : vector<8x8xbf16>, vector<8x8xbf16>, vector<8x8xf32> -> vector<8x8xf32>
    %c8_52 = arith.constant 8 : index
    %c16_53 = arith.constant 16 : index
    %144 = vector.load %arg27[%c8_52, %c16_53] : memref<16x32xf32, #tpu.memory_space<vmem>>, vector<8x8xf32>
    tpu.vector_store %arg27[%c8_52, %c16_53], %143 {strides = array<i32>} : memref<16x32xf32, #tpu.memory_space<vmem>>, vector<8x8xf32>,
    %145 = vector.extract_strided_slice %14 {offsets = [8, 24], sizes = [8, 8], strides = [1, 1]} : vector<16x96xbf16> to vector<8x8xbf16>
    %146 = vector.extract_strided_slice %14 {offsets = [8, 56], sizes = [8, 8], strides = [1, 1]} : vector<16x96xbf16> to vector<8x8xbf16>
    %147 = vector.extract_strided_slice %14 {offsets = [8, 88], sizes = [8, 8], strides = [1, 1]} : vector<16x96xbf16> to vector<8x8xbf16>
    %cst_54 = arith.constant dense<0.000000e+00> : vector<8x8xf32>
    %148 = tpu.matmul %145, %146, %cst_54 {dimension_numbers = #tpu.dot_dimension_numbers<[1], [1], [0], [0], [0, 0, 1, 0], [], []>} : vector<8x8xbf16>, vector<8x8xbf16>, vector<8x8xf32> -> vector<8x8xf32>
    %149 = arith.addf %148, %90 : vector<8x8xf32>
    %cst_55 = arith.constant dense<0xFF800000> : vector<8xf32>
    %150 = vector.multi_reduction <maximumf>, %149, %cst_55 [1] : vector<8x8xf32> to vector<8xf32>
    %151 = vector.shape_cast %150 : vector<8xf32> to vector<8x1xf32>
    %152 = vector.broadcast %151 : vector<8x1xf32> to vector<8x8xf32>
    %153 = arith.subf %149, %152 : vector<8x8xf32>
    %154 = math.exp %153 : vector<8x8xf32>
    %cst_56 = arith.constant dense<0.000000e+00> : vector<8xf32>
    %155 = vector.multi_reduction <add>, %154, %cst_56 [1] : vector<8x8xf32> to vector<8xf32>
    %156 = vector.shape_cast %155 : vector<8xf32> to vector<8x1xf32>
    %157 = tpu.reciprocal %156 {approx = true} : vector<8x1xf32> -> vector<8x1xf32>
    %158 = vector.broadcast %157 : vector<8x1xf32> to vector<8x8xf32>
    %159 = arith.mulf %154, %158 : vector<8x8xf32>
    %160 = arith.truncf %159 : vector<8x8xf32> to vector<8x8xbf16>
    %cst_57 = arith.constant dense<0.000000e+00> : vector<8x8xf32>
    %161 = tpu.matmul %160, %147, %cst_57 {dimension_numbers = #tpu.dot_dimension_numbers<[1], [0], [0], [1], [0, 0, 1, 1], [], []>} : vector<8x8xbf16>, vector<8x8xbf16>, vector<8x8xf32> -> vector<8x8xf32>
    %c8_58 = arith.constant 8 : index
    %c24_59 = arith.constant 24 : index
    %162 = vector.load %arg27[%c8_58, %c24_59] : memref<16x32xf32, #tpu.memory_space<vmem>>, vector<8x8xf32>
    tpu.vector_store %arg27[%c8_58, %c24_59], %161 {strides = array<i32>} : memref<16x32xf32, #tpu.memory_space<vmem>>, vector<8x8xf32>,
    %c0_60 = arith.constant 0 : index
    %c0_61 = arith.constant 0 : index
    %163 = vector.load %arg27[%c0_60, %c0_61] : memref<16x32xf32, #tpu.memory_space<vmem>>, vector<16x32xf32>
    %164 = arith.truncf %163 : vector<16x32xf32> to vector<16x32xbf16>
    %c0_62 = arith.constant 0 : index
    %c0_63 = arith.constant 0 : index
    %c0_64 = arith.constant 0 : index
    %165 = vector.load %arg7[%c0_62, %c0_63, %c0_64] : memref<1x32x32xbf16, #tpu.memory_space<vmem>>, vector<1x32x32xbf16>
    %166 = vector.shape_cast %165 : vector<1x32x32xbf16> to vector<32x32xbf16>
    %cst_65 = arith.constant dense<0.000000e+00> : vector<16x32xf32>
    %167 = tpu.matmul %164, %166, %cst_65 {dimension_numbers = #tpu.dot_dimension_numbers<[1], [0], [0], [1], [0, 0, 1, 1], [], []>} : vector<16x32xbf16>, vector<32x32xbf16>, vector<16x32xf32> -> vector<16x32xf32>
    %c0_66 = arith.constant 0 : index
    %c0_67 = arith.constant 0 : index
    %c0_68 = arith.constant 0 : index
    %168 = vector.load %arg8[%c0_66, %c0_67, %c0_68] : memref<1x1x32xf32, #tpu.memory_space<vmem>>, vector<1x1x32xf32>
    %169 = vector.shape_cast %168 : vector<1x1x32xf32> to vector<1x32xf32>
    %170 = vector.broadcast %169 : vector<1x32xf32> to vector<16x32xf32>
    %171 = arith.addf %167, %170 : vector<16x32xf32>
    %172 = arith.addf %4, %171 : vector<16x32xf32>
    %cst_69 = arith.constant dense<0.000000e+00> : vector<16xf32>
    %173 = vector.multi_reduction <add>, %172, %cst_69 [1] : vector<16x32xf32> to vector<16xf32>
    %174 = vector.shape_cast %173 : vector<16xf32> to vector<16x1xf32>
    %cst_70 = arith.constant 3.200000e+01 : f32
    %175 = vector.broadcast %cst_70 : f32 to vector<16x1xf32>
    %176 = arith.divf %174, %175 : vector<16x1xf32>
    %177 = vector.broadcast %176 : vector<16x1xf32> to vector<16x32xf32>
    %178 = arith.subf %172, %177 : vector<16x32xf32>
    %179 = arith.mulf %178, %178 : vector<16x32xf32>
    %cst_71 = arith.constant dense<0.000000e+00> : vector<16xf32>
    %180 = vector.multi_reduction <add>, %179, %cst_71 [1] : vector<16x32xf32> to vector<16xf32>
    %181 = vector.shape_cast %180 : vector<16xf32> to vector<16x1xf32>
    %cst_72 = arith.constant 3.200000e+01 : f32
    %182 = vector.broadcast %cst_72 : f32 to vector<16x1xf32>
    %183 = arith.divf %181, %182 : vector<16x1xf32>
    %184 = vector.broadcast %176 : vector<16x1xf32> to vector<16x32xf32>
    %185 = arith.subf %172, %184 : vector<16x32xf32>
    %cst_73 = arith.constant 9.99999974E-6 : f32
    %186 = vector.broadcast %cst_73 : f32 to vector<16x1xf32>
    %187 = arith.addf %183, %186 : vector<16x1xf32>
    %188 = math.rsqrt %187 : vector<16x1xf32>
    %189 = vector.broadcast %188 : vector<16x1xf32> to vector<16x32xf32>
    %190 = arith.mulf %185, %189 : vector<16x32xf32>
    %c0_74 = arith.constant 0 : index
    %c0_75 = arith.constant 0 : index
    %c0_76 = arith.constant 0 : index
    %191 = vector.load %arg15[%c0_74, %c0_75, %c0_76] : memref<1x1x32xf32, #tpu.memory_space<vmem>>, vector<1x1x32xf32>
    %192 = vector.shape_cast %191 : vector<1x1x32xf32> to vector<1x32xf32>
    %193 = vector.broadcast %192 : vector<1x32xf32> to vector<16x32xf32>
    %194 = arith.mulf %190, %193 : vector<16x32xf32>
    %c0_77 = arith.constant 0 : index
    %c0_78 = arith.constant 0 : index
    %c0_79 = arith.constant 0 : index
    %195 = vector.load %arg16[%c0_77, %c0_78, %c0_79] : memref<1x1x32xf32, #tpu.memory_space<vmem>>, vector<1x1x32xf32>
    %196 = vector.shape_cast %195 : vector<1x1x32xf32> to vector<1x32xf32>
    %197 = vector.broadcast %196 : vector<1x32xf32> to vector<16x32xf32>
    %198 = arith.addf %194, %197 : vector<16x32xf32>
    %199 = arith.truncf %198 : vector<16x32xf32> to vector<16x32xbf16>
    %c0_80 = arith.constant 0 : index
    %c0_81 = arith.constant 0 : index
    %c0_82 = arith.constant 0 : index
    %200 = vector.load %arg9[%c0_80, %c0_81, %c0_82] : memref<1x32x32xbf16, #tpu.memory_space<vmem>>, vector<1x32x32xbf16>
    %201 = vector.shape_cast %200 : vector<1x32x32xbf16> to vector<32x32xbf16>
    %cst_83 = arith.constant dense<0.000000e+00> : vector<16x32xf32>
    %202 = tpu.matmul %199, %201, %cst_83 {dimension_numbers = #tpu.dot_dimension_numbers<[1], [0], [0], [1], [0, 0, 1, 1], [], []>} : vector<16x32xbf16>, vector<32x32xbf16>, vector<16x32xf32> -> vector<16x32xf32>
    %c0_84 = arith.constant 0 : index
    %c0_85 = arith.constant 0 : index
    %c0_86 = arith.constant 0 : index
    %203 = vector.load %arg10[%c0_84, %c0_85, %c0_86] : memref<1x1x32xf32, #tpu.memory_space<vmem>>, vector<1x1x32xf32>
    %204 = vector.shape_cast %203 : vector<1x1x32xf32> to vector<1x32xf32>
    %205 = vector.broadcast %204 : vector<1x32xf32> to vector<16x32xf32>
    %206 = arith.addf %202, %205 : vector<16x32xf32>
    %207 = arith.truncf %206 : vector<16x32xf32> to vector<16x32xbf16>
    %c0_87 = arith.constant 0 : index
    %c0_88 = arith.constant 0 : index
    %c0_89 = arith.constant 0 : index
    %208 = vector.load %arg11[%c0_87, %c0_88, %c0_89] : memref<1x32x64xbf16, #tpu.memory_space<vmem>>, vector<1x32x64xbf16>
    %209 = vector.shape_cast %208 : vector<1x32x64xbf16> to vector<32x64xbf16>
    %cst_90 = arith.constant dense<0.000000e+00> : vector<20x64xf32>
    %210 = tpu.matmul %5, %209, %cst_90 {dimension_numbers = #tpu.dot_dimension_numbers<[1], [0], [0], [1], [0, 0, 1, 1], [], []>} : vector<20x32xbf16>, vector<32x64xbf16>, vector<20x64xf32> -> vector<20x64xf32>
    %c0_91 = arith.constant 0 : index
    %c0_92 = arith.constant 0 : index
    %c0_93 = arith.constant 0 : index
    %211 = vector.load %arg12[%c0_91, %c0_92, %c0_93] : memref<1x1x64xf32, #tpu.memory_space<vmem>>, vector<1x1x64xf32>
    %212 = vector.shape_cast %211 : vector<1x1x64xf32> to vector<1x64xf32>
    %213 = vector.broadcast %212 : vector<1x64xf32> to vector<20x64xf32>
    %214 = arith.addf %210, %213 : vector<20x64xf32>
    %215 = arith.truncf %214 : vector<20x64xf32> to vector<20x64xbf16>
    %c0_94 = arith.constant 0 : index
    %c0_95 = arith.constant 0 : index
    %c0_96 = arith.constant 0 : index
    %216 = vector.load %arg4[%c0_94, %c0_95, %c0_96] : memref<2x8x10xf32, #tpu.memory_space<vmem>>, vector<1x8x10xf32>
    %217 = vector.shape_cast %216 : vector<1x8x10xf32> to vector<8x10xf32>
    %218 = vector.extract_strided_slice %207 {offsets = [0, 0], sizes = [8, 8], strides = [1, 1]} : vector<16x32xbf16> to vector<8x8xbf16>
    %219 = vector.extract_strided_slice %215 {offsets = [0, 0], sizes = [10, 8], strides = [1, 1]} : vector<20x64xbf16> to vector<10x8xbf16>
    %220 = vector.extract_strided_slice %215 {offsets = [0, 32], sizes = [10, 8], strides = [1, 1]} : vector<20x64xbf16> to vector<10x8xbf16>
    %cst_97 = arith.constant dense<0.000000e+00> : vector<8x10xf32>
    %221 = tpu.matmul %218, %219, %cst_97 {dimension_numbers = #tpu.dot_dimension_numbers<[1], [1], [0], [0], [0, 0, 1, 0], [], []>} : vector<8x8xbf16>, vector<10x8xbf16>, vector<8x10xf32> -> vector<8x10xf32>
    %222 = arith.addf %221, %217 : vector<8x10xf32>
    %cst_98 = arith.constant dense<0xFF800000> : vector<8xf32>
    %223 = vector.multi_reduction <maximumf>, %222, %cst_98 [1] : vector<8x10xf32> to vector<8xf32>
    %224 = vector.shape_cast %223 : vector<8xf32> to vector<8x1xf32>
    %225 = vector.broadcast %224 : vector<8x1xf32> to vector<8x10xf32>
    %226 = arith.subf %222, %225 : vector<8x10xf32>
    %227 = math.exp %226 : vector<8x10xf32>
    %cst_99 = arith.constant dense<0.000000e+00> : vector<8xf32>
    %228 = vector.multi_reduction <add>, %227, %cst_99 [1] : vector<8x10xf32> to vector<8xf32>
    %229 = vector.shape_cast %228 : vector<8xf32> to vector<8x1xf32>
    %230 = tpu.reciprocal %229 {approx = true} : vector<8x1xf32> -> vector<8x1xf32>
    %231 = vector.broadcast %230 : vector<8x1xf32> to vector<8x10xf32>
    %232 = arith.mulf %227, %231 : vector<8x10xf32>
    %233 = arith.truncf %232 : vector<8x10xf32> to vector<8x10xbf16>
    %cst_100 = arith.constant dense<0.000000e+00> : vector<8x8xf32>
    %234 = tpu.matmul %233, %220, %cst_100 {dimension_numbers = #tpu.dot_dimension_numbers<[1], [0], [0], [1], [0, 0, 1, 1], [], []>} : vector<8x10xbf16>, vector<10x8xbf16>, vector<8x8xf32> -> vector<8x8xf32>
    %c0_101 = arith.constant 0 : index
    %c0_102 = arith.constant 0 : index
    %235 = vector.load %arg27[%c0_101, %c0_102] : memref<16x32xf32, #tpu.memory_space<vmem>>, vector<8x8xf32>
    tpu.vector_store %arg27[%c0_101, %c0_102], %234 {strides = array<i32>} : memref<16x32xf32, #tpu.memory_space<vmem>>, vector<8x8xf32>,
    %236 = arith.extui %0 : i1 to i32
    %c0_i32_103 = arith.constant 0 : i32
    %237 = arith.cmpi ne, %236, %c0_i32_103 : i32
    scf.if %237 {
      %c0_204 = arith.constant 0 : index
      %c0_205 = arith.constant 0 : index
      %c0_206 = arith.constant 0 : index
      %c0_207 = arith.constant 0 : index
      %462 = vector.load %arg26[%c0_204, %c0_205, %c0_206, %c0_207] : memref<2x4x8x10xf32, #tpu.memory_space<vmem>>, vector<1x1x8x10xf32>
      %463 = vector.shape_cast %462 : vector<1x1x8x10xf32> to vector<8x10xf32>
      %464 = vector.shape_cast %232 : vector<8x10xf32> to vector<1x1x8x10xf32>
      tpu.vector_store %arg26[%c0_204, %c0_205, %c0_206, %c0_207], %464 {strides = array<i32>} : memref<2x4x8x10xf32, #tpu.memory_space<vmem>>, vector<1x1x8x10xf32>,
    } else {
    }
    %238 = vector.extract_strided_slice %207 {offsets = [0, 8], sizes = [8, 8], strides = [1, 1]} : vector<16x32xbf16> to vector<8x8xbf16>
    %239 = vector.extract_strided_slice %215 {offsets = [0, 8], sizes = [10, 8], strides = [1, 1]} : vector<20x64xbf16> to vector<10x8xbf16>
    %240 = vector.extract_strided_slice %215 {offsets = [0, 40], sizes = [10, 8], strides = [1, 1]} : vector<20x64xbf16> to vector<10x8xbf16>
    %cst_104 = arith.constant dense<0.000000e+00> : vector<8x10xf32>
    %241 = tpu.matmul %238, %239, %cst_104 {dimension_numbers = #tpu.dot_dimension_numbers<[1], [1], [0], [0], [0, 0, 1, 0], [], []>} : vector<8x8xbf16>, vector<10x8xbf16>, vector<8x10xf32> -> vector<8x10xf32>
    %242 = arith.addf %241, %217 : vector<8x10xf32>
    %cst_105 = arith.constant dense<0xFF800000> : vector<8xf32>
    %243 = vector.multi_reduction <maximumf>, %242, %cst_105 [1] : vector<8x10xf32> to vector<8xf32>
    %244 = vector.shape_cast %243 : vector<8xf32> to vector<8x1xf32>
    %245 = vector.broadcast %244 : vector<8x1xf32> to vector<8x10xf32>
    %246 = arith.subf %242, %245 : vector<8x10xf32>
    %247 = math.exp %246 : vector<8x10xf32>
    %cst_106 = arith.constant dense<0.000000e+00> : vector<8xf32>
    %248 = vector.multi_reduction <add>, %247, %cst_106 [1] : vector<8x10xf32> to vector<8xf32>
    %249 = vector.shape_cast %248 : vector<8xf32> to vector<8x1xf32>
    %250 = tpu.reciprocal %249 {approx = true} : vector<8x1xf32> -> vector<8x1xf32>
    %251 = vector.broadcast %250 : vector<8x1xf32> to vector<8x10xf32>
    %252 = arith.mulf %247, %251 : vector<8x10xf32>
    %253 = arith.truncf %252 : vector<8x10xf32> to vector<8x10xbf16>
    %cst_107 = arith.constant dense<0.000000e+00> : vector<8x8xf32>
    %254 = tpu.matmul %253, %240, %cst_107 {dimension_numbers = #tpu.dot_dimension_numbers<[1], [0], [0], [1], [0, 0, 1, 1], [], []>} : vector<8x10xbf16>, vector<10x8xbf16>, vector<8x8xf32> -> vector<8x8xf32>
    %c0_108 = arith.constant 0 : index
    %c8_109 = arith.constant 8 : index
    %255 = vector.load %arg27[%c0_108, %c8_109] : memref<16x32xf32, #tpu.memory_space<vmem>>, vector<8x8xf32>
    tpu.vector_store %arg27[%c0_108, %c8_109], %254 {strides = array<i32>} : memref<16x32xf32, #tpu.memory_space<vmem>>, vector<8x8xf32>,
    %256 = arith.extui %0 : i1 to i32
    %c0_i32_110 = arith.constant 0 : i32
    %257 = arith.cmpi ne, %256, %c0_i32_110 : i32
    scf.if %257 {
      %c0_204 = arith.constant 0 : index
      %c1_205 = arith.constant 1 : index
      %c0_206 = arith.constant 0 : index
      %c0_207 = arith.constant 0 : index
      %462 = vector.load %arg26[%c0_204, %c1_205, %c0_206, %c0_207] : memref<2x4x8x10xf32, #tpu.memory_space<vmem>>, vector<1x1x8x10xf32>
      %463 = vector.shape_cast %462 : vector<1x1x8x10xf32> to vector<8x10xf32>
      %464 = vector.shape_cast %252 : vector<8x10xf32> to vector<1x1x8x10xf32>
      tpu.vector_store %arg26[%c0_204, %c1_205, %c0_206, %c0_207], %464 {strides = array<i32>} : memref<2x4x8x10xf32, #tpu.memory_space<vmem>>, vector<1x1x8x10xf32>,
    } else {
    }
    %258 = vector.extract_strided_slice %207 {offsets = [0, 16], sizes = [8, 8], strides = [1, 1]} : vector<16x32xbf16> to vector<8x8xbf16>
    %259 = vector.extract_strided_slice %215 {offsets = [0, 16], sizes = [10, 8], strides = [1, 1]} : vector<20x64xbf16> to vector<10x8xbf16>
    %260 = vector.extract_strided_slice %215 {offsets = [0, 48], sizes = [10, 8], strides = [1, 1]} : vector<20x64xbf16> to vector<10x8xbf16>
    %cst_111 = arith.constant dense<0.000000e+00> : vector<8x10xf32>
    %261 = tpu.matmul %258, %259, %cst_111 {dimension_numbers = #tpu.dot_dimension_numbers<[1], [1], [0], [0], [0, 0, 1, 0], [], []>} : vector<8x8xbf16>, vector<10x8xbf16>, vector<8x10xf32> -> vector<8x10xf32>
    %262 = arith.addf %261, %217 : vector<8x10xf32>
    %cst_112 = arith.constant dense<0xFF800000> : vector<8xf32>
    %263 = vector.multi_reduction <maximumf>, %262, %cst_112 [1] : vector<8x10xf32> to vector<8xf32>
    %264 = vector.shape_cast %263 : vector<8xf32> to vector<8x1xf32>
    %265 = vector.broadcast %264 : vector<8x1xf32> to vector<8x10xf32>
    %266 = arith.subf %262, %265 : vector<8x10xf32>
    %267 = math.exp %266 : vector<8x10xf32>
    %cst_113 = arith.constant dense<0.000000e+00> : vector<8xf32>
    %268 = vector.multi_reduction <add>, %267, %cst_113 [1] : vector<8x10xf32> to vector<8xf32>
    %269 = vector.shape_cast %268 : vector<8xf32> to vector<8x1xf32>
    %270 = tpu.reciprocal %269 {approx = true} : vector<8x1xf32> -> vector<8x1xf32>
    %271 = vector.broadcast %270 : vector<8x1xf32> to vector<8x10xf32>
    %272 = arith.mulf %267, %271 : vector<8x10xf32>
    %273 = arith.truncf %272 : vector<8x10xf32> to vector<8x10xbf16>
    %cst_114 = arith.constant dense<0.000000e+00> : vector<8x8xf32>
    %274 = tpu.matmul %273, %260, %cst_114 {dimension_numbers = #tpu.dot_dimension_numbers<[1], [0], [0], [1], [0, 0, 1, 1], [], []>} : vector<8x10xbf16>, vector<10x8xbf16>, vector<8x8xf32> -> vector<8x8xf32>
    %c0_115 = arith.constant 0 : index
    %c16_116 = arith.constant 16 : index
    %275 = vector.load %arg27[%c0_115, %c16_116] : memref<16x32xf32, #tpu.memory_space<vmem>>, vector<8x8xf32>
    tpu.vector_store %arg27[%c0_115, %c16_116], %274 {strides = array<i32>} : memref<16x32xf32, #tpu.memory_space<vmem>>, vector<8x8xf32>,
    %276 = arith.extui %0 : i1 to i32
    %c0_i32_117 = arith.constant 0 : i32
    %277 = arith.cmpi ne, %276, %c0_i32_117 : i32
    scf.if %277 {
      %c0_204 = arith.constant 0 : index
      %c2 = arith.constant 2 : index
      %c0_205 = arith.constant 0 : index
      %c0_206 = arith.constant 0 : index
      %462 = vector.load %arg26[%c0_204, %c2, %c0_205, %c0_206] : memref<2x4x8x10xf32, #tpu.memory_space<vmem>>, vector<1x1x8x10xf32>
      %463 = vector.shape_cast %462 : vector<1x1x8x10xf32> to vector<8x10xf32>
      %464 = vector.shape_cast %272 : vector<8x10xf32> to vector<1x1x8x10xf32>
      tpu.vector_store %arg26[%c0_204, %c2, %c0_205, %c0_206], %464 {strides = array<i32>} : memref<2x4x8x10xf32, #tpu.memory_space<vmem>>, vector<1x1x8x10xf32>,
    } else {
    }
    %278 = vector.extract_strided_slice %207 {offsets = [0, 24], sizes = [8, 8], strides = [1, 1]} : vector<16x32xbf16> to vector<8x8xbf16>
    %279 = vector.extract_strided_slice %215 {offsets = [0, 24], sizes = [10, 8], strides = [1, 1]} : vector<20x64xbf16> to vector<10x8xbf16>
    %280 = vector.extract_strided_slice %215 {offsets = [0, 56], sizes = [10, 8], strides = [1, 1]} : vector<20x64xbf16> to vector<10x8xbf16>
    %cst_118 = arith.constant dense<0.000000e+00> : vector<8x10xf32>
    %281 = tpu.matmul %278, %279, %cst_118 {dimension_numbers = #tpu.dot_dimension_numbers<[1], [1], [0], [0], [0, 0, 1, 0], [], []>} : vector<8x8xbf16>, vector<10x8xbf16>, vector<8x10xf32> -> vector<8x10xf32>
    %282 = arith.addf %281, %217 : vector<8x10xf32>
    %cst_119 = arith.constant dense<0xFF800000> : vector<8xf32>
    %283 = vector.multi_reduction <maximumf>, %282, %cst_119 [1] : vector<8x10xf32> to vector<8xf32>
    %284 = vector.shape_cast %283 : vector<8xf32> to vector<8x1xf32>
    %285 = vector.broadcast %284 : vector<8x1xf32> to vector<8x10xf32>
    %286 = arith.subf %282, %285 : vector<8x10xf32>
    %287 = math.exp %286 : vector<8x10xf32>
    %cst_120 = arith.constant dense<0.000000e+00> : vector<8xf32>
    %288 = vector.multi_reduction <add>, %287, %cst_120 [1] : vector<8x10xf32> to vector<8xf32>
    %289 = vector.shape_cast %288 : vector<8xf32> to vector<8x1xf32>
    %290 = tpu.reciprocal %289 {approx = true} : vector<8x1xf32> -> vector<8x1xf32>
    %291 = vector.broadcast %290 : vector<8x1xf32> to vector<8x10xf32>
    %292 = arith.mulf %287, %291 : vector<8x10xf32>
    %293 = arith.truncf %292 : vector<8x10xf32> to vector<8x10xbf16>
    %cst_121 = arith.constant dense<0.000000e+00> : vector<8x8xf32>
    %294 = tpu.matmul %293, %280, %cst_121 {dimension_numbers = #tpu.dot_dimension_numbers<[1], [0], [0], [1], [0, 0, 1, 1], [], []>} : vector<8x10xbf16>, vector<10x8xbf16>, vector<8x8xf32> -> vector<8x8xf32>
    %c0_122 = arith.constant 0 : index
    %c24_123 = arith.constant 24 : index
    %295 = vector.load %arg27[%c0_122, %c24_123] : memref<16x32xf32, #tpu.memory_space<vmem>>, vector<8x8xf32>
    tpu.vector_store %arg27[%c0_122, %c24_123], %294 {strides = array<i32>} : memref<16x32xf32, #tpu.memory_space<vmem>>, vector<8x8xf32>,
    %296 = arith.extui %0 : i1 to i32
    %c0_i32_124 = arith.constant 0 : i32
    %297 = arith.cmpi ne, %296, %c0_i32_124 : i32
    scf.if %297 {
      %c0_204 = arith.constant 0 : index
      %c3 = arith.constant 3 : index
      %c0_205 = arith.constant 0 : index
      %c0_206 = arith.constant 0 : index
      %462 = vector.load %arg26[%c0_204, %c3, %c0_205, %c0_206] : memref<2x4x8x10xf32, #tpu.memory_space<vmem>>, vector<1x1x8x10xf32>
      %463 = vector.shape_cast %462 : vector<1x1x8x10xf32> to vector<8x10xf32>
      %464 = vector.shape_cast %292 : vector<8x10xf32> to vector<1x1x8x10xf32>
      tpu.vector_store %arg26[%c0_204, %c3, %c0_205, %c0_206], %464 {strides = array<i32>} : memref<2x4x8x10xf32, #tpu.memory_space<vmem>>, vector<1x1x8x10xf32>,
    } else {
    }
    %c1_125 = arith.constant 1 : index
    %c0_126 = arith.constant 0 : index
    %c0_127 = arith.constant 0 : index
    %298 = vector.load %arg4[%c1_125, %c0_126, %c0_127] : memref<2x8x10xf32, #tpu.memory_space<vmem>>, vector<1x8x10xf32>
    %299 = vector.shape_cast %298 : vector<1x8x10xf32> to vector<8x10xf32>
    %300 = vector.extract_strided_slice %207 {offsets = [8, 0], sizes = [8, 8], strides = [1, 1]} : vector<16x32xbf16> to vector<8x8xbf16>
    %301 = vector.extract_strided_slice %215 {offsets = [10, 0], sizes = [10, 8], strides = [1, 1]} : vector<20x64xbf16> to vector<10x8xbf16>
    %302 = vector.extract_strided_slice %215 {offsets = [10, 32], sizes = [10, 8], strides = [1, 1]} : vector<20x64xbf16> to vector<10x8xbf16>
    %cst_128 = arith.constant dense<0.000000e+00> : vector<8x10xf32>
    %303 = tpu.matmul %300, %301, %cst_128 {dimension_numbers = #tpu.dot_dimension_numbers<[1], [1], [0], [0], [0, 0, 1, 0], [], []>} : vector<8x8xbf16>, vector<10x8xbf16>, vector<8x10xf32> -> vector<8x10xf32>
    %304 = arith.addf %303, %299 : vector<8x10xf32>
    %cst_129 = arith.constant dense<0xFF800000> : vector<8xf32>
    %305 = vector.multi_reduction <maximumf>, %304, %cst_129 [1] : vector<8x10xf32> to vector<8xf32>
    %306 = vector.shape_cast %305 : vector<8xf32> to vector<8x1xf32>
    %307 = vector.broadcast %306 : vector<8x1xf32> to vector<8x10xf32>
    %308 = arith.subf %304, %307 : vector<8x10xf32>
    %309 = math.exp %308 : vector<8x10xf32>
    %cst_130 = arith.constant dense<0.000000e+00> : vector<8xf32>
    %310 = vector.multi_reduction <add>, %309, %cst_130 [1] : vector<8x10xf32> to vector<8xf32>
    %311 = vector.shape_cast %310 : vector<8xf32> to vector<8x1xf32>
    %312 = tpu.reciprocal %311 {approx = true} : vector<8x1xf32> -> vector<8x1xf32>
    %313 = vector.broadcast %312 : vector<8x1xf32> to vector<8x10xf32>
    %314 = arith.mulf %309, %313 : vector<8x10xf32>
    %315 = arith.truncf %314 : vector<8x10xf32> to vector<8x10xbf16>
    %cst_131 = arith.constant dense<0.000000e+00> : vector<8x8xf32>
    %316 = tpu.matmul %315, %302, %cst_131 {dimension_numbers = #tpu.dot_dimension_numbers<[1], [0], [0], [1], [0, 0, 1, 1], [], []>} : vector<8x10xbf16>, vector<10x8xbf16>, vector<8x8xf32> -> vector<8x8xf32>
    %c8_132 = arith.constant 8 : index
    %c0_133 = arith.constant 0 : index
    %317 = vector.load %arg27[%c8_132, %c0_133] : memref<16x32xf32, #tpu.memory_space<vmem>>, vector<8x8xf32>
    tpu.vector_store %arg27[%c8_132, %c0_133], %316 {strides = array<i32>} : memref<16x32xf32, #tpu.memory_space<vmem>>, vector<8x8xf32>,
    %318 = arith.extui %0 : i1 to i32
    %c0_i32_134 = arith.constant 0 : i32
    %319 = arith.cmpi ne, %318, %c0_i32_134 : i32
    scf.if %319 {
      %c1_204 = arith.constant 1 : index
      %c0_205 = arith.constant 0 : index
      %c0_206 = arith.constant 0 : index
      %c0_207 = arith.constant 0 : index
      %462 = vector.load %arg26[%c1_204, %c0_205, %c0_206, %c0_207] : memref<2x4x8x10xf32, #tpu.memory_space<vmem>>, vector<1x1x8x10xf32>
      %463 = vector.shape_cast %462 : vector<1x1x8x10xf32> to vector<8x10xf32>
      %464 = vector.shape_cast %314 : vector<8x10xf32> to vector<1x1x8x10xf32>
      tpu.vector_store %arg26[%c1_204, %c0_205, %c0_206, %c0_207], %464 {strides = array<i32>} : memref<2x4x8x10xf32, #tpu.memory_space<vmem>>, vector<1x1x8x10xf32>,
    } else {
    }
    %320 = vector.extract_strided_slice %207 {offsets = [8, 8], sizes = [8, 8], strides = [1, 1]} : vector<16x32xbf16> to vector<8x8xbf16>
    %321 = vector.extract_strided_slice %215 {offsets = [10, 8], sizes = [10, 8], strides = [1, 1]} : vector<20x64xbf16> to vector<10x8xbf16>
    %322 = vector.extract_strided_slice %215 {offsets = [10, 40], sizes = [10, 8], strides = [1, 1]} : vector<20x64xbf16> to vector<10x8xbf16>
    %cst_135 = arith.constant dense<0.000000e+00> : vector<8x10xf32>
    %323 = tpu.matmul %320, %321, %cst_135 {dimension_numbers = #tpu.dot_dimension_numbers<[1], [1], [0], [0], [0, 0, 1, 0], [], []>} : vector<8x8xbf16>, vector<10x8xbf16>, vector<8x10xf32> -> vector<8x10xf32>
    %324 = arith.addf %323, %299 : vector<8x10xf32>
    %cst_136 = arith.constant dense<0xFF800000> : vector<8xf32>
    %325 = vector.multi_reduction <maximumf>, %324, %cst_136 [1] : vector<8x10xf32> to vector<8xf32>
    %326 = vector.shape_cast %325 : vector<8xf32> to vector<8x1xf32>
    %327 = vector.broadcast %326 : vector<8x1xf32> to vector<8x10xf32>
    %328 = arith.subf %324, %327 : vector<8x10xf32>
    %329 = math.exp %328 : vector<8x10xf32>
    %cst_137 = arith.constant dense<0.000000e+00> : vector<8xf32>
    %330 = vector.multi_reduction <add>, %329, %cst_137 [1] : vector<8x10xf32> to vector<8xf32>
    %331 = vector.shape_cast %330 : vector<8xf32> to vector<8x1xf32>
    %332 = tpu.reciprocal %331 {approx = true} : vector<8x1xf32> -> vector<8x1xf32>
    %333 = vector.broadcast %332 : vector<8x1xf32> to vector<8x10xf32>
    %334 = arith.mulf %329, %333 : vector<8x10xf32>
    %335 = arith.truncf %334 : vector<8x10xf32> to vector<8x10xbf16>
    %cst_138 = arith.constant dense<0.000000e+00> : vector<8x8xf32>
    %336 = tpu.matmul %335, %322, %cst_138 {dimension_numbers = #tpu.dot_dimension_numbers<[1], [0], [0], [1], [0, 0, 1, 1], [], []>} : vector<8x10xbf16>, vector<10x8xbf16>, vector<8x8xf32> -> vector<8x8xf32>
    %c8_139 = arith.constant 8 : index
    %c8_140 = arith.constant 8 : index
    %337 = vector.load %arg27[%c8_139, %c8_140] : memref<16x32xf32, #tpu.memory_space<vmem>>, vector<8x8xf32>
    tpu.vector_store %arg27[%c8_139, %c8_140], %336 {strides = array<i32>} : memref<16x32xf32, #tpu.memory_space<vmem>>, vector<8x8xf32>,
    %338 = arith.extui %0 : i1 to i32
    %c0_i32_141 = arith.constant 0 : i32
    %339 = arith.cmpi ne, %338, %c0_i32_141 : i32
    scf.if %339 {
      %c1_204 = arith.constant 1 : index
      %c1_205 = arith.constant 1 : index
      %c0_206 = arith.constant 0 : index
      %c0_207 = arith.constant 0 : index
      %462 = vector.load %arg26[%c1_204, %c1_205, %c0_206, %c0_207] : memref<2x4x8x10xf32, #tpu.memory_space<vmem>>, vector<1x1x8x10xf32>
      %463 = vector.shape_cast %462 : vector<1x1x8x10xf32> to vector<8x10xf32>
      %464 = vector.shape_cast %334 : vector<8x10xf32> to vector<1x1x8x10xf32>
      tpu.vector_store %arg26[%c1_204, %c1_205, %c0_206, %c0_207], %464 {strides = array<i32>} : memref<2x4x8x10xf32, #tpu.memory_space<vmem>>, vector<1x1x8x10xf32>,
    } else {
    }
    %340 = vector.extract_strided_slice %207 {offsets = [8, 16], sizes = [8, 8], strides = [1, 1]} : vector<16x32xbf16> to vector<8x8xbf16>
    %341 = vector.extract_strided_slice %215 {offsets = [10, 16], sizes = [10, 8], strides = [1, 1]} : vector<20x64xbf16> to vector<10x8xbf16>
    %342 = vector.extract_strided_slice %215 {offsets = [10, 48], sizes = [10, 8], strides = [1, 1]} : vector<20x64xbf16> to vector<10x8xbf16>
    %cst_142 = arith.constant dense<0.000000e+00> : vector<8x10xf32>
    %343 = tpu.matmul %340, %341, %cst_142 {dimension_numbers = #tpu.dot_dimension_numbers<[1], [1], [0], [0], [0, 0, 1, 0], [], []>} : vector<8x8xbf16>, vector<10x8xbf16>, vector<8x10xf32> -> vector<8x10xf32>
    %344 = arith.addf %343, %299 : vector<8x10xf32>
    %cst_143 = arith.constant dense<0xFF800000> : vector<8xf32>
    %345 = vector.multi_reduction <maximumf>, %344, %cst_143 [1] : vector<8x10xf32> to vector<8xf32>
    %346 = vector.shape_cast %345 : vector<8xf32> to vector<8x1xf32>
    %347 = vector.broadcast %346 : vector<8x1xf32> to vector<8x10xf32>
    %348 = arith.subf %344, %347 : vector<8x10xf32>
    %349 = math.exp %348 : vector<8x10xf32>
    %cst_144 = arith.constant dense<0.000000e+00> : vector<8xf32>
    %350 = vector.multi_reduction <add>, %349, %cst_144 [1] : vector<8x10xf32> to vector<8xf32>
    %351 = vector.shape_cast %350 : vector<8xf32> to vector<8x1xf32>
    %352 = tpu.reciprocal %351 {approx = true} : vector<8x1xf32> -> vector<8x1xf32>
    %353 = vector.broadcast %352 : vector<8x1xf32> to vector<8x10xf32>
    %354 = arith.mulf %349, %353 : vector<8x10xf32>
    %355 = arith.truncf %354 : vector<8x10xf32> to vector<8x10xbf16>
    %cst_145 = arith.constant dense<0.000000e+00> : vector<8x8xf32>
    %356 = tpu.matmul %355, %342, %cst_145 {dimension_numbers = #tpu.dot_dimension_numbers<[1], [0], [0], [1], [0, 0, 1, 1], [], []>} : vector<8x10xbf16>, vector<10x8xbf16>, vector<8x8xf32> -> vector<8x8xf32>
    %c8_146 = arith.constant 8 : index
    %c16_147 = arith.constant 16 : index
    %357 = vector.load %arg27[%c8_146, %c16_147] : memref<16x32xf32, #tpu.memory_space<vmem>>, vector<8x8xf32>
    tpu.vector_store %arg27[%c8_146, %c16_147], %356 {strides = array<i32>} : memref<16x32xf32, #tpu.memory_space<vmem>>, vector<8x8xf32>,
    %358 = arith.extui %0 : i1 to i32
    %c0_i32_148 = arith.constant 0 : i32
    %359 = arith.cmpi ne, %358, %c0_i32_148 : i32
    scf.if %359 {
      %c1_204 = arith.constant 1 : index
      %c2 = arith.constant 2 : index
      %c0_205 = arith.constant 0 : index
      %c0_206 = arith.constant 0 : index
      %462 = vector.load %arg26[%c1_204, %c2, %c0_205, %c0_206] : memref<2x4x8x10xf32, #tpu.memory_space<vmem>>, vector<1x1x8x10xf32>
      %463 = vector.shape_cast %462 : vector<1x1x8x10xf32> to vector<8x10xf32>
      %464 = vector.shape_cast %354 : vector<8x10xf32> to vector<1x1x8x10xf32>
      tpu.vector_store %arg26[%c1_204, %c2, %c0_205, %c0_206], %464 {strides = array<i32>} : memref<2x4x8x10xf32, #tpu.memory_space<vmem>>, vector<1x1x8x10xf32>,
    } else {
    }
    %360 = vector.extract_strided_slice %207 {offsets = [8, 24], sizes = [8, 8], strides = [1, 1]} : vector<16x32xbf16> to vector<8x8xbf16>
    %361 = vector.extract_strided_slice %215 {offsets = [10, 24], sizes = [10, 8], strides = [1, 1]} : vector<20x64xbf16> to vector<10x8xbf16>
    %362 = vector.extract_strided_slice %215 {offsets = [10, 56], sizes = [10, 8], strides = [1, 1]} : vector<20x64xbf16> to vector<10x8xbf16>
    %cst_149 = arith.constant dense<0.000000e+00> : vector<8x10xf32>
    %363 = tpu.matmul %360, %361, %cst_149 {dimension_numbers = #tpu.dot_dimension_numbers<[1], [1], [0], [0], [0, 0, 1, 0], [], []>} : vector<8x8xbf16>, vector<10x8xbf16>, vector<8x10xf32> -> vector<8x10xf32>
    %364 = arith.addf %363, %299 : vector<8x10xf32>
    %cst_150 = arith.constant dense<0xFF800000> : vector<8xf32>
    %365 = vector.multi_reduction <maximumf>, %364, %cst_150 [1] : vector<8x10xf32> to vector<8xf32>
    %366 = vector.shape_cast %365 : vector<8xf32> to vector<8x1xf32>
    %367 = vector.broadcast %366 : vector<8x1xf32> to vector<8x10xf32>
    %368 = arith.subf %364, %367 : vector<8x10xf32>
    %369 = math.exp %368 : vector<8x10xf32>
    %cst_151 = arith.constant dense<0.000000e+00> : vector<8xf32>
    %370 = vector.multi_reduction <add>, %369, %cst_151 [1] : vector<8x10xf32> to vector<8xf32>
    %371 = vector.shape_cast %370 : vector<8xf32> to vector<8x1xf32>
    %372 = tpu.reciprocal %371 {approx = true} : vector<8x1xf32> -> vector<8x1xf32>
    %373 = vector.broadcast %372 : vector<8x1xf32> to vector<8x10xf32>
    %374 = arith.mulf %369, %373 : vector<8x10xf32>
    %375 = arith.truncf %374 : vector<8x10xf32> to vector<8x10xbf16>
    %cst_152 = arith.constant dense<0.000000e+00> : vector<8x8xf32>
    %376 = tpu.matmul %375, %362, %cst_152 {dimension_numbers = #tpu.dot_dimension_numbers<[1], [0], [0], [1], [0, 0, 1, 1], [], []>} : vector<8x10xbf16>, vector<10x8xbf16>, vector<8x8xf32> -> vector<8x8xf32>
    %c8_153 = arith.constant 8 : index
    %c24_154 = arith.constant 24 : index
    %377 = vector.load %arg27[%c8_153, %c24_154] : memref<16x32xf32, #tpu.memory_space<vmem>>, vector<8x8xf32>
    tpu.vector_store %arg27[%c8_153, %c24_154], %376 {strides = array<i32>} : memref<16x32xf32, #tpu.memory_space<vmem>>, vector<8x8xf32>,
    %378 = arith.extui %0 : i1 to i32
    %c0_i32_155 = arith.constant 0 : i32
    %379 = arith.cmpi ne, %378, %c0_i32_155 : i32
    scf.if %379 {
      %c1_204 = arith.constant 1 : index
      %c3 = arith.constant 3 : index
      %c0_205 = arith.constant 0 : index
      %c0_206 = arith.constant 0 : index
      %462 = vector.load %arg26[%c1_204, %c3, %c0_205, %c0_206] : memref<2x4x8x10xf32, #tpu.memory_space<vmem>>, vector<1x1x8x10xf32>
      %463 = vector.shape_cast %462 : vector<1x1x8x10xf32> to vector<8x10xf32>
      %464 = vector.shape_cast %374 : vector<8x10xf32> to vector<1x1x8x10xf32>
      tpu.vector_store %arg26[%c1_204, %c3, %c0_205, %c0_206], %464 {strides = array<i32>} : memref<2x4x8x10xf32, #tpu.memory_space<vmem>>, vector<1x1x8x10xf32>,
    } else {
    }
    %c0_156 = arith.constant 0 : index
    %c0_157 = arith.constant 0 : index
    %380 = vector.load %arg27[%c0_156, %c0_157] : memref<16x32xf32, #tpu.memory_space<vmem>>, vector<16x32xf32>
    %381 = arith.truncf %380 : vector<16x32xf32> to vector<16x32xbf16>
    %c0_158 = arith.constant 0 : index
    %c0_159 = arith.constant 0 : index
    %c0_160 = arith.constant 0 : index
    %382 = vector.load %arg13[%c0_158, %c0_159, %c0_160] : memref<1x32x32xbf16, #tpu.memory_space<vmem>>, vector<1x32x32xbf16>
    %383 = vector.shape_cast %382 : vector<1x32x32xbf16> to vector<32x32xbf16>
    %cst_161 = arith.constant dense<0.000000e+00> : vector<16x32xf32>
    %384 = tpu.matmul %381, %383, %cst_161 {dimension_numbers = #tpu.dot_dimension_numbers<[1], [0], [0], [1], [0, 0, 1, 1], [], []>} : vector<16x32xbf16>, vector<32x32xbf16>, vector<16x32xf32> -> vector<16x32xf32>
    %c0_162 = arith.constant 0 : index
    %c0_163 = arith.constant 0 : index
    %c0_164 = arith.constant 0 : index
    %385 = vector.load %arg14[%c0_162, %c0_163, %c0_164] : memref<1x1x32xf32, #tpu.memory_space<vmem>>, vector<1x1x32xf32>
    %386 = vector.shape_cast %385 : vector<1x1x32xf32> to vector<1x32xf32>
    %387 = vector.broadcast %386 : vector<1x32xf32> to vector<16x32xf32>
    %388 = arith.addf %384, %387 : vector<16x32xf32>
    %389 = arith.addf %198, %388 : vector<16x32xf32>
    %cst_165 = arith.constant dense<0.000000e+00> : vector<16xf32>
    %390 = vector.multi_reduction <add>, %389, %cst_165 [1] : vector<16x32xf32> to vector<16xf32>
    %391 = vector.shape_cast %390 : vector<16xf32> to vector<16x1xf32>
    %cst_166 = arith.constant 3.200000e+01 : f32
    %392 = vector.broadcast %cst_166 : f32 to vector<16x1xf32>
    %393 = arith.divf %391, %392 : vector<16x1xf32>
    %394 = vector.broadcast %393 : vector<16x1xf32> to vector<16x32xf32>
    %395 = arith.subf %389, %394 : vector<16x32xf32>
    %396 = arith.mulf %395, %395 : vector<16x32xf32>
    %cst_167 = arith.constant dense<0.000000e+00> : vector<16xf32>
    %397 = vector.multi_reduction <add>, %396, %cst_167 [1] : vector<16x32xf32> to vector<16xf32>
    %398 = vector.shape_cast %397 : vector<16xf32> to vector<16x1xf32>
    %cst_168 = arith.constant 3.200000e+01 : f32
    %399 = vector.broadcast %cst_168 : f32 to vector<16x1xf32>
    %400 = arith.divf %398, %399 : vector<16x1xf32>
    %401 = vector.broadcast %393 : vector<16x1xf32> to vector<16x32xf32>
    %402 = arith.subf %389, %401 : vector<16x32xf32>
    %cst_169 = arith.constant 9.99999974E-6 : f32
    %403 = vector.broadcast %cst_169 : f32 to vector<16x1xf32>
    %404 = arith.addf %400, %403 : vector<16x1xf32>
    %405 = math.rsqrt %404 : vector<16x1xf32>
    %406 = vector.broadcast %405 : vector<16x1xf32> to vector<16x32xf32>
    %407 = arith.mulf %402, %406 : vector<16x32xf32>
    %c0_170 = arith.constant 0 : index
    %c0_171 = arith.constant 0 : index
    %c0_172 = arith.constant 0 : index
    %408 = vector.load %arg17[%c0_170, %c0_171, %c0_172] : memref<1x1x32xf32, #tpu.memory_space<vmem>>, vector<1x1x32xf32>
    %409 = vector.shape_cast %408 : vector<1x1x32xf32> to vector<1x32xf32>
    %410 = vector.broadcast %409 : vector<1x32xf32> to vector<16x32xf32>
    %411 = arith.mulf %407, %410 : vector<16x32xf32>
    %c0_173 = arith.constant 0 : index
    %c0_174 = arith.constant 0 : index
    %c0_175 = arith.constant 0 : index
    %412 = vector.load %arg18[%c0_173, %c0_174, %c0_175] : memref<1x1x32xf32, #tpu.memory_space<vmem>>, vector<1x1x32xf32>
    %413 = vector.shape_cast %412 : vector<1x1x32xf32> to vector<1x32xf32>
    %414 = vector.broadcast %413 : vector<1x32xf32> to vector<16x32xf32>
    %415 = arith.addf %411, %414 : vector<16x32xf32>
    %416 = arith.truncf %415 : vector<16x32xf32> to vector<16x32xbf16>
    %c0_176 = arith.constant 0 : index
    %c0_177 = arith.constant 0 : index
    %c0_178 = arith.constant 0 : index
    %417 = vector.load %arg21[%c0_176, %c0_177, %c0_178] : memref<1x32x64xbf16, #tpu.memory_space<vmem>>, vector<1x32x64xbf16>
    %418 = vector.shape_cast %417 : vector<1x32x64xbf16> to vector<32x64xbf16>
    %cst_179 = arith.constant dense<0.000000e+00> : vector<16x64xf32>
    %419 = tpu.matmul %416, %418, %cst_179 {dimension_numbers = #tpu.dot_dimension_numbers<[1], [0], [0], [1], [0, 0, 1, 1], [], []>} : vector<16x32xbf16>, vector<32x64xbf16>, vector<16x64xf32> -> vector<16x64xf32>
    %c0_180 = arith.constant 0 : index
    %c0_181 = arith.constant 0 : index
    %c0_182 = arith.constant 0 : index
    %420 = vector.load %arg22[%c0_180, %c0_181, %c0_182] : memref<1x1x64xf32, #tpu.memory_space<vmem>>, vector<1x1x64xf32>
    %421 = vector.shape_cast %420 : vector<1x1x64xf32> to vector<1x64xf32>
    %422 = vector.broadcast %421 : vector<1x64xf32> to vector<16x64xf32>
    %423 = arith.addf %419, %422 : vector<16x64xf32>
    %cst_183 = arith.constant 0.000000e+00 : f32
    %424 = vector.broadcast %cst_183 : f32 to vector<16x64xf32>
    %425 = arith.maximumf %423, %424 : vector<16x64xf32>
    %426 = arith.truncf %425 : vector<16x64xf32> to vector<16x64xbf16>
    %c0_184 = arith.constant 0 : index
    %c0_185 = arith.constant 0 : index
    %c0_186 = arith.constant 0 : index
    %427 = vector.load %arg23[%c0_184, %c0_185, %c0_186] : memref<1x64x32xbf16, #tpu.memory_space<vmem>>, vector<1x64x32xbf16>
    %428 = vector.shape_cast %427 : vector<1x64x32xbf16> to vector<64x32xbf16>
    %cst_187 = arith.constant dense<0.000000e+00> : vector<16x32xf32>
    %429 = tpu.matmul %426, %428, %cst_187 {dimension_numbers = #tpu.dot_dimension_numbers<[1], [0], [0], [1], [0, 0, 1, 1], [], []>} : vector<16x64xbf16>, vector<64x32xbf16>, vector<16x32xf32> -> vector<16x32xf32>
    %c0_188 = arith.constant 0 : index
    %c0_189 = arith.constant 0 : index
    %c0_190 = arith.constant 0 : index
    %430 = vector.load %arg24[%c0_188, %c0_189, %c0_190] : memref<1x1x32xf32, #tpu.memory_space<vmem>>, vector<1x1x32xf32>
    %431 = vector.shape_cast %430 : vector<1x1x32xf32> to vector<1x32xf32>
    %432 = vector.broadcast %431 : vector<1x32xf32> to vector<16x32xf32>
    %433 = arith.addf %429, %432 : vector<16x32xf32>
    %434 = arith.addf %415, %433 : vector<16x32xf32>
    %cst_191 = arith.constant dense<0.000000e+00> : vector<16xf32>
    %435 = vector.multi_reduction <add>, %434, %cst_191 [1] : vector<16x32xf32> to vector<16xf32>
    %436 = vector.shape_cast %435 : vector<16xf32> to vector<16x1xf32>
    %cst_192 = arith.constant 3.200000e+01 : f32
    %437 = vector.broadcast %cst_192 : f32 to vector<16x1xf32>
    %438 = arith.divf %436, %437 : vector<16x1xf32>
    %439 = vector.broadcast %438 : vector<16x1xf32> to vector<16x32xf32>
    %440 = arith.subf %434, %439 : vector<16x32xf32>
    %441 = arith.mulf %440, %440 : vector<16x32xf32>
    %cst_193 = arith.constant dense<0.000000e+00> : vector<16xf32>
    %442 = vector.multi_reduction <add>, %441, %cst_193 [1] : vector<16x32xf32> to vector<16xf32>
    %443 = vector.shape_cast %442 : vector<16xf32> to vector<16x1xf32>
    %cst_194 = arith.constant 3.200000e+01 : f32
    %444 = vector.broadcast %cst_194 : f32 to vector<16x1xf32>
    %445 = arith.divf %443, %444 : vector<16x1xf32>
    %446 = vector.broadcast %438 : vector<16x1xf32> to vector<16x32xf32>
    %447 = arith.subf %434, %446 : vector<16x32xf32>
    %cst_195 = arith.constant 9.99999974E-6 : f32
    %448 = vector.broadcast %cst_195 : f32 to vector<16x1xf32>
    %449 = arith.addf %445, %448 : vector<16x1xf32>
    %450 = math.rsqrt %449 : vector<16x1xf32>
    %451 = vector.broadcast %450 : vector<16x1xf32> to vector<16x32xf32>
    %452 = arith.mulf %447, %451 : vector<16x32xf32>
    %c0_196 = arith.constant 0 : index
    %c0_197 = arith.constant 0 : index
    %c0_198 = arith.constant 0 : index
    %453 = vector.load %arg19[%c0_196, %c0_197, %c0_198] : memref<1x1x32xf32, #tpu.memory_space<vmem>>, vector<1x1x32xf32>
    %454 = vector.shape_cast %453 : vector<1x1x32xf32> to vector<1x32xf32>
    %455 = vector.broadcast %454 : vector<1x32xf32> to vector<16x32xf32>
    %456 = arith.mulf %452, %455 : vector<16x32xf32>
    %c0_199 = arith.constant 0 : index
    %c0_200 = arith.constant 0 : index
    %c0_201 = arith.constant 0 : index
    %457 = vector.load %arg20[%c0_199, %c0_200, %c0_201] : memref<1x1x32xf32, #tpu.memory_space<vmem>>, vector<1x1x32xf32>
    %458 = vector.shape_cast %457 : vector<1x1x32xf32> to vector<1x32xf32>
    %459 = vector.broadcast %458 : vector<1x32xf32> to vector<16x32xf32>
    %460 = arith.addf %456, %459 : vector<16x32xf32>
    %c0_202 = arith.constant 0 : index
    %c0_203 = arith.constant 0 : index
    %461 = vector.load %arg25[%c0_202, %c0_203] : memref<16x32xf32, #tpu.memory_space<vmem>>, vector<16x32xf32>
    tpu.vector_store %arg25[%c0_202, %c0_203], %460 {strides = array<i32>} : memref<16x32xf32, #tpu.memory_space<vmem>>, vector<16x32xf32>,
    return
  }
  func.func @transform_0(%arg0: i32) -> (i32, i32) {
    %c0_i32 = arith.constant 0 : i32
    %c0_i32_0 = arith.constant 0 : i32
    %c0_i32_1 = arith.constant 0 : i32
    return %c0_i32, %c0_i32_0 : i32, i32
  }
  func.func @transform_1(%arg0: i32) -> (i32, i32) {
    %c0_i32 = arith.constant 0 : i32
    %c0_i32_0 = arith.constant 0 : i32
    %c0_i32_1 = arith.constant 0 : i32
    return %c0_i32, %c0_i32_0 : i32, i32
  }
  func.func @transform_2(%arg0: i32) -> (i32, i32, i32) {
    %c0_i32 = arith.constant 0 : i32
    %c0_i32_0 = arith.constant 0 : i32
    %c0_i32_1 = arith.constant 0 : i32
    %c0_i32_2 = arith.constant 0 : i32
    return %c0_i32, %c0_i32_0, %c0_i32_1 : i32, i32, i32
  }
  func.func @transform_3(%arg0: i32) -> (i32, i32, i32) {
    %c0_i32 = arith.constant 0 : i32
    %c0_i32_0 = arith.constant 0 : i32
    %c0_i32_1 = arith.constant 0 : i32
    %c0_i32_2 = arith.constant 0 : i32
    return %c0_i32, %c0_i32_0, %c0_i32_1 : i32, i32, i32
  }
  func.func @transform_4(%arg0: i32) -> (i32, i32, i32) {
    %c0_i32 = arith.constant 0 : i32
    %c0_i32_0 = arith.constant 0 : i32
    %c0_i32_1 = arith.constant 0 : i32
    return %arg0, %c0_i32, %c0_i32_0 : i32, i32, i32
  }
  func.func @transform_5(%arg0: i32) -> (i32, i32, i32) {
    %c0_i32 = arith.constant 0 : i32
    %c0_i32_0 = arith.constant 0 : i32
    %c0_i32_1 = arith.constant 0 : i32
    return %arg0, %c0_i32, %c0_i32_0 : i32, i32, i32
  }
  func.func @transform_6(%arg0: i32) -> (i32, i32, i32) {
    %c0_i32 = arith.constant 0 : i32
    %c0_i32_0 = arith.constant 0 : i32
    %c0_i32_1 = arith.constant 0 : i32
    return %arg0, %c0_i32, %c0_i32_0 : i32, i32, i32
  }
  func.func @transform_7(%arg0: i32) -> (i32, i32, i32) {
    %c0_i32 = arith.constant 0 : i32
    %c0_i32_0 = arith.constant 0 : i32
    %c0_i32_1 = arith.constant 0 : i32
    return %arg0, %c0_i32, %c0_i32_0 : i32, i32, i32
  }
  func.func @transform_8(%arg0: i32) -> (i32, i32, i32) {
    %c0_i32 = arith.constant 0 : i32
    %c0_i32_0 = arith.constant 0 : i32
    %c0_i32_1 = arith.constant 0 : i32
    return %arg0, %c0_i32, %c0_i32_0 : i32, i32, i32
  }
  func.func @transform_9(%arg0: i32) -> (i32, i32, i32) {
    %c0_i32 = arith.constant 0 : i32
    %c0_i32_0 = arith.constant 0 : i32
    %c0_i32_1 = arith.constant 0 : i32
    return %arg0, %c0_i32, %c0_i32_0 : i32, i32, i32
  }
  func.func @transform_10(%arg0: i32) -> (i32, i32, i32) {
    %c0_i32 = arith.constant 0 : i32
    %c0_i32_0 = arith.constant 0 : i32
    %c0_i32_1 = arith.constant 0 : i32
    return %arg0, %c0_i32, %c0_i32_0 : i32, i32, i32
  }
  func.func @transform_11(%arg0: i32) -> (i32, i32, i32) {
    %c0_i32 = arith.constant 0 : i32
    %c0_i32_0 = arith.constant 0 : i32
    %c0_i32_1 = arith.constant 0 : i32
    return %arg0, %c0_i32, %c0_i32_0 : i32, i32, i32
  }
  func.func @transform_12(%arg0: i32) -> (i32, i32, i32) {
    %c0_i32 = arith.constant 0 : i32
    %c0_i32_0 = arith.constant 0 : i32
    %c0_i32_1 = arith.constant 0 : i32
    return %arg0, %c0_i32, %c0_i32_0 : i32, i32, i32
  }
  func.func @transform_13(%arg0: i32) -> (i32, i32, i32) {
    %c0_i32 = arith.constant 0 : i32
    %c0_i32_0 = arith.constant 0 : i32
    %c0_i32_1 = arith.constant 0 : i32
    return %arg0, %c0_i32, %c0_i32_0 : i32, i32, i32
  }
  func.func @transform_14(%arg0: i32) -> (i32, i32, i32) {
    %c0_i32 = arith.constant 0 : i32
    %c0_i32_0 = arith.constant 0 : i32
    %c0_i32_1 = arith.constant 0 : i32
    return %arg0, %c0_i32, %c0_i32_0 : i32, i32, i32
  }
  func.func @transform_15(%arg0: i32) -> (i32, i32, i32) {
    %c0_i32 = arith.constant 0 : i32
    %c0_i32_0 = arith.constant 0 : i32
    %c0_i32_1 = arith.constant 0 : i32
    return %arg0, %c0_i32, %c0_i32_0 : i32, i32, i32
  }
  func.func @transform_16(%arg0: i32) -> (i32, i32, i32) {
    %c0_i32 = arith.constant 0 : i32
    %c0_i32_0 = arith.constant 0 : i32
    %c0_i32_1 = arith.constant 0 : i32
    return %arg0, %c0_i32, %c0_i32_0 : i32, i32, i32
  }
  func.func @transform_17(%arg0: i32) -> (i32, i32, i32) {
    %c0_i32 = arith.constant 0 : i32
    %c0_i32_0 = arith.constant 0 : i32
    %c0_i32_1 = arith.constant 0 : i32
    return %arg0, %c0_i32, %c0_i32_0 : i32, i32, i32
  }
  func.func @transform_18(%arg0: i32) -> (i32, i32, i32) {
    %c0_i32 = arith.constant 0 : i32
    %c0_i32_0 = arith.constant 0 : i32
    %c0_i32_1 = arith.constant 0 : i32
    return %arg0, %c0_i32, %c0_i32_0 : i32, i32, i32
  }
  func.func @transform_19(%arg0: i32) -> (i32, i32, i32) {
    %c0_i32 = arith.constant 0 : i32
    %c0_i32_0 = arith.constant 0 : i32
    %c0_i32_1 = arith.constant 0 : i32
    return %arg0, %c0_i32, %c0_i32_0 : i32, i32, i32
  }
  func.func @transform_20(%arg0: i32) -> (i32, i32, i32) {
    %c0_i32 = arith.constant 0 : i32
    %c0_i32_0 = arith.constant 0 : i32
    %c0_i32_1 = arith.constant 0 : i32
    return %arg0, %c0_i32, %c0_i32_0 : i32, i32, i32
  }
  func.func @transform_21(%arg0: i32) -> (i32, i32, i32) {
    %c0_i32 = arith.constant 0 : i32
    %c0_i32_0 = arith.constant 0 : i32
    %c0_i32_1 = arith.constant 0 : i32
    return %arg0, %c0_i32, %c0_i32_0 : i32, i32, i32
  }
  func.func @transform_22(%arg0: i32) -> (i32, i32, i32) {
    %c0_i32 = arith.constant 0 : i32
    %c0_i32_0 = arith.constant 0 : i32
    %c0_i32_1 = arith.constant 0 : i32
    return %arg0, %c0_i32, %c0_i32_0 : i32, i32, i32
  }
  func.func @transform_23(%arg0: i32) -> (i32, i32, i32) {
    %c0_i32 = arith.constant 0 : i32
    %c0_i32_0 = arith.constant 0 : i32
    %c0_i32_1 = arith.constant 0 : i32
    return %arg0, %c0_i32, %c0_i32_0 : i32, i32, i32
  }
  func.func @transform_24(%arg0: i32) -> (i32, i32) {
    %c0_i32 = arith.constant 0 : i32
    %c0_i32_0 = arith.constant 0 : i32
    %c0_i32_1 = arith.constant 0 : i32
    return %c0_i32, %c0_i32_0 : i32, i32
  }
  func.func @transform_25(%arg0: i32) -> (i32, i32, i32, i32) {
    %c0_i32 = arith.constant 0 : i32
    %c0_i32_0 = arith.constant 0 : i32
    %c0_i32_1 = arith.constant 0 : i32
    %c0_i32_2 = arith.constant 0 : i32
    %c0_i32_3 = arith.constant 0 : i32
    return %c0_i32, %c0_i32_0, %c0_i32_1, %c0_i32_2 : i32, i32, i32, i32
  }
}

</mosaic_0001>

<llo_original>
// kernel: tpu_custom_call.1
$region0: #{tpu_custom_call.1}
  #allocation0 [shape = 'u32[]', space=smem, size = 0x4, offset = 0x4, fixed_abs, tag = 'smem constant byte address 0x4 - core index']
  #allocation1 [shape = 'u32[144,128]{1,0:T(1,128)}', space=vmem, size = 0x12000, scoped, tag = 'internal scratch']
  #allocation2 [shape = 'f32[16,32]{1,0:T(8,128)}', space=vmem, size = 0x2000, scoped, tag = 'scratch operand']
  %s0 = inlined_call_operand.hbm [shape: f32[16,32], index: 0, kind: input, shape index: {}]
  %s1 = inlined_call_operand.hbm [shape: bf16[20,32], index: 1, kind: input, shape index: {}]
  %s2 = inlined_call_operand.hbm [shape: f32[2,8,8], index: 2, kind: input, shape index: {}]
  %s3 = inlined_call_operand.hbm [shape: f32[2,8,10], index: 3, kind: input, shape index: {}]
  %s4 = inlined_call_operand.vmem [shape: bf16[2,32,96], index: 4, kind: input, shape index: {}]
  %s5 = inlined_call_operand.hbm [shape: f32[2,1,96], index: 5, kind: input, shape index: {}]
  %s6 = inlined_call_operand.vmem [shape: bf16[2,32,32], index: 6, kind: input, shape index: {}]
  %s7 = inlined_call_operand.hbm [shape: f32[2,1,32], index: 7, kind: input, shape index: {}]
  %s8 = inlined_call_operand.vmem [shape: bf16[2,32,32], index: 8, kind: input, shape index: {}]
  %s9 = inlined_call_operand.hbm [shape: f32[2,1,32], index: 9, kind: input, shape index: {}]
  %s10 = inlined_call_operand.vmem [shape: bf16[2,32,64], index: 10, kind: input, shape index: {}]
  %s11 = inlined_call_operand.hbm [shape: f32[2,1,64], index: 11, kind: input, shape index: {}]
  %s12 = inlined_call_operand.hbm [shape: bf16[2,32,32], index: 12, kind: input, shape index: {}]
  %s13 = inlined_call_operand.hbm [shape: f32[2,1,32], index: 13, kind: input, shape index: {}]
  %s14 = inlined_call_operand.hbm [shape: f32[2,1,32], index: 14, kind: input, shape index: {}]
  %s15 = inlined_call_operand.hbm [shape: f32[2,1,32], index: 15, kind: input, shape index: {}]
  %s16 = inlined_call_operand.hbm [shape: f32[2,1,32], index: 16, kind: input, shape index: {}]
  %s17 = inlined_call_operand.hbm [shape: f32[2,1,32], index: 17, kind: input, shape index: {}]
  %s18 = inlined_call_operand.vmem [shape: f32[2,1,32], index: 18, kind: input, shape index: {}]
  %s19 = inlined_call_operand.vmem [shape: f32[2,1,32], index: 19, kind: input, shape index: {}]
  %s20 = inlined_call_operand.hbm [shape: bf16[2,32,64], index: 20, kind: input, shape index: {}]
  %s21 = inlined_call_operand.vmem [shape: f32[2,1,64], index: 21, kind: input, shape index: {}]
  %s22 = inlined_call_operand.vmem [shape: bf16[2,64,32], index: 22, kind: input, shape index: {}]
  %s23 = inlined_call_operand.vmem [shape: f32[2,1,32], index: 23, kind: input, shape index: {}]
  %s24 = inlined_call_operand.hbm [shape: f32[16,32], index: 24, kind: output, shape index: {0}]
  %s25 = inlined_call_operand.hbm [shape: f32[2,4,8,10], index: 25, kind: output, shape index: {1}]
  %26 = xla_tuple %s24, %s25
  %s27 = sld [smem:[#allocation0]]
  $region233: #{tpu_custom_call.1} parent=0
    _
  %s29 = ssub.s32 1, %s27
  %s30 = scalar_select 0, %s29, %s27
  $region1: #{tpu_custom_call.1} parent=0
    #allocation3 [shape = 'u8[8192]{0}', space=vmem, size = 0x2000, scoped, tag = 'input window, operand 0, single buffered']
    #allocation4 [shape = 's32[2]{0}', space=sflag, size = 0x8, scoped, tag = 'scoped memory for tpu_custom_call.1']
    #allocation5 [shape = 's32[2]{0}', space=sflag, size = 0x8, scoped, tag = 'scoped memory for tpu_custom_call.1']
    #allocation6 [shape = 'u8[6144]{0}', space=vmem, size = 0x1800, scoped, tag = 'input window, operand 1, single buffered']
    #allocation7 [shape = 's32[1]{0}', space=sflag, size = 0x4, scoped, tag = 'scoped memory for tpu_custom_call.1']
    #allocation8 [shape = 'u8[8192]{0}', space=vmem, size = 0x2000, scoped, tag = 'input window, operand 2, single buffered']
    #allocation9 [shape = 'u8[8192]{0}', space=vmem, size = 0x2000, scoped, tag = 'input window, operand 3, single buffered']
    #allocation10 [shape = 's32[1]{0}', space=sflag, size = 0x4, scoped, tag = 'scoped memory for tpu_custom_call.1']
    #allocation11 [shape = 'u8[1024]{0}', space=vmem, size = 0x400, scoped, tag = 'input window, operand 5']
    #allocation12 [shape = 'u8[1024]{0}', space=vmem, size = 0x400, scoped, tag = 'input window, operand 7']
    #allocation13 [shape = 'u8[1024]{0}', space=vmem, size = 0x400, scoped, tag = 'input window, operand 9']
    #allocation14 [shape = 'u8[1024]{0}', space=vmem, size = 0x400, scoped, tag = 'input window, operand 11']
    #allocation15 [shape = 'u8[16384]{0}', space=vmem, size = 0x4000, scoped, tag = 'input window, operand 12']
    #allocation16 [shape = 'u8[1024]{0}', space=vmem, size = 0x400, scoped, tag = 'input window, operand 13']
    #allocation17 [shape = 'u8[1024]{0}', space=vmem, size = 0x400, scoped, tag = 'input window, operand 14']
    #allocation18 [shape = 'u8[1024]{0}', space=vmem, size = 0x400, scoped, tag = 'input window, operand 15']
    #allocation19 [shape = 'u8[1024]{0}', space=vmem, size = 0x400, scoped, tag = 'input window, operand 16']
    #allocation20 [shape = 'u8[1024]{0}', space=vmem, size = 0x400, scoped, tag = 'input window, operand 17']
    #allocation21 [shape = 'u8[16384]{0}', space=vmem, size = 0x4000, scoped, tag = 'input window, operand 20']
    #allocation22 [shape = 'u8[8192]{0}', space=vmem, size = 0x2000, scoped, tag = 'output window, operand 0, single buffered']
    #allocation23 [shape = 'u8[32768]{0}', space=vmem, size = 0x8000, scoped, tag = 'output window, operand 1, single buffered']
    #allocation24 [shape = 's32[1]{0}', space=sflag, size = 0x4, scoped, tag = 'scoped memory for tpu_custom_call.1']
    %31 = vsyncpa [#allocation4], 0
    %32 = vsyncpa [#allocation7], 0
    %33 = vsyncpa [#allocation10], 0
    %34 = vsyncpa [#allocation5], 0
    %35 = vsyncpa [#allocation24], 0
    loop: start=0, step=1, limit=4
    $region2: #{tpu_custom_call.1} parent=1 // loop_pre_header
      _
    $region3: #{tpu_custom_call.1} parent=1 // loop_header
      %s37 = sphi 0, %s41
      %p38 = scmp.ge.s32.totalorder %s37, 4
      %s45 = sphi 0, %s45
      %s47 = sphi 0, %s45
      %s48 = sphi 0, %s47
      %s62 = sphi 0, %s48
      %s66 = sphi 0, %s66
      %s68 = sphi 0, %s66
      %s69 = sphi 0, %s68
      %s83 = sphi 0, %s69
      %s87 = sphi 0, %s87
      %s89 = sphi 0, %s87
      %s90 = sphi 0, %s89
      %s104 = sphi 0, %s90
      %s108 = sphi 0, %s108
      %s110 = sphi 0, %s108
      %s111 = sphi 0, %s110
      %s125 = sphi 0, %s111
      %s131 = sphi 0, %s133
      %s134 = sphi 0, %s131
      %s135 = sphi 0, %s134
      %s151 = sphi 0, %s135
      %s157 = sphi 0, %s159
      %s160 = sphi 0, %s157
      %s161 = sphi 0, %s160
      %s177 = sphi 0, %s161
      %s183 = sphi 0, %s185
      %s186 = sphi 0, %s183
      %s187 = sphi 0, %s186
      %s203 = sphi 0, %s187
      %s209 = sphi 0, %s211
      %s212 = sphi 0, %s209
      %s213 = sphi 0, %s212
      %s229 = sphi 0, %s213
      %s235 = sphi 0, %s237
      %s238 = sphi 0, %s235
      %s239 = sphi 0, %s238
      %s255 = sphi 0, %s239
      %s261 = sphi 0, %s263
      %s264 = sphi 0, %s261
      %s265 = sphi 0, %s264
      %s281 = sphi 0, %s265
      %s287 = sphi 0, %s289
      %s290 = sphi 0, %s287
      %s291 = sphi 0, %s290
      %s307 = sphi 0, %s291
      %s313 = sphi 0, %s315
      %s316 = sphi 0, %s313
      %s317 = sphi 0, %s316
      %s333 = sphi 0, %s317
      %s339 = sphi 0, %s341
      %s342 = sphi 0, %s339
      %s343 = sphi 0, %s342
      %s359 = sphi 0, %s343
      %s365 = sphi 0, %s367
      %s368 = sphi 0, %s365
      %s369 = sphi 0, %s368
      %s385 = sphi 0, %s369
      %s391 = sphi 0, %s393
      %s394 = sphi 0, %s391
      %s395 = sphi 0, %s394
      %s411 = sphi 0, %s395
      %s417 = sphi 0, %s419
      %s420 = sphi 0, %s417
      %s421 = sphi 0, %s420
      %s437 = sphi 0, %s421
      %s443 = sphi 0, %s445
      %s446 = sphi 0, %s443
      %s447 = sphi 0, %s446
      %s463 = sphi 0, %s447
      %s469 = sphi 0, %s471
      %s472 = sphi 0, %s469
      %s473 = sphi 0, %s472
      %s489 = sphi 0, %s473
      %s495 = sphi 0, %s497
      %s498 = sphi 0, %s495
      %s499 = sphi 0, %s498
      %s515 = sphi 0, %s499
      %s521 = sphi 0, %s523
      %s524 = sphi 0, %s521
      %s525 = sphi 0, %s524
      %s541 = sphi 0, %s525
      %s547 = sphi 0, %s549
      %s550 = sphi 0, %s547
      %s551 = sphi 0, %s550
      %s567 = sphi 0, %s551
      %s573 = sphi 0, %s575
      %s576 = sphi 0, %s573
      %s577 = sphi 0, %s576
      %s593 = sphi 0, %s577
      %s599 = sphi 0, %s601
      %s602 = sphi 0, %s599
      %s603 = sphi 0, %s602
      %s619 = sphi 0, %s603
      %s625 = sphi 0, %s627
      %s628 = sphi 0, %s625
      %s629 = sphi 0, %s628
      %s645 = sphi 0, %s629
      %s649 = sphi 0, %s649
      %s651 = sphi 0, %s649
      %s652 = sphi 0, %s651
      %s666 = sphi 0, %s652
      %s670 = sphi 0, %s670
      %s672 = sphi 0, %s670
      %s673 = sphi 0, %s672
      %s687 = sphi 0, %s673
    $region4: #{tpu_custom_call.1} parent=1 // loop_header_branch
      %40 = sbr.rel (%p38) target = $region8
    $region5: #{tpu_custom_call.1} parent=1 // loop_body
      %s42 = ssub.s32 %s37, 1
      %s43 = ssub.s32 %s37, 2
      %s44 = sadd.s32 %s37, 1
      %s46 = sadd.s32 %s45, 1
      %p49 = scmp.eq.s32.totalorder %s37, 1
      %p50 = scmp.ne.s32.totalorder %s45, %s47
      %p51 = scmp.eq.s32.totalorder %s37, 0
      %p52 = por %p50, %p51
      %p53 = scmp.ne.s32.totalorder %s45, %s47
      %p54 = scmp.eq.s32.totalorder %s42, 1
      %p55 = por %p53, %p54
      %p56 = scmp.ne.s32.totalorder %s47, %s48
      %p57 = scmp.eq.s32.totalorder %s42, 0
      %p58 = por %p56, %p57
      %p59 = scmp.ne.s32.totalorder %s47, %s48
      %p60 = scmp.eq.s32.totalorder %s43, 1
      %p61 = por %p59, %p60
      %p63 = scmp.ne.s32.totalorder %s48, %s62
      %p64 = scmp.eq.s32.totalorder %s43, 0
      %p65 = por %p63, %p64
      %s67 = sadd.s32 %s66, 1
      %p70 = scmp.eq.s32.totalorder %s37, 1
      %p71 = scmp.ne.s32.totalorder %s66, %s68
      %p72 = scmp.eq.s32.totalorder %s37, 0
      %p73 = por %p71, %p72
      %p74 = scmp.ne.s32.totalorder %s66, %s68
      %p75 = scmp.eq.s32.totalorder %s42, 1
      %p76 = por %p74, %p75
      %p77 = scmp.ne.s32.totalorder %s68, %s69
      %p78 = scmp.eq.s32.totalorder %s42, 0
      %p79 = por %p77, %p78
      %p80 = scmp.ne.s32.totalorder %s68, %s69
      %p81 = scmp.eq.s32.totalorder %s43, 1
      %p82 = por %p80, %p81
      %p84 = scmp.ne.s32.totalorder %s69, %s83
      %p85 = scmp.eq.s32.totalorder %s43, 0
      %p86 = por %p84, %p85
      %s88 = sadd.s32 %s87, 1
      %p91 = scmp.eq.s32.totalorder %s37, 1
      %p92 = scmp.ne.s32.totalorder %s87, %s89
      %p93 = scmp.eq.s32.totalorder %s37, 0
      %p94 = por %p92, %p93
      %p95 = scmp.ne.s32.totalorder %s87, %s89
      %p96 = scmp.eq.s32.totalorder %s42, 1
      %p97 = por %p95, %p96
      %p98 = scmp.ne.s32.totalorder %s89, %s90
      %p99 = scmp.eq.s32.totalorder %s42, 0
      %p100 = por %p98, %p99
      %p101 = scmp.ne.s32.totalorder %s89, %s90
      %p102 = scmp.eq.s32.totalorder %s43, 1
      %p103 = por %p101, %p102
      %p105 = scmp.ne.s32.totalorder %s90, %s104
      %p106 = scmp.eq.s32.totalorder %s43, 0
      %p107 = por %p105, %p106
      %s109 = sadd.s32 %s108, 1
      %p112 = scmp.eq.s32.totalorder %s37, 1
      %p113 = scmp.ne.s32.totalorder %s108, %s110
      %p114 = scmp.eq.s32.totalorder %s37, 0
      %p115 = por %p113, %p114
      %p116 = scmp.ne.s32.totalorder %s108, %s110
      %p117 = scmp.eq.s32.totalorder %s42, 1
      %p118 = por %p116, %p117
      %p119 = scmp.ne.s32.totalorder %s110, %s111
      %p120 = scmp.eq.s32.totalorder %s42, 0
      %p121 = por %p119, %p120
      %p122 = scmp.ne.s32.totalorder %s110, %s111
      %p123 = scmp.eq.s32.totalorder %s43, 1
      %p124 = por %p122, %p123
      %p126 = scmp.ne.s32.totalorder %s111, %s125
      %p127 = scmp.eq.s32.totalorder %s43, 0
      %p128 = por %p126, %p127
      %s129 = ssub.s32 %s37, %s44
      %p130 = scmp.eq.s32.totalorder %s129, 0
      %s132 = sadd.s32 %s131, 1
      %s133 = scalar_select %p130, %s131, %s132
      %p136 = pneg %p130
      %p137 = scmp.eq.s32.totalorder %s37, 1
      %p138 = por %p136, %p137
      %p139 = scmp.ne.s32.totalorder %s131, %s134
      %p140 = scmp.eq.s32.totalorder %s37, 0
      %p141 = por %p139, %p140
      %p142 = scmp.ne.s32.totalorder %s131, %s134
      %p143 = scmp.eq.s32.totalorder %s42, 1
      %p144 = por %p142, %p143
      %p145 = scmp.ne.s32.totalorder %s134, %s135
      %p146 = scmp.eq.s32.totalorder %s42, 0
      %p147 = por %p145, %p146
      %p148 = scmp.ne.s32.totalorder %s134, %s135
      %p149 = scmp.eq.s32.totalorder %s43, 1
      %p150 = por %p148, %p149
      %p152 = scmp.ne.s32.totalorder %s135, %s151
      %p153 = scmp.eq.s32.totalorder %s43, 0
      %p154 = por %p152, %p153
      %s155 = ssub.s32 %s37, %s44
      %p156 = scmp.eq.s32.totalorder %s155, 0
      %s158 = sadd.s32 %s157, 1
      %s159 = scalar_select %p156, %s157, %s158
      %p162 = pneg %p156
      %p163 = scmp.eq.s32.totalorder %s37, 1
      %p164 = por %p162, %p163
      %p165 = scmp.ne.s32.totalorder %s157, %s160
      %p166 = scmp.eq.s32.totalorder %s37, 0
      %p167 = por %p165, %p166
      %p168 = scmp.ne.s32.totalorder %s157, %s160
      %p169 = scmp.eq.s32.totalorder %s42, 1
      %p170 = por %p168, %p169
      %p171 = scmp.ne.s32.totalorder %s160, %s161
      %p172 = scmp.eq.s32.totalorder %s42, 0
      %p173 = por %p171, %p172
      %p174 = scmp.ne.s32.totalorder %s160, %s161
      %p175 = scmp.eq.s32.totalorder %s43, 1
      %p176 = por %p174, %p175
      %p178 = scmp.ne.s32.totalorder %s161, %s177
      %p179 = scmp.eq.s32.totalorder %s43, 0
      %p180 = por %p178, %p179
      %s181 = ssub.s32 %s37, %s44
      %p182 = scmp.eq.s32.totalorder %s181, 0
      %s184 = sadd.s32 %s183, 1
      %s185 = scalar_select %p182, %s183, %s184
      %p188 = pneg %p182
      %p189 = scmp.eq.s32.totalorder %s37, 1
      %p190 = por %p188, %p189
      %p191 = scmp.ne.s32.totalorder %s183, %s186
      %p192 = scmp.eq.s32.totalorder %s37, 0
      %p193 = por %p191, %p192
      %p194 = scmp.ne.s32.totalorder %s183, %s186
      %p195 = scmp.eq.s32.totalorder %s42, 1
      %p196 = por %p194, %p195
      %p197 = scmp.ne.s32.totalorder %s186, %s187
      %p198 = scmp.eq.s32.totalorder %s42, 0
      %p199 = por %p197, %p198
      %p200 = scmp.ne.s32.totalorder %s186, %s187
      %p201 = scmp.eq.s32.totalorder %s43, 1
      %p202 = por %p200, %p201
      %p204 = scmp.ne.s32.totalorder %s187, %s203
      %p205 = scmp.eq.s32.totalorder %s43, 0
      %p206 = por %p204, %p205
      %s207 = ssub.s32 %s37, %s44
      %p208 = scmp.eq.s32.totalorder %s207, 0
      %s210 = sadd.s32 %s209, 1
      %s211 = scalar_select %p208, %s209, %s210
      %p214 = pneg %p208
      %p215 = scmp.eq.s32.totalorder %s37, 1
      %p216 = por %p214, %p215
      %p217 = scmp.ne.s32.totalorder %s209, %s212
      %p218 = scmp.eq.s32.totalorder %s37, 0
      %p219 = por %p217, %p218
      %p220 = scmp.ne.s32.totalorder %s209, %s212
      %p221 = scmp.eq.s32.totalorder %s42, 1
      %p222 = por %p220, %p221
      %p223 = scmp.ne.s32.totalorder %s212, %s213
      %p224 = scmp.eq.s32.totalorder %s42, 0
      %p225 = por %p223, %p224
      %p226 = scmp.ne.s32.totalorder %s212, %s213
      %p227 = scmp.eq.s32.totalorder %s43, 1
      %p228 = por %p226, %p227
      %p230 = scmp.ne.s32.totalorder %s213, %s229
      %p231 = scmp.eq.s32.totalorder %s43, 0
      %p232 = por %p230, %p231
      %s233 = ssub.s32 %s37, %s44
      %p234 = scmp.eq.s32.totalorder %s233, 0
      %s236 = sadd.s32 %s235, 1
      %s237 = scalar_select %p234, %s235, %s236
      %p240 = pneg %p234
      %p241 = scmp.eq.s32.totalorder %s37, 1
      %p242 = por %p240, %p241
      %p243 = scmp.ne.s32.totalorder %s235, %s238
      %p244 = scmp.eq.s32.totalorder %s37, 0
      %p245 = por %p243, %p244
      %p246 = scmp.ne.s32.totalorder %s235, %s238
      %p247 = scmp.eq.s32.totalorder %s42, 1
      %p248 = por %p246, %p247
      %p249 = scmp.ne.s32.totalorder %s238, %s239
      %p250 = scmp.eq.s32.totalorder %s42, 0
      %p251 = por %p249, %p250
      %p252 = scmp.ne.s32.totalorder %s238, %s239
      %p253 = scmp.eq.s32.totalorder %s43, 1
      %p254 = por %p252, %p253
      %p256 = scmp.ne.s32.totalorder %s239, %s255
      %p257 = scmp.eq.s32.totalorder %s43, 0
      %p258 = por %p256, %p257
      %s259 = ssub.s32 %s37, %s44
      %p260 = scmp.eq.s32.totalorder %s259, 0
      %s262 = sadd.s32 %s261, 1
      %s263 = scalar_select %p260, %s261, %s262
      %p266 = pneg %p260
      %p267 = scmp.eq.s32.totalorder %s37, 1
      %p268 = por %p266, %p267
      %p269 = scmp.ne.s32.totalorder %s261, %s264
      %p270 = scmp.eq.s32.totalorder %s37, 0
      %p271 = por %p269, %p270
      %p272 = scmp.ne.s32.totalorder %s261, %s264
      %p273 = scmp.eq.s32.totalorder %s42, 1
      %p274 = por %p272, %p273
      %p275 = scmp.ne.s32.totalorder %s264, %s265
      %p276 = scmp.eq.s32.totalorder %s42, 0
      %p277 = por %p275, %p276
      %p278 = scmp.ne.s32.totalorder %s264, %s265
      %p279 = scmp.eq.s32.totalorder %s43, 1
      %p280 = por %p278, %p279
      %p282 = scmp.ne.s32.totalorder %s265, %s281
      %p283 = scmp.eq.s32.totalorder %s43, 0
      %p284 = por %p282, %p283
      %s285 = ssub.s32 %s37, %s44
      %p286 = scmp.eq.s32.totalorder %s285, 0
      %s288 = sadd.s32 %s287, 1
      %s289 = scalar_select %p286, %s287, %s288
      %p292 = pneg %p286
      %p293 = scmp.eq.s32.totalorder %s37, 1
      %p294 = por %p292, %p293
      %p295 = scmp.ne.s32.totalorder %s287, %s290
      %p296 = scmp.eq.s32.totalorder %s37, 0
      %p297 = por %p295, %p296
      %p298 = scmp.ne.s32.totalorder %s287, %s290
      %p299 = scmp.eq.s32.totalorder %s42, 1
      %p300 = por %p298, %p299
      %p301 = scmp.ne.s32.totalorder %s290, %s291
      %p302 = scmp.eq.s32.totalorder %s42, 0
      %p303 = por %p301, %p302
      %p304 = scmp.ne.s32.totalorder %s290, %s291
      %p305 = scmp.eq.s32.totalorder %s43, 1
      %p306 = por %p304, %p305
      %p308 = scmp.ne.s32.totalorder %s291, %s307
      %p309 = scmp.eq.s32.totalorder %s43, 0
      %p310 = por %p308, %p309
      %s311 = ssub.s32 %s37, %s44
      %p312 = scmp.eq.s32.totalorder %s311, 0
      %s314 = sadd.s32 %s313, 1
      %s315 = scalar_select %p312, %s313, %s314
      %p318 = pneg %p312
      %p319 = scmp.eq.s32.totalorder %s37, 1
      %p320 = por %p318, %p319
      %p321 = scmp.ne.s32.totalorder %s313, %s316
      %p322 = scmp.eq.s32.totalorder %s37, 0
      %p323 = por %p321, %p322
      %p324 = scmp.ne.s32.totalorder %s313, %s316
      %p325 = scmp.eq.s32.totalorder %s42, 1
      %p326 = por %p324, %p325
      %p327 = scmp.ne.s32.totalorder %s316, %s317
      %p328 = scmp.eq.s32.totalorder %s42, 0
      %p329 = por %p327, %p328
      %p330 = scmp.ne.s32.totalorder %s316, %s317
      %p331 = scmp.eq.s32.totalorder %s43, 1
      %p332 = por %p330, %p331
      %p334 = scmp.ne.s32.totalorder %s317, %s333
      %p335 = scmp.eq.s32.totalorder %s43, 0
      %p336 = por %p334, %p335
      %s337 = ssub.s32 %s37, %s44
      %p338 = scmp.eq.s32.totalorder %s337, 0
      %s340 = sadd.s32 %s339, 1
      %s341 = scalar_select %p338, %s339, %s340
      %p344 = pneg %p338
      %p345 = scmp.eq.s32.totalorder %s37, 1
      %p346 = por %p344, %p345
      %p347 = scmp.ne.s32.totalorder %s339, %s342
      %p348 = scmp.eq.s32.totalorder %s37, 0
      %p349 = por %p347, %p348
      %p350 = scmp.ne.s32.totalorder %s339, %s342
      %p351 = scmp.eq.s32.totalorder %s42, 1
      %p352 = por %p350, %p351
      %p353 = scmp.ne.s32.totalorder %s342, %s343
      %p354 = scmp.eq.s32.totalorder %s42, 0
      %p355 = por %p353, %p354
      %p356 = scmp.ne.s32.totalorder %s342, %s343
      %p357 = scmp.eq.s32.totalorder %s43, 1
      %p358 = por %p356, %p357
      %p360 = scmp.ne.s32.totalorder %s343, %s359
      %p361 = scmp.eq.s32.totalorder %s43, 0
      %p362 = por %p360, %p361
      %s363 = ssub.s32 %s37, %s44
      %p364 = scmp.eq.s32.totalorder %s363, 0
      %s366 = sadd.s32 %s365, 1
      %s367 = scalar_select %p364, %s365, %s366
      %p370 = pneg %p364
      %p371 = scmp.eq.s32.totalorder %s37, 1
      %p372 = por %p370, %p371
      %p373 = scmp.ne.s32.totalorder %s365, %s368
      %p374 = scmp.eq.s32.totalorder %s37, 0
      %p375 = por %p373, %p374
      %p376 = scmp.ne.s32.totalorder %s365, %s368
      %p377 = scmp.eq.s32.totalorder %s42, 1
      %p378 = por %p376, %p377
      %p379 = scmp.ne.s32.totalorder %s368, %s369
      %p380 = scmp.eq.s32.totalorder %s42, 0
      %p381 = por %p379, %p380
      %p382 = scmp.ne.s32.totalorder %s368, %s369
      %p383 = scmp.eq.s32.totalorder %s43, 1
      %p384 = por %p382, %p383
      %p386 = scmp.ne.s32.totalorder %s369, %s385
      %p387 = scmp.eq.s32.totalorder %s43, 0
      %p388 = por %p386, %p387
      %s389 = ssub.s32 %s37, %s44
      %p390 = scmp.eq.s32.totalorder %s389, 0
      %s392 = sadd.s32 %s391, 1
      %s393 = scalar_select %p390, %s391, %s392
      %p396 = pneg %p390
      %p397 = scmp.eq.s32.totalorder %s37, 1
      %p398 = por %p396, %p397
      %p399 = scmp.ne.s32.totalorder %s391, %s394
      %p400 = scmp.eq.s32.totalorder %s37, 0
      %p401 = por %p399, %p400
      %p402 = scmp.ne.s32.totalorder %s391, %s394
      %p403 = scmp.eq.s32.totalorder %s42, 1
      %p404 = por %p402, %p403
      %p405 = scmp.ne.s32.totalorder %s394, %s395
      %p406 = scmp.eq.s32.totalorder %s42, 0
      %p407 = por %p405, %p406
      %p408 = scmp.ne.s32.totalorder %s394, %s395
      %p409 = scmp.eq.s32.totalorder %s43, 1
      %p410 = por %p408, %p409
      %p412 = scmp.ne.s32.totalorder %s395, %s411
      %p413 = scmp.eq.s32.totalorder %s43, 0
      %p414 = por %p412, %p413
      %s415 = ssub.s32 %s37, %s44
      %p416 = scmp.eq.s32.totalorder %s415, 0
      %s418 = sadd.s32 %s417, 1
      %s419 = scalar_select %p416, %s417, %s418
      %p422 = pneg %p416
      %p423 = scmp.eq.s32.totalorder %s37, 1
      %p424 = por %p422, %p423
      %p425 = scmp.ne.s32.totalorder %s417, %s420
      %p426 = scmp.eq.s32.totalorder %s37, 0
      %p427 = por %p425, %p426
      %p428 = scmp.ne.s32.totalorder %s417, %s420
      %p429 = scmp.eq.s32.totalorder %s42, 1
      %p430 = por %p428, %p429
      %p431 = scmp.ne.s32.totalorder %s420, %s421
      %p432 = scmp.eq.s32.totalorder %s42, 0
      %p433 = por %p431, %p432
      %p434 = scmp.ne.s32.totalorder %s420, %s421
      %p435 = scmp.eq.s32.totalorder %s43, 1
      %p436 = por %p434, %p435
      %p438 = scmp.ne.s32.totalorder %s421, %s437
      %p439 = scmp.eq.s32.totalorder %s43, 0
      %p440 = por %p438, %p439
      %s441 = ssub.s32 %s37, %s44
      %p442 = scmp.eq.s32.totalorder %s441, 0
      %s444 = sadd.s32 %s443, 1
      %s445 = scalar_select %p442, %s443, %s444
      %p448 = pneg %p442
      %p449 = scmp.eq.s32.totalorder %s37, 1
      %p450 = por %p448, %p449
      %p451 = scmp.ne.s32.totalorder %s443, %s446
      %p452 = scmp.eq.s32.totalorder %s37, 0
      %p453 = por %p451, %p452
      %p454 = scmp.ne.s32.totalorder %s443, %s446
      %p455 = scmp.eq.s32.totalorder %s42, 1
      %p456 = por %p454, %p455
      %p457 = scmp.ne.s32.totalorder %s446, %s447
      %p458 = scmp.eq.s32.totalorder %s42, 0
      %p459 = por %p457, %p458
      %p460 = scmp.ne.s32.totalorder %s446, %s447
      %p461 = scmp.eq.s32.totalorder %s43, 1
      %p462 = por %p460, %p461
      %p464 = scmp.ne.s32.totalorder %s447, %s463
      %p465 = scmp.eq.s32.totalorder %s43, 0
      %p466 = por %p464, %p465
      %s467 = ssub.s32 %s37, %s44
      %p468 = scmp.eq.s32.totalorder %s467, 0
      %s470 = sadd.s32 %s469, 1
      %s471 = scalar_select %p468, %s469, %s470
      %p474 = pneg %p468
      %p475 = scmp.eq.s32.totalorder %s37, 1
      %p476 = por %p474, %p475
      %p477 = scmp.ne.s32.totalorder %s469, %s472
      %p478 = scmp.eq.s32.totalorder %s37, 0
      %p479 = por %p477, %p478
      %p480 = scmp.ne.s32.totalorder %s469, %s472
      %p481 = scmp.eq.s32.totalorder %s42, 1
      %p482 = por %p480, %p481
      %p483 = scmp.ne.s32.totalorder %s472, %s473
      %p484 = scmp.eq.s32.totalorder %s42, 0
      %p485 = por %p483, %p484
      %p486 = scmp.ne.s32.totalorder %s472, %s473
      %p487 = scmp.eq.s32.totalorder %s43, 1
      %p488 = por %p486, %p487
      %p490 = scmp.ne.s32.totalorder %s473, %s489
      %p491 = scmp.eq.s32.totalorder %s43, 0
      %p492 = por %p490, %p491
      %s493 = ssub.s32 %s37, %s44
      %p494 = scmp.eq.s32.totalorder %s493, 0
      %s496 = sadd.s32 %s495, 1
      %s497 = scalar_select %p494, %s495, %s496
      %p500 = pneg %p494
      %p501 = scmp.eq.s32.totalorder %s37, 1
      %p502 = por %p500, %p501
      %p503 = scmp.ne.s32.totalorder %s495, %s498
      %p504 = scmp.eq.s32.totalorder %s37, 0
      %p505 = por %p503, %p504
      %p506 = scmp.ne.s32.totalorder %s495, %s498
      %p507 = scmp.eq.s32.totalorder %s42, 1
      %p508 = por %p506, %p507
      %p509 = scmp.ne.s32.totalorder %s498, %s499
      %p510 = scmp.eq.s32.totalorder %s42, 0
      %p511 = por %p509, %p510
      %p512 = scmp.ne.s32.totalorder %s498, %s499
      %p513 = scmp.eq.s32.totalorder %s43, 1
      %p514 = por %p512, %p513
      %p516 = scmp.ne.s32.totalorder %s499, %s515
      %p517 = scmp.eq.s32.totalorder %s43, 0
      %p518 = por %p516, %p517
      %s519 = ssub.s32 %s37, %s44
      %p520 = scmp.eq.s32.totalorder %s519, 0
      %s522 = sadd.s32 %s521, 1
      %s523 = scalar_select %p520, %s521, %s522
      %p526 = pneg %p520
      %p527 = scmp.eq.s32.totalorder %s37, 1
      %p528 = por %p526, %p527
      %p529 = scmp.ne.s32.totalorder %s521, %s524
      %p530 = scmp.eq.s32.totalorder %s37, 0
      %p531 = por %p529, %p530
      %p532 = scmp.ne.s32.totalorder %s521, %s524
      %p533 = scmp.eq.s32.totalorder %s42, 1
      %p534 = por %p532, %p533
      %p535 = scmp.ne.s32.totalorder %s524, %s525
      %p536 = scmp.eq.s32.totalorder %s42, 0
      %p537 = por %p535, %p536
      %p538 = scmp.ne.s32.totalorder %s524, %s525
      %p539 = scmp.eq.s32.totalorder %s43, 1
      %p540 = por %p538, %p539
      %p542 = scmp.ne.s32.totalorder %s525, %s541
      %p543 = scmp.eq.s32.totalorder %s43, 0
      %p544 = por %p542, %p543
      %s545 = ssub.s32 %s37, %s44
      %p546 = scmp.eq.s32.totalorder %s545, 0
      %s548 = sadd.s32 %s547, 1
      %s549 = scalar_select %p546, %s547, %s548
      %p552 = pneg %p546
      %p553 = scmp.eq.s32.totalorder %s37, 1
      %p554 = por %p552, %p553
      %p555 = scmp.ne.s32.totalorder %s547, %s550
      %p556 = scmp.eq.s32.totalorder %s37, 0
      %p557 = por %p555, %p556
      %p558 = scmp.ne.s32.totalorder %s547, %s550
      %p559 = scmp.eq.s32.totalorder %s42, 1
      %p560 = por %p558, %p559
      %p561 = scmp.ne.s32.totalorder %s550, %s551
      %p562 = scmp.eq.s32.totalorder %s42, 0
      %p563 = por %p561, %p562
      %p564 = scmp.ne.s32.totalorder %s550, %s551
      %p565 = scmp.eq.s32.totalorder %s43, 1
      %p566 = por %p564, %p565
      %p568 = scmp.ne.s32.totalorder %s551, %s567
      %p569 = scmp.eq.s32.totalorder %s43, 0
      %p570 = por %p568, %p569
      %s571 = ssub.s32 %s37, %s44
      %p572 = scmp.eq.s32.totalorder %s571, 0
      %s574 = sadd.s32 %s573, 1
      %s575 = scalar_select %p572, %s573, %s574
      %p578 = pneg %p572
      %p579 = scmp.eq.s32.totalorder %s37, 1
      %p580 = por %p578, %p579
      %p581 = scmp.ne.s32.totalorder %s573, %s576
      %p582 = scmp.eq.s32.totalorder %s37, 0
      %p583 = por %p581, %p582
      %p584 = scmp.ne.s32.totalorder %s573, %s576
      %p585 = scmp.eq.s32.totalorder %s42, 1
      %p586 = por %p584, %p585
      %p587 = scmp.ne.s32.totalorder %s576, %s577
      %p588 = scmp.eq.s32.totalorder %s42, 0
      %p589 = por %p587, %p588
      %p590 = scmp.ne.s32.totalorder %s576, %s577
      %p591 = scmp.eq.s32.totalorder %s43, 1
      %p592 = por %p590, %p591
      %p594 = scmp.ne.s32.totalorder %s577, %s593
      %p595 = scmp.eq.s32.totalorder %s43, 0
      %p596 = por %p594, %p595
      %s597 = ssub.s32 %s37, %s44
      %p598 = scmp.eq.s32.totalorder %s597, 0
      %s600 = sadd.s32 %s599, 1
      %s601 = scalar_select %p598, %s599, %s600
      %p604 = pneg %p598
      %p605 = scmp.eq.s32.totalorder %s37, 1
      %p606 = por %p604, %p605
      %p607 = scmp.ne.s32.totalorder %s599, %s602
      %p608 = scmp.eq.s32.totalorder %s37, 0
      %p609 = por %p607, %p608
      %p610 = scmp.ne.s32.totalorder %s599, %s602
      %p611 = scmp.eq.s32.totalorder %s42, 1
      %p612 = por %p610, %p611
      %p613 = scmp.ne.s32.totalorder %s602, %s603
      %p614 = scmp.eq.s32.totalorder %s42, 0
      %p615 = por %p613, %p614
      %p616 = scmp.ne.s32.totalorder %s602, %s603
      %p617 = scmp.eq.s32.totalorder %s43, 1
      %p618 = por %p616, %p617
      %p620 = scmp.ne.s32.totalorder %s603, %s619
      %p621 = scmp.eq.s32.totalorder %s43, 0
      %p622 = por %p620, %p621
      %s623 = ssub.s32 %s37, %s44
      %p624 = scmp.eq.s32.totalorder %s623, 0
      %s626 = sadd.s32 %s625, 1
      %s627 = scalar_select %p624, %s625, %s626
      %p630 = pneg %p624
      %p631 = scmp.eq.s32.totalorder %s37, 1
      %p632 = por %p630, %p631
      %p633 = scmp.ne.s32.totalorder %s625, %s628
      %p634 = scmp.eq.s32.totalorder %s37, 0
      %p635 = por %p633, %p634
      %p636 = scmp.ne.s32.totalorder %s625, %s628
      %p637 = scmp.eq.s32.totalorder %s42, 1
      %p638 = por %p636, %p637
      %p639 = scmp.ne.s32.totalorder %s628, %s629
      %p640 = scmp.eq.s32.totalorder %s42, 0
      %p641 = por %p639, %p640
      %p642 = scmp.ne.s32.totalorder %s628, %s629
      %p643 = scmp.eq.s32.totalorder %s43, 1
      %p644 = por %p642, %p643
      %p646 = scmp.ne.s32.totalorder %s629, %s645
      %p647 = scmp.eq.s32.totalorder %s43, 0
      %p648 = por %p646, %p647
      %s650 = sadd.s32 %s649, 1
      %p653 = scmp.eq.s32.totalorder %s37, 1
      %p654 = scmp.ne.s32.totalorder %s649, %s651
      %p655 = scmp.eq.s32.totalorder %s37, 0
      %p656 = por %p654, %p655
      %p657 = scmp.ne.s32.totalorder %s649, %s651
      %p658 = scmp.eq.s32.totalorder %s42, 1
      %p659 = por %p657, %p658
      %p660 = scmp.ne.s32.totalorder %s651, %s652
      %p661 = scmp.eq.s32.totalorder %s42, 0
      %p662 = por %p660, %p661
      %p663 = scmp.ne.s32.totalorder %s651, %s652
      %p664 = scmp.eq.s32.totalorder %s43, 1
      %p665 = por %p663, %p664
      %p667 = scmp.ne.s32.totalorder %s652, %s666
      %p668 = scmp.eq.s32.totalorder %s43, 0
      %p669 = por %p667, %p668
      %s671 = sadd.s32 %s670, 1
      %p674 = scmp.eq.s32.totalorder %s37, 1
      %p675 = scmp.ne.s32.totalorder %s670, %s672
      %p676 = scmp.eq.s32.totalorder %s37, 0
      %p677 = por %p675, %p676
      %p678 = scmp.ne.s32.totalorder %s670, %s672
      %p679 = scmp.eq.s32.totalorder %s42, 1
      %p680 = por %p678, %p679
      %p681 = scmp.ne.s32.totalorder %s672, %s673
      %p682 = scmp.eq.s32.totalorder %s42, 0
      %p683 = por %p681, %p682
      %p684 = scmp.ne.s32.totalorder %s672, %s673
      %p685 = scmp.eq.s32.totalorder %s43, 1
      %p686 = por %p684, %p685
      %p688 = scmp.ne.s32.totalorder %s673, %s687
      %p689 = scmp.eq.s32.totalorder %s43, 0
      %p690 = por %p688, %p689
      %p691 = scmp.le.s32.totalorder 1, %s37
      %p692 = scmp.lt.s32.totalorder %s37, 3
      %p693 = pnand %p691, %p692
      %p694 = pneg %p693
      // Predicated region
      $region9: #{tpu_custom_call.1} parent=5 // pred_check
        _
      $region10: #{tpu_custom_call.1} parent=5 // pred_check_branch
        %696 = sbr.rel (%p693) target = $region12
      $region11: #{tpu_custom_call.1} parent=5 // pred_region
        %s697 = ssub.s32 %s37, 1
        // Predicated region
        $region13: #{tpu_custom_call.1} parent=11 // pred_check
          %p698 = pneg %p58
        $region14: #{tpu_custom_call.1} parent=11 // pred_check_branch
          %700 = sbr.rel (%p698) target = $region16
        $region15: #{tpu_custom_call.1} parent=11 // pred_region
          %s702 = ssub.s32 256, 256
          %703 = vsyncadd [#allocation4], %s702
          %s704 = sshll.u32 [#allocation3], 4
          %s705 = int_to_ptr.vmem [resolvable:$true] %s704
          %710 = dma.hbm_to_vmem [thread:$0]  %s0, 256, %s705, [#allocation4], 128, 128, 8
        $region16: #{tpu_custom_call.1} parent=11 // pred_fallthru
          _
        // Predicated region
        $region17: #{tpu_custom_call.1} parent=11 // pred_check
          %p711 = pneg %p79
        $region18: #{tpu_custom_call.1} parent=11 // pred_check_branch
          %713 = sbr.rel (%p711) target = $region20
        $region19: #{tpu_custom_call.1} parent=11 // pred_region
          %s715 = ssub.s32 192, 192
          %716 = vsyncadd [#allocation7], %s715
          %s717 = sshll.u32 [#allocation6], 4
          %s718 = int_to_ptr.vmem [resolvable:$true] %s717
          %723 = dma.hbm_to_vmem [thread:$0]  %s1, 192, %s718, [#allocation7], 64, 64, 4
        $region20: #{tpu_custom_call.1} parent=11 // pred_fallthru
          _
        // Predicated region
        $region21: #{tpu_custom_call.1} parent=11 // pred_check
          %p724 = pneg %p100
        $region22: #{tpu_custom_call.1} parent=11 // pred_check_branch
          %726 = sbr.rel (%p724) target = $region24
        $region23: #{tpu_custom_call.1} parent=11 // pred_region
          %s728 = ssub.s32 256, 256
          %729 = vsyncadd [#allocation7], %s728
          %s730 = sshll.u32 [#allocation8], 4
          %s731 = int_to_ptr.vmem [resolvable:$true] %s730
          %736 = dma.hbm_to_vmem [thread:$0]  %s2, 256, %s731, [#allocation7], 128, 128, 8
        $region24: #{tpu_custom_call.1} parent=11 // pred_fallthru
          _
        // Predicated region
        $region25: #{tpu_custom_call.1} parent=11 // pred_check
          %p737 = pneg %p121
        $region26: #{tpu_custom_call.1} parent=11 // pred_check_branch
          %739 = sbr.rel (%p737) target = $region28
        $region27: #{tpu_custom_call.1} parent=11 // pred_region
          %s741 = ssub.s32 256, 256
          %742 = vsyncadd [#allocation10], %s741
          %s743 = sshll.u32 [#allocation9], 4
          %s744 = int_to_ptr.vmem [resolvable:$true] %s743
          %749 = dma.hbm_to_vmem [thread:$0]  %s3, 256, %s744, [#allocation10], 128, 128, 8
        $region28: #{tpu_custom_call.1} parent=11 // pred_fallthru
          _
      $region12: #{tpu_custom_call.1} parent=5 // pred_fallthru
        _
      %p750 = scmp.lt.s32.totalorder %s37, 2
      // Predicated region
      $region29: #{tpu_custom_call.1} parent=5 // pred_check
        %p751 = pneg %p750
      $region30: #{tpu_custom_call.1} parent=5 // pred_check_branch
        %753 = sbr.rel (%p751) target = $region32
      $region31: #{tpu_custom_call.1} parent=5 // pred_region
        // Predicated region
        $region33: #{tpu_custom_call.1} parent=31 // pred_check
          %p754 = pneg %p141
        $region34: #{tpu_custom_call.1} parent=31 // pred_check_branch
          %756 = sbr.rel (%p754) target = $region36
        $region35: #{tpu_custom_call.1} parent=31 // pred_region
          %p757 = scmp.lt.s32.totalorder %s37, 1
          %s758 = scalar_select %p757, %s37, 1
          %s759 = smul.addr %s758, 4
          %s760 = smul.addr %s759, 4
          %s761 = scalar_lea.vmem %s4, %s760
        $region36: #{tpu_custom_call.1} parent=31 // pred_fallthru
          _
        // Predicated region
        $region37: #{tpu_custom_call.1} parent=31 // pred_check
          %p762 = pneg %p167
        $region38: #{tpu_custom_call.1} parent=31 // pred_check_branch
          %764 = sbr.rel (%p762) target = $region40
        $region39: #{tpu_custom_call.1} parent=31 // pred_region
          %s765 = sand.u32 %s37, 1
          %s766 = scalar_lea.sflag [#allocation4], %s765
          %s767 = sand.u32 %s157, 1
          %s768 = scalar_lea.vmem [#allocation11], %s767
          %s770 = ssub.s32 16, 16
          %771 = vsyncadd %s766, %s770
          %s772 = smul.addr %s37, 16
          %s773 = scalar_lea.hbm %s5, %s772
          %s775 = sshll.u32 %s768, 4
          %s776 = int_to_ptr.vmem [resolvable:$true] %s775
          %778 = dma.hbm_to_vmem [thread:$0]  %s773, 16, %s776, %s766
        $region40: #{tpu_custom_call.1} parent=31 // pred_fallthru
          _
        // Predicated region
        $region41: #{tpu_custom_call.1} parent=31 // pred_check
          %p779 = pneg %p193
        $region42: #{tpu_custom_call.1} parent=31 // pred_check_branch
          %781 = sbr.rel (%p779) target = $region44
        $region43: #{tpu_custom_call.1} parent=31 // pred_region
          %p782 = scmp.lt.s32.totalorder %s37, 1
          %s783 = scalar_select %p782, %s37, 1
          %s784 = smul.addr %s783, 4
          %s785 = smul.addr %s784, 4
          %s786 = scalar_lea.vmem %s6, %s785
        $region44: #{tpu_custom_call.1} parent=31 // pred_fallthru
          _
        // Predicated region
        $region45: #{tpu_custom_call.1} parent=31 // pred_check
          %p787 = pneg %p219
        $region46: #{tpu_custom_call.1} parent=31 // pred_check_branch
          %789 = sbr.rel (%p787) target = $region48
        $region47: #{tpu_custom_call.1} parent=31 // pred_region
          %s790 = sand.u32 %s37, 1
          %s791 = scalar_lea.sflag [#allocation4], %s790
          %s792 = sand.u32 %s209, 1
          %s793 = scalar_lea.vmem [#allocation12], %s792
          %s795 = ssub.s32 16, 16
          %796 = vsyncadd %s791, %s795
          %s797 = smul.addr %s37, 16
          %s798 = scalar_lea.hbm %s7, %s797
          %s800 = sshll.u32 %s793, 4
          %s801 = int_to_ptr.vmem [resolvable:$true] %s800
          %803 = dma.hbm_to_vmem [thread:$0]  %s798, 16, %s801, %s791
        $region48: #{tpu_custom_call.1} parent=31 // pred_fallthru
          _
        // Predicated region
        $region49: #{tpu_custom_call.1} parent=31 // pred_check
          %p804 = pneg %p245
        $region50: #{tpu_custom_call.1} parent=31 // pred_check_branch
          %806 = sbr.rel (%p804) target = $region52
        $region51: #{tpu_custom_call.1} parent=31 // pred_region
          %p807 = scmp.lt.s32.totalorder %s37, 1
          %s808 = scalar_select %p807, %s37, 1
          %s809 = smul.addr %s808, 4
          %s810 = smul.addr %s809, 4
          %s811 = scalar_lea.vmem %s8, %s810
        $region52: #{tpu_custom_call.1} parent=31 // pred_fallthru
          _
        // Predicated region
        $region53: #{tpu_custom_call.1} parent=31 // pred_check
          %p812 = pneg %p271
        $region54: #{tpu_custom_call.1} parent=31 // pred_check_branch
          %814 = sbr.rel (%p812) target = $region56
        $region55: #{tpu_custom_call.1} parent=31 // pred_region
          %s815 = sand.u32 %s37, 1
          %s816 = scalar_lea.sflag [#allocation4], %s815
          %s817 = sand.u32 %s261, 1
          %s818 = scalar_lea.vmem [#allocation13], %s817
          %s820 = ssub.s32 16, 16
          %821 = vsyncadd %s816, %s820
          %s822 = smul.addr %s37, 16
          %s823 = scalar_lea.hbm %s9, %s822
          %s825 = sshll.u32 %s818, 4
          %s826 = int_to_ptr.vmem [resolvable:$true] %s825
          %828 = dma.hbm_to_vmem [thread:$0]  %s823, 16, %s826, %s816
        $region56: #{tpu_custom_call.1} parent=31 // pred_fallthru
          _
        // Predicated region
        $region57: #{tpu_custom_call.1} parent=31 // pred_check
          %p829 = pneg %p297
        $region58: #{tpu_custom_call.1} parent=31 // pred_check_branch
          %831 = sbr.rel (%p829) target = $region60
        $region59: #{tpu_custom_call.1} parent=31 // pred_region
          %p832 = scmp.lt.s32.totalorder %s37, 1
          %s833 = scalar_select %p832, %s37, 1
          %s834 = smul.addr %s833, 4
          %s835 = smul.addr %s834, 4
          %s836 = scalar_lea.vmem %s10, %s835
        $region60: #{tpu_custom_call.1} parent=31 // pred_fallthru
          _
        // Predicated region
        $region61: #{tpu_custom_call.1} parent=31 // pred_check
          %p837 = pneg %p323
        $region62: #{tpu_custom_call.1} parent=31 // pred_check_branch
          %839 = sbr.rel (%p837) target = $region64
        $region63: #{tpu_custom_call.1} parent=31 // pred_region
          %s840 = sand.u32 %s37, 1
          %s841 = scalar_lea.sflag [#allocation4], %s840
          %s842 = sand.u32 %s313, 1
          %s843 = scalar_lea.vmem [#allocation14], %s842
          %s845 = ssub.s32 16, 16
          %846 = vsyncadd %s841, %s845
          %s847 = smul.addr %s37, 16
          %s848 = scalar_lea.hbm %s11, %s847
          %s850 = sshll.u32 %s843, 4
          %s851 = int_to_ptr.vmem [resolvable:$true] %s850
          %853 = dma.hbm_to_vmem [thread:$0]  %s848, 16, %s851, %s841
        $region64: #{tpu_custom_call.1} parent=31 // pred_fallthru
          _
        // Predicated region
        $region65: #{tpu_custom_call.1} parent=31 // pred_check
          %p854 = pneg %p349
        $region66: #{tpu_custom_call.1} parent=31 // pred_check_branch
          %856 = sbr.rel (%p854) target = $region68
        $region67: #{tpu_custom_call.1} parent=31 // pred_region
          %s857 = sand.u32 %s37, 1
          %s858 = scalar_lea.sflag [#allocation4], %s857
          %s859 = sand.u32 %s339, 1
          %s860 = smul.addr %s859, 16
          %s861 = scalar_lea.vmem [#allocation15], %s860
          %s863 = ssub.s32 256, 256
          %864 = vsyncadd %s858, %s863
          %s865 = smul.addr %s37, 4
          %s866 = smul.addr %s865, 64
          %s867 = scalar_lea.hbm %s12, %s866
          %s868 = sshll.u32 %s861, 4
          %s869 = int_to_ptr.vmem [resolvable:$true] %s868
          %874 = dma.hbm_to_vmem [thread:$0]  %s867, 256, %s869, %s858, 64, 64, 4
        $region68: #{tpu_custom_call.1} parent=31 // pred_fallthru
          _
        // Predicated region
        $region69: #{tpu_custom_call.1} parent=31 // pred_check
          %p875 = pneg %p375
        $region70: #{tpu_custom_call.1} parent=31 // pred_check_branch
          %877 = sbr.rel (%p875) target = $region72
        $region71: #{tpu_custom_call.1} parent=31 // pred_region
          %s878 = sand.u32 %s37, 1
          %s879 = scalar_lea.sflag [#allocation4], %s878
          %s880 = sand.u32 %s365, 1
          %s881 = scalar_lea.vmem [#allocation16], %s880
          %s883 = ssub.s32 16, 16
          %884 = vsyncadd %s879, %s883
          %s885 = smul.addr %s37, 16
          %s886 = scalar_lea.hbm %s13, %s885
          %s888 = sshll.u32 %s881, 4
          %s889 = int_to_ptr.vmem [resolvable:$true] %s888
          %891 = dma.hbm_to_vmem [thread:$0]  %s886, 16, %s889, %s879
        $region72: #{tpu_custom_call.1} parent=31 // pred_fallthru
          _
        // Predicated region
        $region73: #{tpu_custom_call.1} parent=31 // pred_check
          %p892 = pneg %p401
        $region74: #{tpu_custom_call.1} parent=31 // pred_check_branch
          %894 = sbr.rel (%p892) target = $region76
        $region75: #{tpu_custom_call.1} parent=31 // pred_region
          %s895 = sand.u32 %s37, 1
          %s896 = scalar_lea.sflag [#allocation4], %s895
          %s897 = sand.u32 %s391, 1
          %s898 = scalar_lea.vmem [#allocation17], %s897
          %s900 = ssub.s32 16, 16
          %901 = vsyncadd %s896, %s900
          %s902 = smul.addr %s37, 16
          %s903 = scalar_lea.hbm %s14, %s902
          %s905 = sshll.u32 %s898, 4
          %s906 = int_to_ptr.vmem [resolvable:$true] %s905
          %908 = dma.hbm_to_vmem [thread:$0]  %s903, 16, %s906, %s896
        $region76: #{tpu_custom_call.1} parent=31 // pred_fallthru
          _
        // Predicated region
        $region77: #{tpu_custom_call.1} parent=31 // pred_check
          %p909 = pneg %p427
        $region78: #{tpu_custom_call.1} parent=31 // pred_check_branch
          %911 = sbr.rel (%p909) target = $region80
        $region79: #{tpu_custom_call.1} parent=31 // pred_region
          %s912 = sand.u32 %s37, 1
          %s913 = scalar_lea.sflag [#allocation4], %s912
          %s914 = sand.u32 %s417, 1
          %s915 = scalar_lea.vmem [#allocation18], %s914
          %s917 = ssub.s32 16, 16
          %918 = vsyncadd %s913, %s917
          %s919 = smul.addr %s37, 16
          %s920 = scalar_lea.hbm %s15, %s919
          %s922 = sshll.u32 %s915, 4
          %s923 = int_to_ptr.vmem [resolvable:$true] %s922
          %925 = dma.hbm_to_vmem [thread:$0]  %s920, 16, %s923, %s913
        $region80: #{tpu_custom_call.1} parent=31 // pred_fallthru
          _
        // Predicated region
        $region81: #{tpu_custom_call.1} parent=31 // pred_check
          %p926 = pneg %p453
        $region82: #{tpu_custom_call.1} parent=31 // pred_check_branch
          %928 = sbr.rel (%p926) target = $region84
        $region83: #{tpu_custom_call.1} parent=31 // pred_region
          %s929 = sand.u32 %s37, 1
          %s930 = scalar_lea.sflag [#allocation4], %s929
          %s931 = sand.u32 %s443, 1
          %s932 = scalar_lea.vmem [#allocation19], %s931
          %s934 = ssub.s32 16, 16
          %935 = vsyncadd %s930, %s934
          %s936 = smul.addr %s37, 16
          %s937 = scalar_lea.hbm %s16, %s936
          %s939 = sshll.u32 %s932, 4
          %s940 = int_to_ptr.vmem [resolvable:$true] %s939
          %942 = dma.hbm_to_vmem [thread:$0]  %s937, 16, %s940, %s930
        $region84: #{tpu_custom_call.1} parent=31 // pred_fallthru
          _
        // Predicated region
        $region85: #{tpu_custom_call.1} parent=31 // pred_check
          %p943 = pneg %p479
        $region86: #{tpu_custom_call.1} parent=31 // pred_check_branch
          %945 = sbr.rel (%p943) target = $region88
        $region87: #{tpu_custom_call.1} parent=31 // pred_region
          %s946 = sand.u32 %s37, 1
          %s947 = scalar_lea.sflag [#allocation4], %s946
          %s948 = sand.u32 %s469, 1
          %s949 = scalar_lea.vmem [#allocation20], %s948
          %s951 = ssub.s32 16, 16
          %952 = vsyncadd %s947, %s951
          %s953 = smul.addr %s37, 16
          %s954 = scalar_lea.hbm %s17, %s953
          %s956 = sshll.u32 %s949, 4
          %s957 = int_to_ptr.vmem [resolvable:$true] %s956
          %959 = dma.hbm_to_vmem [thread:$0]  %s954, 16, %s957, %s947
        $region88: #{tpu_custom_call.1} parent=31 // pred_fallthru
          _
        // Predicated region
        $region89: #{tpu_custom_call.1} parent=31 // pred_check
          %p960 = pneg %p505
        $region90: #{tpu_custom_call.1} parent=31 // pred_check_branch
          %962 = sbr.rel (%p960) target = $region92
        $region91: #{tpu_custom_call.1} parent=31 // pred_region
          %p963 = scmp.lt.s32.totalorder %s37, 1
          %s964 = scalar_select %p963, %s37, 1
          %s965 = scalar_lea.vmem %s18, %s964
        $region92: #{tpu_custom_call.1} parent=31 // pred_fallthru
          _
        // Predicated region
        $region93: #{tpu_custom_call.1} parent=31 // pred_check
          %p966 = pneg %p531
        $region94: #{tpu_custom_call.1} parent=31 // pred_check_branch
          %968 = sbr.rel (%p966) target = $region96
        $region95: #{tpu_custom_call.1} parent=31 // pred_region
          %p969 = scmp.lt.s32.totalorder %s37, 1
          %s970 = scalar_select %p969, %s37, 1
          %s971 = scalar_lea.vmem %s19, %s970
        $region96: #{tpu_custom_call.1} parent=31 // pred_fallthru
          _
        // Predicated region
        $region97: #{tpu_custom_call.1} parent=31 // pred_check
          %p972 = pneg %p557
        $region98: #{tpu_custom_call.1} parent=31 // pred_check_branch
          %974 = sbr.rel (%p972) target = $region100
        $region99: #{tpu_custom_call.1} parent=31 // pred_region
          %s975 = sand.u32 %s37, 1
          %s976 = scalar_lea.sflag [#allocation4], %s975
          %s977 = sand.u32 %s547, 1
          %s978 = smul.addr %s977, 16
          %s979 = scalar_lea.vmem [#allocation21], %s978
          %s981 = ssub.s32 256, 256
          %982 = vsyncadd %s976, %s981
          %s983 = smul.addr %s37, 4
          %s984 = smul.addr %s983, 64
          %s985 = scalar_lea.hbm %s20, %s984
          %s986 = sshll.u32 %s979, 4
          %s987 = int_to_ptr.vmem [resolvable:$true] %s986
          %992 = dma.hbm_to_vmem [thread:$0]  %s985, 256, %s987, %s976, 64, 64, 4
        $region100: #{tpu_custom_call.1} parent=31 // pred_fallthru
          _
        // Predicated region
        $region101: #{tpu_custom_call.1} parent=31 // pred_check
          %p993 = pneg %p583
        $region102: #{tpu_custom_call.1} parent=31 // pred_check_branch
          %995 = sbr.rel (%p993) target = $region104
        $region103: #{tpu_custom_call.1} parent=31 // pred_region
          %p996 = scmp.lt.s32.totalorder %s37, 1
          %s997 = scalar_select %p996, %s37, 1
          %s998 = scalar_lea.vmem %s21, %s997
        $region104: #{tpu_custom_call.1} parent=31 // pred_fallthru
          _
        // Predicated region
        $region105: #{tpu_custom_call.1} parent=31 // pred_check
          %p999 = pneg %p609
        $region106: #{tpu_custom_call.1} parent=31 // pred_check_branch
          %1001 = sbr.rel (%p999) target = $region108
        $region107: #{tpu_custom_call.1} parent=31 // pred_region
          %p1002 = scmp.lt.s32.totalorder %s37, 1
          %s1003 = scalar_select %p1002, %s37, 1
          %s1004 = smul.addr %s1003, 8
          %s1005 = smul.addr %s1004, 4
          %s1006 = scalar_lea.vmem %s22, %s1005
        $region108: #{tpu_custom_call.1} parent=31 // pred_fallthru
          _
        // Predicated region
        $region109: #{tpu_custom_call.1} parent=31 // pred_check
          %p1007 = pneg %p635
        $region110: #{tpu_custom_call.1} parent=31 // pred_check_branch
          %1009 = sbr.rel (%p1007) target = $region112
        $region111: #{tpu_custom_call.1} parent=31 // pred_region
          %p1010 = scmp.lt.s32.totalorder %s37, 1
          %s1011 = scalar_select %p1010, %s37, 1
          %s1012 = scalar_lea.vmem %s23, %s1011
        $region112: #{tpu_custom_call.1} parent=31 // pred_fallthru
          _
      $region32: #{tpu_custom_call.1} parent=5 // pred_fallthru
        _
      %p1013 = scmp.le.s32.totalorder 1, %s37
      %p1014 = scmp.lt.s32.totalorder %s37, 3
      %p1015 = pnand %p1013, %p1014
      %p1016 = pneg %p1015
      // Predicated region
      $region113: #{tpu_custom_call.1} parent=5 // pred_check
        _
      $region114: #{tpu_custom_call.1} parent=5 // pred_check_branch
        %1018 = sbr.rel (%p1015) target = $region116
      $region115: #{tpu_custom_call.1} parent=5 // pred_region
        %s1019 = ssub.s32 %s37, 1
        // Predicated region
        $region117: #{tpu_custom_call.1} parent=115 // pred_check
          %p1020 = pneg %p58
        $region118: #{tpu_custom_call.1} parent=115 // pred_check_branch
          %1022 = sbr.rel (%p1020) target = $region120
        $region119: #{tpu_custom_call.1} parent=115 // pred_region
          %1023 = dma.done [#allocation4], 256
        $region120: #{tpu_custom_call.1} parent=115 // pred_fallthru
          _
        // Predicated region
        $region121: #{tpu_custom_call.1} parent=115 // pred_check
          %p1024 = pneg %p79
        $region122: #{tpu_custom_call.1} parent=115 // pred_check_branch
          %1026 = sbr.rel (%p1024) target = $region124
        $region123: #{tpu_custom_call.1} parent=115 // pred_region
          %1027 = dma.done [#allocation7], 192
        $region124: #{tpu_custom_call.1} parent=115 // pred_fallthru
          _
        // Predicated region
        $region125: #{tpu_custom_call.1} parent=115 // pred_check
          %p1028 = pneg %p100
        $region126: #{tpu_custom_call.1} parent=115 // pred_check_branch
          %1030 = sbr.rel (%p1028) target = $region128
        $region127: #{tpu_custom_call.1} parent=115 // pred_region
          %1031 = dma.done [#allocation7], 256
        $region128: #{tpu_custom_call.1} parent=115 // pred_fallthru
          _
        // Predicated region
        $region129: #{tpu_custom_call.1} parent=115 // pred_check
          %p1032 = pneg %p121
        $region130: #{tpu_custom_call.1} parent=115 // pred_check_branch
          %1034 = sbr.rel (%p1032) target = $region132
        $region131: #{tpu_custom_call.1} parent=115 // pred_region
          %1035 = dma.done [#allocation10], 256
        $region132: #{tpu_custom_call.1} parent=115 // pred_fallthru
          _
        %s1036 = sand.u32 %s42, 1
        %s1037 = scalar_lea.sflag [#allocation4], %s1036
        %s1038 = sand.u32 %s160, 1
        %s1039 = scalar_lea.vmem [#allocation11], %s1038
        // Predicated region
        $region133: #{tpu_custom_call.1} parent=115 // pred_check
          %p1040 = pneg %p173
        $region134: #{tpu_custom_call.1} parent=115 // pred_check_branch
          %1042 = sbr.rel (%p1040) target = $region136
        $region135: #{tpu_custom_call.1} parent=115 // pred_region
          %1043 = dma.done %s1037, 16
        $region136: #{tpu_custom_call.1} parent=115 // pred_fallthru
          _
        %s1044 = sand.u32 %s42, 1
        %s1045 = scalar_lea.sflag [#allocation4], %s1044
        %s1046 = sand.u32 %s212, 1
        %s1047 = scalar_lea.vmem [#allocation12], %s1046
        // Predicated region
        $region137: #{tpu_custom_call.1} parent=115 // pred_check
          %p1048 = pneg %p225
        $region138: #{tpu_custom_call.1} parent=115 // pred_check_branch
          %1050 = sbr.rel (%p1048) target = $region140
        $region139: #{tpu_custom_call.1} parent=115 // pred_region
          %1051 = dma.done %s1045, 16
        $region140: #{tpu_custom_call.1} parent=115 // pred_fallthru
          _
        %s1052 = sand.u32 %s42, 1
        %s1053 = scalar_lea.sflag [#allocation4], %s1052
        %s1054 = sand.u32 %s264, 1
        %s1055 = scalar_lea.vmem [#allocation13], %s1054
        // Predicated region
        $region141: #{tpu_custom_call.1} parent=115 // pred_check
          %p1056 = pneg %p277
        $region142: #{tpu_custom_call.1} parent=115 // pred_check_branch
          %1058 = sbr.rel (%p1056) target = $region144
        $region143: #{tpu_custom_call.1} parent=115 // pred_region
          %1059 = dma.done %s1053, 16
        $region144: #{tpu_custom_call.1} parent=115 // pred_fallthru
          _
        %s1060 = sand.u32 %s42, 1
        %s1061 = scalar_lea.sflag [#allocation4], %s1060
        %s1062 = sand.u32 %s316, 1
        %s1063 = scalar_lea.vmem [#allocation14], %s1062
        // Predicated region
        $region145: #{tpu_custom_call.1} parent=115 // pred_check
          %p1064 = pneg %p329
        $region146: #{tpu_custom_call.1} parent=115 // pred_check_branch
          %1066 = sbr.rel (%p1064) target = $region148
        $region147: #{tpu_custom_call.1} parent=115 // pred_region
          %1067 = dma.done %s1061, 16
        $region148: #{tpu_custom_call.1} parent=115 // pred_fallthru
          _
        %s1068 = sand.u32 %s42, 1
        %s1069 = scalar_lea.sflag [#allocation4], %s1068
        %s1070 = sand.u32 %s342, 1
        %s1071 = smul.addr %s1070, 16
        %s1072 = scalar_lea.vmem [#allocation15], %s1071
        // Predicated region
        $region149: #{tpu_custom_call.1} parent=115 // pred_check
          %p1073 = pneg %p355
        $region150: #{tpu_custom_call.1} parent=115 // pred_check_branch
          %1075 = sbr.rel (%p1073) target = $region152
        $region151: #{tpu_custom_call.1} parent=115 // pred_region
          %1076 = dma.done %s1069, 256
        $region152: #{tpu_custom_call.1} parent=115 // pred_fallthru
          _
        %s1077 = sand.u32 %s42, 1
        %s1078 = scalar_lea.sflag [#allocation4], %s1077
        %s1079 = sand.u32 %s368, 1
        %s1080 = scalar_lea.vmem [#allocation16], %s1079
        // Predicated region
        $region153: #{tpu_custom_call.1} parent=115 // pred_check
          %p1081 = pneg %p381
        $region154: #{tpu_custom_call.1} parent=115 // pred_check_branch
          %1083 = sbr.rel (%p1081) target = $region156
        $region155: #{tpu_custom_call.1} parent=115 // pred_region
          %1084 = dma.done %s1078, 16
        $region156: #{tpu_custom_call.1} parent=115 // pred_fallthru
          _
        %s1085 = sand.u32 %s42, 1
        %s1086 = scalar_lea.sflag [#allocation4], %s1085
        %s1087 = sand.u32 %s394, 1
        %s1088 = scalar_lea.vmem [#allocation17], %s1087
        // Predicated region
        $region157: #{tpu_custom_call.1} parent=115 // pred_check
          %p1089 = pneg %p407
        $region158: #{tpu_custom_call.1} parent=115 // pred_check_branch
          %1091 = sbr.rel (%p1089) target = $region160
        $region159: #{tpu_custom_call.1} parent=115 // pred_region
          %1092 = dma.done %s1086, 16
        $region160: #{tpu_custom_call.1} parent=115 // pred_fallthru
          _
        %s1093 = sand.u32 %s42, 1
        %s1094 = scalar_lea.sflag [#allocation4], %s1093
        %s1095 = sand.u32 %s420, 1
        %s1096 = scalar_lea.vmem [#allocation18], %s1095
        // Predicated region
        $region161: #{tpu_custom_call.1} parent=115 // pred_check
          %p1097 = pneg %p433
        $region162: #{tpu_custom_call.1} parent=115 // pred_check_branch
          %1099 = sbr.rel (%p1097) target = $region164
        $region163: #{tpu_custom_call.1} parent=115 // pred_region
          %1100 = dma.done %s1094, 16
        $region164: #{tpu_custom_call.1} parent=115 // pred_fallthru
          _
        %s1101 = sand.u32 %s42, 1
        %s1102 = scalar_lea.sflag [#allocation4], %s1101
        %s1103 = sand.u32 %s446, 1
        %s1104 = scalar_lea.vmem [#allocation19], %s1103
        // Predicated region
        $region165: #{tpu_custom_call.1} parent=115 // pred_check
          %p1105 = pneg %p459
        $region166: #{tpu_custom_call.1} parent=115 // pred_check_branch
          %1107 = sbr.rel (%p1105) target = $region168
        $region167: #{tpu_custom_call.1} parent=115 // pred_region
          %1108 = dma.done %s1102, 16
        $region168: #{tpu_custom_call.1} parent=115 // pred_fallthru
          _
        %s1109 = sand.u32 %s42, 1
        %s1110 = scalar_lea.sflag [#allocation4], %s1109
        %s1111 = sand.u32 %s472, 1
        %s1112 = scalar_lea.vmem [#allocation20], %s1111
        // Predicated region
        $region169: #{tpu_custom_call.1} parent=115 // pred_check
          %p1113 = pneg %p485
        $region170: #{tpu_custom_call.1} parent=115 // pred_check_branch
          %1115 = sbr.rel (%p1113) target = $region172
        $region171: #{tpu_custom_call.1} parent=115 // pred_region
          %1116 = dma.done %s1110, 16
        $region172: #{tpu_custom_call.1} parent=115 // pred_fallthru
          _
        %s1117 = sand.u32 %s42, 1
        %s1118 = scalar_lea.sflag [#allocation4], %s1117
        %s1119 = sand.u32 %s550, 1
        %s1120 = smul.addr %s1119, 16
        %s1121 = scalar_lea.vmem [#allocation21], %s1120
        // Predicated region
        $region173: #{tpu_custom_call.1} parent=115 // pred_check
          %p1122 = pneg %p563
        $region174: #{tpu_custom_call.1} parent=115 // pred_check_branch
          %1124 = sbr.rel (%p1122) target = $region176
        $region175: #{tpu_custom_call.1} parent=115 // pred_region
          %1125 = dma.done %s1118, 256
        $region176: #{tpu_custom_call.1} parent=115 // pred_fallthru
          _
        %p1126 = pneg %p58
        %p1127 = pneg %p55
        %p1128 = pneg %p79
        %p1129 = pneg %p76
        %p1130 = pneg %p100
        %p1131 = pneg %p97
        %p1132 = pneg %p121
        %p1133 = pneg %p118
        %p1134 = scmp.lt.s32.totalorder %s42, 1
        %s1135 = scalar_select %p1134, %s42, 1
        %s1136 = smul.addr %s1135, 4
        %s1137 = smul.addr %s1136, 4
        %s1138 = scalar_lea.vmem %s4, %s1137
        %p1139 = pneg %p147
        %p1140 = pneg %p144
        %s1141 = sand.u32 %s42, 1
        %s1142 = scalar_lea.sflag [#allocation4], %s1141
        %s1143 = sand.u32 %s160, 1
        %s1144 = scalar_lea.vmem [#allocation11], %s1143
        %p1145 = pneg %p173
        %p1146 = pneg %p170
        %p1147 = scmp.lt.s32.totalorder %s42, 1
        %s1148 = scalar_select %p1147, %s42, 1
        %s1149 = smul.addr %s1148, 4
        %s1150 = smul.addr %s1149, 4
        %s1151 = scalar_lea.vmem %s6, %s1150
        %p1152 = pneg %p199
        %p1153 = pneg %p196
        %s1154 = sand.u32 %s42, 1
        %s1155 = scalar_lea.sflag [#allocation4], %s1154
        %s1156 = sand.u32 %s212, 1
        %s1157 = scalar_lea.vmem [#allocation12], %s1156
        %p1158 = pneg %p225
        %p1159 = pneg %p222
        %p1160 = scmp.lt.s32.totalorder %s42, 1
        %s1161 = scalar_select %p1160, %s42, 1
        %s1162 = smul.addr %s1161, 4
        %s1163 = smul.addr %s1162, 4
        %s1164 = scalar_lea.vmem %s8, %s1163
        %p1165 = pneg %p251
        %p1166 = pneg %p248
        %s1167 = sand.u32 %s42, 1
        %s1168 = scalar_lea.sflag [#allocation4], %s1167
        %s1169 = sand.u32 %s264, 1
        %s1170 = scalar_lea.vmem [#allocation13], %s1169
        %p1171 = pneg %p277
        %p1172 = pneg %p274
        %p1173 = scmp.lt.s32.totalorder %s42, 1
        %s1174 = scalar_select %p1173, %s42, 1
        %s1175 = smul.addr %s1174, 4
        %s1176 = smul.addr %s1175, 4
        %s1177 = scalar_lea.vmem %s10, %s1176
        %p1178 = pneg %p303
        %p1179 = pneg %p300
        %s1180 = sand.u32 %s42, 1
        %s1181 = scalar_lea.sflag [#allocation4], %s1180
        %s1182 = sand.u32 %s316, 1
        %s1183 = scalar_lea.vmem [#allocation14], %s1182
        %p1184 = pneg %p329
        %p1185 = pneg %p326
        %s1186 = sand.u32 %s42, 1
        %s1187 = scalar_lea.sflag [#allocation4], %s1186
        %s1188 = sand.u32 %s342, 1
        %s1189 = smul.addr %s1188, 16
        %s1190 = scalar_lea.vmem [#allocation15], %s1189
        %p1191 = pneg %p355
        %p1192 = pneg %p352
        %s1193 = sand.u32 %s42, 1
        %s1194 = scalar_lea.sflag [#allocation4], %s1193
        %s1195 = sand.u32 %s368, 1
        %s1196 = scalar_lea.vmem [#allocation16], %s1195
        %p1197 = pneg %p381
        %p1198 = pneg %p378
        %s1199 = sand.u32 %s42, 1
        %s1200 = scalar_lea.sflag [#allocation4], %s1199
        %s1201 = sand.u32 %s394, 1
        %s1202 = scalar_lea.vmem [#allocation17], %s1201
        %p1203 = pneg %p407
        %p1204 = pneg %p404
        %s1205 = sand.u32 %s42, 1
        %s1206 = scalar_lea.sflag [#allocation4], %s1205
        %s1207 = sand.u32 %s420, 1
        %s1208 = scalar_lea.vmem [#allocation18], %s1207
        %p1209 = pneg %p433
        %p1210 = pneg %p430
        %s1211 = sand.u32 %s42, 1
        %s1212 = scalar_lea.sflag [#allocation4], %s1211
        %s1213 = sand.u32 %s446, 1
        %s1214 = scalar_lea.vmem [#allocation19], %s1213
        %p1215 = pneg %p459
        %p1216 = pneg %p456
        %s1217 = sand.u32 %s42, 1
        %s1218 = scalar_lea.sflag [#allocation4], %s1217
        %s1219 = sand.u32 %s472, 1
        %s1220 = scalar_lea.vmem [#allocation20], %s1219
        %p1221 = pneg %p485
        %p1222 = pneg %p482
        %p1223 = scmp.lt.s32.totalorder %s42, 1
        %s1224 = scalar_select %p1223, %s42, 1
        %s1225 = scalar_lea.vmem %s18, %s1224
        %p1226 = pneg %p511
        %p1227 = pneg %p508
        %p1228 = scmp.lt.s32.totalorder %s42, 1
        %s1229 = scalar_select %p1228, %s42, 1
        %s1230 = scalar_lea.vmem %s19, %s1229
        %p1231 = pneg %p537
        %p1232 = pneg %p534
        %s1233 = sand.u32 %s42, 1
        %s1234 = scalar_lea.sflag [#allocation4], %s1233
        %s1235 = sand.u32 %s550, 1
        %s1236 = smul.addr %s1235, 16
        %s1237 = scalar_lea.vmem [#allocation21], %s1236
        %p1238 = pneg %p563
        %p1239 = pneg %p560
        %p1240 = scmp.lt.s32.totalorder %s42, 1
        %s1241 = scalar_select %p1240, %s42, 1
        %s1242 = scalar_lea.vmem %s21, %s1241
        %p1243 = pneg %p589
        %p1244 = pneg %p586
        %p1245 = scmp.lt.s32.totalorder %s42, 1
        %s1246 = scalar_select %p1245, %s42, 1
        %s1247 = smul.addr %s1246, 8
        %s1248 = smul.addr %s1247, 4
        %s1249 = scalar_lea.vmem %s22, %s1248
        %p1250 = pneg %p615
        %p1251 = pneg %p612
        %p1252 = scmp.lt.s32.totalorder %s42, 1
        %s1253 = scalar_select %p1252, %s42, 1
        %s1254 = scalar_lea.vmem %s23, %s1253
        %p1255 = pneg %p641
        %p1256 = pneg %p638
        %p1257 = pneg %p662
        %p1258 = pneg %p659
        %p1259 = pneg %p683
        %p1260 = pneg %p680
        %p1261 = scmp.lt.s32.totalorder %s42, 1
        %s1262 = scalar_select %p1261, %s42, 1
        %s1263 = smul.addr %s1262, 4
        %s1264 = smul.addr %s1263, 4
        %s1265 = scalar_lea.vmem %s4, %s1264
        %p1266 = scmp.lt.s32.totalorder %s42, 1
        %s1267 = scalar_select %p1266, %s42, 1
        %s1268 = smul.addr %s1267, 4
        %s1269 = smul.addr %s1268, 4
        %s1270 = scalar_lea.vmem %s6, %s1269
        %p1271 = scmp.lt.s32.totalorder %s42, 1
        %s1272 = scalar_select %p1271, %s42, 1
        %s1273 = smul.addr %s1272, 4
        %s1274 = smul.addr %s1273, 4
        %s1275 = scalar_lea.vmem %s8, %s1274
        %p1276 = scmp.lt.s32.totalorder %s42, 1
        %s1277 = scalar_select %p1276, %s42, 1
        %s1278 = smul.addr %s1277, 4
        %s1279 = smul.addr %s1278, 4
        %s1280 = scalar_lea.vmem %s10, %s1279
        %p1281 = scmp.lt.s32.totalorder %s42, 1
        %s1282 = scalar_select %p1281, %s42, 1
        %s1283 = scalar_lea.vmem %s18, %s1282
        %p1284 = scmp.lt.s32.totalorder %s42, 1
        %s1285 = scalar_select %p1284, %s42, 1
        %s1286 = scalar_lea.vmem %s19, %s1285
        %p1287 = scmp.lt.s32.totalorder %s42, 1
        %s1288 = scalar_select %p1287, %s42, 1
        %s1289 = scalar_lea.vmem %s21, %s1288
        %p1290 = scmp.lt.s32.totalorder %s42, 1
        %s1291 = scalar_select %p1290, %s42, 1
        %s1292 = smul.addr %s1291, 8
        %s1293 = smul.addr %s1292, 4
        %s1294 = scalar_lea.vmem %s22, %s1293
        %p1295 = scmp.lt.s32.totalorder %s42, 1
        %s1296 = scalar_select %p1295, %s42, 1
        %s1297 = scalar_lea.vmem %s23, %s1296
        %p1299 = scmp.eq.s32.totalorder %s42, 1
        %p1300 = scmp.eq.s32.totalorder %s42, 0
        // Predicated region
        $region177: #{tpu_custom_call.1} parent=115 // pred_check
          %p1301 = pneg %p1300
        $region178: #{tpu_custom_call.1} parent=115 // pred_check_branch
          %1303 = sbr.rel (%p1301) target = $region180
        $region179: #{tpu_custom_call.1} parent=115 // pred_region
          %v1304 = vld [vmem:[#allocation3] sm:$0xff]
          %v1305 = vld [vmem:[#allocation3 + $0x8] sm:$0xff]
          %vm1306 = vcmask 261120
          %1307 = vst.msk [vmem:[#allocation22] sm:$0xff] %vm1306, %v1304
          %1308 = vst.msk [vmem:[#allocation22 + $0x8] sm:$0xff] %vm1306, %v1305
        $region180: #{tpu_custom_call.1} parent=115 // pred_fallthru
          _
        %v1309 = vld [vmem:[#allocation22] sm:$0xff]
        %v1310 = vld [vmem:[#allocation22 + $0x8] sm:$0xff]
        %v1311 = vld [vmem:[#allocation6] sm:$0xf]
        %v1312 = vld [vmem:[#allocation6 + $0x4] sm:$0xf]
        %v1313 = vld [vmem:[#allocation6 + $0x8] sm:$0x3]
        %v1314 = vpack.c.bf16 %v1310, %v1309
        %v1315 = vld [vmem:[%s1265] sm:$0xf]
        %v1316 = vld [vmem:[%s1265 + $0x4] sm:$0xf]
        %v1317 = vld [vmem:[%s1265 + $0x8] sm:$0xf]
        %v1318 = vld [vmem:[%s1265 + $0xc] sm:$0xf]
        %v1319 = vld [vmem:[%s1039] sm:$0x1]
        %v1321 = vlaneseq
        %v1322 = vshrl.u32 %v1321, 7
        %v1323 = vsub.s32 0, %v1322
        %v1324 = vrot.slane %v1319, %v1323
        %v1330 = vunpack.c.l.b16 %v1315
        %v1331 = vunpack.c.l.b16 %v1316
        %v1332 = vunpack.c.l.b16 %v1317
        %v1333 = vunpack.c.l.b16 %v1318
        %v1334 = vpack.c.b16 %v1331, %v1330
        %v1335 = vpack.c.b16 %v1333, %v1332
        %vm1338 = vcmask 261120
        %v1340 = vsel %vm1338, %v1314, 0
        %1342 = vmatprep.subr.bf16.mxu0 0
        %1343 = vmatpush1.bf16.msra.mxu0 %v1334
        %1344 = vmatprep.subr.bf16.mxu0 0
        %1345 = vmatpush1.bf16.msra.mxu0 %v1335
        %1346 = vmatprep.subr.bf16.mxu0 0
        %1347 = vmatpush1.bf16.msra.mxu0 0
        %1348 = vmatprep.subr.bf16.mxu0 0
        %1349 = vmatpush1.bf16.msra.mxu0 0
        %1350 = vmatprep.subr.bf16.mxu0 0
        %1351 = vmatpush1.bf16.msra.mxu0 0
        %1352 = vmatprep.subr.bf16.mxu0 0
        %1353 = vmatpush1.bf16.msra.mxu0 0
        %1354 = vmatprep.subr.bf16.mxu0 0
        %1355 = vmatpush1.bf16.msra.mxu0 0
        %1356 = vmatprep.subr.bf16.mxu0 0
        %1357 = vmatpush1.bf16.msra.mxu0 0
        %1358 = vmatprep.subr.bf16.mxu0 0
        %1359 = vmatpush1.bf16.msra.mxu0 0
        %1360 = vmatprep.subr.bf16.mxu0 0
        %1361 = vmatpush1.bf16.msra.mxu0 0
        %1362 = vmatprep.subr.bf16.mxu0 0
        %1363 = vmatpush1.bf16.msra.mxu0 0
        %1364 = vmatprep.subr.bf16.mxu0 0
        %1365 = vmatpush1.bf16.msra.mxu0 0
        %1366 = vmatprep.subr.bf16.mxu0 0
        %1367 = vmatpush1.bf16.msra.mxu0 0
        %1368 = vmatprep.subr.bf16.mxu0 0
        %1369 = vmatpush1.bf16.msra.mxu0 0
        %1370 = vmatprep.subr.bf16.mxu0 0
        %1371 = vmatpush1.bf16.msra.mxu0 0
        %1372 = vmatprep.subr.bf16.mxu0 0
        %1373 = vmatpush1.bf16.msra.mxu0 0
        %1374 = vmatprep.mubr.bf16.mxu0 0
        %1375 = vmatmul.mubr.bf16.gmra.mrb[0].mxu0 %v1340
        %v1376 = vpop.f32.mrb[0].mxu0
        %v1377 = vadd.f32 %v1324, %v1376
        %v1378 = vpop.f32.mrb[0].mxu0
        %v1379 = vpop.f32.mrb[0].mxu0
        %v1380 = vadd.f32 %v1324, %v1379
        %v1381 = vpop.f32.mrb[0].mxu0
        %1382 = vdwg.mxu0
        %v1383 = vpack.c.bf16 %v1380, %v1377
        %v1384 = vld [vmem:[#allocation8] sm:$0xff]
        %1386 = vrot.lane.b32.xlu0 %v1383, 96
        %v1387 = vpop.permute.xlu0 %1386
        %vm1388 = vcmask 64512
        %v1390 = vsel %vm1388, %v1383, 0
        %v1393 = vsel %vm1388, %v1387, 0
        %1395 = vmatprep.subr.bf16.mxu0 0
        %1396 = vmatpush1.bf16.xpose.msra.mxu0 %v1393
        %1397 = vmatprep.subr.bf16.mxu0 0
        %1398 = vmatpush1.bf16.xpose.msra.mxu0 0
        %1399 = vmatprep.subr.bf16.mxu0 0
        %1400 = vmatpush1.bf16.xpose.msra.mxu0 0
        %1401 = vmatprep.subr.bf16.mxu0 0
        %1402 = vmatpush1.bf16.xpose.msra.mxu0 0
        %1403 = vmatprep.subr.bf16.mxu0 0
        %1404 = vmatpush1.bf16.xpose.msra.mxu0 0
        %1405 = vmatprep.subr.bf16.mxu0 0
        %1406 = vmatpush1.bf16.xpose.msra.mxu0 0
        %1407 = vmatprep.subr.bf16.mxu0 0
        %1408 = vmatpush1.bf16.xpose.msra.mxu0 0
        %1409 = vmatprep.subr.bf16.mxu0 0
        %1410 = vmatpush1.bf16.xpose.msra.mxu0 0
        %1411 = vmatprep.subr.bf16.mxu0 0
        %1412 = vmatpush1.bf16.xpose.msra.mxu0 0
        %1413 = vmatprep.subr.bf16.mxu0 0
        %1414 = vmatpush1.bf16.xpose.msra.mxu0 0
        %1415 = vmatprep.subr.bf16.mxu0 0
        %1416 = vmatpush1.bf16.xpose.msra.mxu0 0
        %1417 = vmatprep.subr.bf16.mxu0 0
        %1418 = vmatpush1.bf16.xpose.msra.mxu0 0
        %1419 = vmatprep.subr.bf16.mxu0 0
        %1420 = vmatpush1.bf16.xpose.msra.mxu0 0
        %1421 = vmatprep.subr.bf16.mxu0 0
        %1422 = vmatpush1.bf16.xpose.msra.mxu0 0
        %1423 = vmatprep.subr.bf16.mxu0 0
        %1424 = vmatpush1.bf16.xpose.msra.mxu0 0
        %1425 = vmatprep.subr.bf16.mxu0 0
        %1426 = vmatpush1.bf16.xpose.msra.mxu0 0
        %1427 = vmatprep.mubr.bf16.mxu0 0
        %1428 = vmatmul.mubr.bf16.gmra.mrb[0].mxu0 %v1390
        %v1429 = vpop.f32.mrb[0].mxu0
        %v1430 = vadd.f32 %v1384, %v1429
        %v1431 = vpop.f32.mrb[0].mxu0
        %v1432 = vpop.f32.mrb[0].mxu0
        %v1433 = vpop.f32.mrb[0].mxu0
        %1434 = vdwg.mxu0
        %v1435 = vsel %vm1388, %v1430, -inf
        %1436 = vmax.xlane.f32.xlu0 %v1435
        %v1437 = vpop.xlane.xlu0 %1436
        %v1438 = vsub.f32 %v1430, %v1437
        %v1439 = vmul.f32 %v1438, 1.442695
        %v1440 = vpow.pop %v1439
        %v1441 = vsel %vm1388, %v1440, 0.0
        %1442 = vadd.xlane.f32.xlu0 %v1441
        %v1443 = vpop.xlane.xlu0 %1442
        %v1444 = vrcp.pop %v1443
        %v1445 = vmul.f32 %v1440, %v1444
        %v1446 = vpack.c.bf16 %v1445, %v1445
        %1447 = vrot.lane.b32.xlu0 %v1383, 64
        %v1448 = vpop.permute.xlu0 %1447
        %v1450 = vsel %vm1388, %v1446, 0
        %vm1452 = vcmask 1043456
        %v1454 = vsel %vm1452, %v1448, 0
        %1456 = vmatprep.subr.bf16.mxu0 0
        %1457 = vmatpush1.bf16.msra.mxu0 %v1454
        %1458 = vmatprep.subr.bf16.mxu0 0
        %1459 = vmatpush1.bf16.msra.mxu0 0
        %1460 = vmatprep.subr.bf16.mxu0 0
        %1461 = vmatpush1.bf16.msra.mxu0 0
        %1462 = vmatprep.subr.bf16.mxu0 0
        %1463 = vmatpush1.bf16.msra.mxu0 0
        %1464 = vmatprep.subr.bf16.mxu0 0
        %1465 = vmatpush1.bf16.msra.mxu0 0
        %1466 = vmatprep.subr.bf16.mxu0 0
        %1467 = vmatpush1.bf16.msra.mxu0 0
        %1468 = vmatprep.subr.bf16.mxu0 0
        %1469 = vmatpush1.bf16.msra.mxu0 0
        %1470 = vmatprep.subr.bf16.mxu0 0
        %1471 = vmatpush1.bf16.msra.mxu0 0
        %1472 = vmatprep.subr.bf16.mxu0 0
        %1473 = vmatpush1.bf16.msra.mxu0 0
        %1474 = vmatprep.subr.bf16.mxu0 0
        %1475 = vmatpush1.bf16.msra.mxu0 0
        %1476 = vmatprep.subr.bf16.mxu0 0
        %1477 = vmatpush1.bf16.msra.mxu0 0
        %1478 = vmatprep.subr.bf16.mxu0 0
        %1479 = vmatpush1.bf16.msra.mxu0 0
        %1480 = vmatprep.subr.bf16.mxu0 0
        %1481 = vmatpush1.bf16.msra.mxu0 0
        %1482 = vmatprep.subr.bf16.mxu0 0
        %1483 = vmatpush1.bf16.msra.mxu0 0
        %1484 = vmatprep.subr.bf16.mxu0 0
        %1485 = vmatpush1.bf16.msra.mxu0 0
        %1486 = vmatprep.subr.bf16.mxu0 0
        %1487 = vmatpush1.bf16.msra.mxu0 0
        %1488 = vmatprep.mubr.bf16.mxu0 0
        %1489 = vmatmul.mubr.bf16.gmra.mrb[0].mxu0 %v1450
        %v1490 = vpop.f32.mrb[0].mxu0
        %v1491 = vadd.f32 0.0, %v1490
        %v1492 = vpop.f32.mrb[0].mxu0
        %v1493 = vpop.f32.mrb[0].mxu0
        %v1494 = vpop.f32.mrb[0].mxu0
        %1495 = vdwg.mxu0
        %1496 = vst.msk [vmem:[#allocation2] sm:$0xff] %vm1388, %v1491
        %1497 = vrot.lane.b32.xlu0 %v1383, 120
        %v1498 = vpop.permute.xlu0 %1497
        %1499 = vrot.lane.b32.xlu0 %v1383, 88
        %v1500 = vpop.permute.xlu0 %1499
        %v1502 = vsel %vm1388, %v1498, 0
        %v1505 = vsel %vm1388, %v1500, 0
        %1507 = vmatprep.subr.bf16.mxu0 0
        %1508 = vmatpush1.bf16.xpose.msra.mxu0 %v1505
        %1509 = vmatprep.subr.bf16.mxu0 0
        %1510 = vmatpush1.bf16.xpose.msra.mxu0 0
        %1511 = vmatprep.subr.bf16.mxu0 0
        %1512 = vmatpush1.bf16.xpose.msra.mxu0 0
        %1513 = vmatprep.subr.bf16.mxu0 0
        %1514 = vmatpush1.bf16.xpose.msra.mxu0 0
        %1515 = vmatprep.subr.bf16.mxu0 0
        %1516 = vmatpush1.bf16.xpose.msra.mxu0 0
        %1517 = vmatprep.subr.bf16.mxu0 0
        %1518 = vmatpush1.bf16.xpose.msra.mxu0 0
        %1519 = vmatprep.subr.bf16.mxu0 0
        %1520 = vmatpush1.bf16.xpose.msra.mxu0 0
        %1521 = vmatprep.subr.bf16.mxu0 0
        %1522 = vmatpush1.bf16.xpose.msra.mxu0 0
        %1523 = vmatprep.subr.bf16.mxu0 0
        %1524 = vmatpush1.bf16.xpose.msra.mxu0 0
        %1525 = vmatprep.subr.bf16.mxu0 0
        %1526 = vmatpush1.bf16.xpose.msra.mxu0 0
        %1527 = vmatprep.subr.bf16.mxu0 0
        %1528 = vmatpush1.bf16.xpose.msra.mxu0 0
        %1529 = vmatprep.subr.bf16.mxu0 0
        %1530 = vmatpush1.bf16.xpose.msra.mxu0 0
        %1531 = vmatprep.subr.bf16.mxu0 0
        %1532 = vmatpush1.bf16.xpose.msra.mxu0 0
        %1533 = vmatprep.subr.bf16.mxu0 0
        %1534 = vmatpush1.bf16.xpose.msra.mxu0 0
        %1535 = vmatprep.subr.bf16.mxu0 0
        %1536 = vmatpush1.bf16.xpose.msra.mxu0 0
        %1537 = vmatprep.subr.bf16.mxu0 0
        %1538 = vmatpush1.bf16.xpose.msra.mxu0 0
        %1539 = vmatprep.mubr.bf16.mxu0 0
        %1540 = vmatmul.mubr.bf16.gmra.mrb[0].mxu0 %v1502
        %v1541 = vpop.f32.mrb[0].mxu0
        %v1542 = vadd.f32 %v1384, %v1541
        %v1543 = vpop.f32.mrb[0].mxu0
        %v1544 = vpop.f32.mrb[0].mxu0
        %v1545 = vpop.f32.mrb[0].mxu0
        %1546 = vdwg.mxu0
        %v1547 = vsel %vm1388, %v1542, -inf
        %1548 = vmax.xlane.f32.xlu0 %v1547
        %v1549 = vpop.xlane.xlu0 %1548
        %v1550 = vsub.f32 %v1542, %v1549
        %v1551 = vmul.f32 %v1550, 1.442695
        %v1552 = vpow.pop %v1551
        %v1553 = vsel %vm1388, %v1552, 0.0
        %1554 = vadd.xlane.f32.xlu0 %v1553
        %v1555 = vpop.xlane.xlu0 %1554
        %v1556 = vrcp.pop %v1555
        %v1557 = vmul.f32 %v1552, %v1556
        %v1558 = vpack.c.bf16 %v1557, %v1557
        %1559 = vrot.lane.b32.xlu0 %v1383, 56
        %v1560 = vpop.permute.xlu0 %1559
        %v1562 = vsel %vm1388, %v1558, 0
        %v1565 = vsel %vm1452, %v1560, 0
        %1567 = vmatprep.subr.bf16.mxu0 0
        %1568 = vmatpush1.bf16.msra.mxu0 %v1565
        %1569 = vmatprep.subr.bf16.mxu0 0
        %1570 = vmatpush1.bf16.msra.mxu0 0
        %1571 = vmatprep.subr.bf16.mxu0 0
        %1572 = vmatpush1.bf16.msra.mxu0 0
        %1573 = vmatprep.subr.bf16.mxu0 0
        %1574 = vmatpush1.bf16.msra.mxu0 0
        %1575 = vmatprep.subr.bf16.mxu0 0
        %1576 = vmatpush1.bf16.msra.mxu0 0
        %1577 = vmatprep.subr.bf16.mxu0 0
        %1578 = vmatpush1.bf16.msra.mxu0 0
        %1579 = vmatprep.subr.bf16.mxu0 0
        %1580 = vmatpush1.bf16.msra.mxu0 0
        %1581 = vmatprep.subr.bf16.mxu0 0
        %1582 = vmatpush1.bf16.msra.mxu0 0
        %1583 = vmatprep.subr.bf16.mxu0 0
        %1584 = vmatpush1.bf16.msra.mxu0 0
        %1585 = vmatprep.subr.bf16.mxu0 0
        %1586 = vmatpush1.bf16.msra.mxu0 0
        %1587 = vmatprep.subr.bf16.mxu0 0
        %1588 = vmatpush1.bf16.msra.mxu0 0
        %1589 = vmatprep.subr.bf16.mxu0 0
        %1590 = vmatpush1.bf16.msra.mxu0 0
        %1591 = vmatprep.subr.bf16.mxu0 0
        %1592 = vmatpush1.bf16.msra.mxu0 0
        %1593 = vmatprep.subr.bf16.mxu0 0
        %1594 = vmatpush1.bf16.msra.mxu0 0
        %1595 = vmatprep.subr.bf16.mxu0 0
        %1596 = vmatpush1.bf16.msra.mxu0 0
        %1597 = vmatprep.subr.bf16.mxu0 0
        %1598 = vmatpush1.bf16.msra.mxu0 0
        %1599 = vmatprep.mubr.bf16.mxu0 0
        %1600 = vmatmul.mubr.bf16.gmra.mrb[0].mxu0 %v1562
        %v1601 = vpop.f32.mrb[0].mxu0
        %v1602 = vadd.f32 0.0, %v1601
        %v1603 = vpop.f32.mrb[0].mxu0
        %v1604 = vpop.f32.mrb[0].mxu0
        %v1605 = vpop.f32.mrb[0].mxu0
        %1606 = vdwg.mxu0
        %1608 = vrot.lane.b32.xlu0 %v1602, 8
        %v1609 = vpop.permute.xlu0 %1608
        %vm1611 = vcmask 130112
        %1612 = vst.msk [vmem:[#allocation2] sm:$0xff] %vm1611, %v1609
        %1613 = vrot.lane.b32.xlu0 %v1383, 112
        %v1614 = vpop.permute.xlu0 %1613
        %1615 = vrot.lane.b32.xlu0 %v1383, 80
        %v1616 = vpop.permute.xlu0 %1615
        %v1618 = vsel %vm1388, %v1614, 0
        %v1621 = vsel %vm1388, %v1616, 0
        %1623 = vmatprep.subr.bf16.mxu0 0
        %1624 = vmatpush1.bf16.xpose.msra.mxu0 %v1621
        %1625 = vmatprep.subr.bf16.mxu0 0
        %1626 = vmatpush1.bf16.xpose.msra.mxu0 0
        %1627 = vmatprep.subr.bf16.mxu0 0
        %1628 = vmatpush1.bf16.xpose.msra.mxu0 0
        %1629 = vmatprep.subr.bf16.mxu0 0
        %1630 = vmatpush1.bf16.xpose.msra.mxu0 0
        %1631 = vmatprep.subr.bf16.mxu0 0
        %1632 = vmatpush1.bf16.xpose.msra.mxu0 0
        %1633 = vmatprep.subr.bf16.mxu0 0
        %1634 = vmatpush1.bf16.xpose.msra.mxu0 0
        %1635 = vmatprep.subr.bf16.mxu0 0
        %1636 = vmatpush1.bf16.xpose.msra.mxu0 0
        %1637 = vmatprep.subr.bf16.mxu0 0
        %1638 = vmatpush1.bf16.xpose.msra.mxu0 0
        %1639 = vmatprep.subr.bf16.mxu0 0
        %1640 = vmatpush1.bf16.xpose.msra.mxu0 0
        %1641 = vmatprep.subr.bf16.mxu0 0
        %1642 = vmatpush1.bf16.xpose.msra.mxu0 0
        %1643 = vmatprep.subr.bf16.mxu0 0
        %1644 = vmatpush1.bf16.xpose.msra.mxu0 0
        %1645 = vmatprep.subr.bf16.mxu0 0
        %1646 = vmatpush1.bf16.xpose.msra.mxu0 0
        %1647 = vmatprep.subr.bf16.mxu0 0
        %1648 = vmatpush1.bf16.xpose.msra.mxu0 0
        %1649 = vmatprep.subr.bf16.mxu0 0
        %1650 = vmatpush1.bf16.xpose.msra.mxu0 0
        %1651 = vmatprep.subr.bf16.mxu0 0
        %1652 = vmatpush1.bf16.xpose.msra.mxu0 0
        %1653 = vmatprep.subr.bf16.mxu0 0
        %1654 = vmatpush1.bf16.xpose.msra.mxu0 0
        %1655 = vmatprep.mubr.bf16.mxu0 0
        %1656 = vmatmul.mubr.bf16.gmra.mrb[0].mxu0 %v1618
        %v1657 = vpop.f32.mrb[0].mxu0
        %v1658 = vadd.f32 %v1384, %v1657
        %v1659 = vpop.f32.mrb[0].mxu0
        %v1660 = vpop.f32.mrb[0].mxu0
        %v1661 = vpop.f32.mrb[0].mxu0
        %1662 = vdwg.mxu0
        %v1663 = vsel %vm1388, %v1658, -inf
        %1664 = vmax.xlane.f32.xlu0 %v1663
        %v1665 = vpop.xlane.xlu0 %1664
        %v1666 = vsub.f32 %v1658, %v1665
        %v1667 = vmul.f32 %v1666, 1.442695
        %v1668 = vpow.pop %v1667
        %v1669 = vsel %vm1388, %v1668, 0.0
        %1670 = vadd.xlane.f32.xlu0 %v1669
        %v1671 = vpop.xlane.xlu0 %1670
        %v1672 = vrcp.pop %v1671
        %v1673 = vmul.f32 %v1668, %v1672
        %v1674 = vpack.c.bf16 %v1673, %v1673
        %1675 = vrot.lane.b32.xlu0 %v1383, 48
        %v1676 = vpop.permute.xlu0 %1675
        %v1678 = vsel %vm1388, %v1674, 0
        %v1681 = vsel %vm1452, %v1676, 0
        %1683 = vmatprep.subr.bf16.mxu0 0
        %1684 = vmatpush1.bf16.msra.mxu0 %v1681
        %1685 = vmatprep.subr.bf16.mxu0 0
        %1686 = vmatpush1.bf16.msra.mxu0 0
        %1687 = vmatprep.subr.bf16.mxu0 0
        %1688 = vmatpush1.bf16.msra.mxu0 0
        %1689 = vmatprep.subr.bf16.mxu0 0
        %1690 = vmatpush1.bf16.msra.mxu0 0
        %1691 = vmatprep.subr.bf16.mxu0 0
        %1692 = vmatpush1.bf16.msra.mxu0 0
        %1693 = vmatprep.subr.bf16.mxu0 0
        %1694 = vmatpush1.bf16.msra.mxu0 0
        %1695 = vmatprep.subr.bf16.mxu0 0
        %1696 = vmatpush1.bf16.msra.mxu0 0
        %1697 = vmatprep.subr.bf16.mxu0 0
        %1698 = vmatpush1.bf16.msra.mxu0 0
        %1699 = vmatprep.subr.bf16.mxu0 0
        %1700 = vmatpush1.bf16.msra.mxu0 0
        %1701 = vmatprep.subr.bf16.mxu0 0
        %1702 = vmatpush1.bf16.msra.mxu0 0
        %1703 = vmatprep.subr.bf16.mxu0 0
        %1704 = vmatpush1.bf16.msra.mxu0 0
        %1705 = vmatprep.subr.bf16.mxu0 0
        %1706 = vmatpush1.bf16.msra.mxu0 0
        %1707 = vmatprep.subr.bf16.mxu0 0
        %1708 = vmatpush1.bf16.msra.mxu0 0
        %1709 = vmatprep.subr.bf16.mxu0 0
        %1710 = vmatpush1.bf16.msra.mxu0 0
        %1711 = vmatprep.subr.bf16.mxu0 0
        %1712 = vmatpush1.bf16.msra.mxu0 0
        %1713 = vmatprep.subr.bf16.mxu0 0
        %1714 = vmatpush1.bf16.msra.mxu0 0
        %1715 = vmatprep.mubr.bf16.mxu0 0
        %1716 = vmatmul.mubr.bf16.gmra.mrb[0].mxu0 %v1678
        %v1717 = vpop.f32.mrb[0].mxu0
        %v1718 = vadd.f32 0.0, %v1717
        %v1719 = vpop.f32.mrb[0].mxu0
        %v1720 = vpop.f32.mrb[0].mxu0
        %v1721 = vpop.f32.mrb[0].mxu0
        %1722 = vdwg.mxu0
        %1724 = vrot.lane.b32.xlu0 %v1718, 16
        %v1725 = vpop.permute.xlu0 %1724
        %vm1727 = vcmask 195712
        %1728 = vst.msk [vmem:[#allocation2] sm:$0xff] %vm1727, %v1725
        %1729 = vrot.lane.b32.xlu0 %v1383, 104
        %v1730 = vpop.permute.xlu0 %1729
        %1731 = vrot.lane.b32.xlu0 %v1383, 72
        %v1732 = vpop.permute.xlu0 %1731
        %v1734 = vsel %vm1388, %v1730, 0
        %v1737 = vsel %vm1388, %v1732, 0
        %1739 = vmatprep.subr.bf16.mxu0 0
        %1740 = vmatpush1.bf16.xpose.msra.mxu0 %v1737
        %1741 = vmatprep.subr.bf16.mxu0 0
        %1742 = vmatpush1.bf16.xpose.msra.mxu0 0
        %1743 = vmatprep.subr.bf16.mxu0 0
        %1744 = vmatpush1.bf16.xpose.msra.mxu0 0
        %1745 = vmatprep.subr.bf16.mxu0 0
        %1746 = vmatpush1.bf16.xpose.msra.mxu0 0
        %1747 = vmatprep.subr.bf16.mxu0 0
        %1748 = vmatpush1.bf16.xpose.msra.mxu0 0
        %1749 = vmatprep.subr.bf16.mxu0 0
        %1750 = vmatpush1.bf16.xpose.msra.mxu0 0
        %1751 = vmatprep.subr.bf16.mxu0 0
        %1752 = vmatpush1.bf16.xpose.msra.mxu0 0
        %1753 = vmatprep.subr.bf16.mxu0 0
        %1754 = vmatpush1.bf16.xpose.msra.mxu0 0
        %1755 = vmatprep.subr.bf16.mxu0 0
        %1756 = vmatpush1.bf16.xpose.msra.mxu0 0
        %1757 = vmatprep.subr.bf16.mxu0 0
        %1758 = vmatpush1.bf16.xpose.msra.mxu0 0
        %1759 = vmatprep.subr.bf16.mxu0 0
        %1760 = vmatpush1.bf16.xpose.msra.mxu0 0
        %1761 = vmatprep.subr.bf16.mxu0 0
        %1762 = vmatpush1.bf16.xpose.msra.mxu0 0
        %1763 = vmatprep.subr.bf16.mxu0 0
        %1764 = vmatpush1.bf16.xpose.msra.mxu0 0
        %1765 = vmatprep.subr.bf16.mxu0 0
        %1766 = vmatpush1.bf16.xpose.msra.mxu0 0
        %1767 = vmatprep.subr.bf16.mxu0 0
        %1768 = vmatpush1.bf16.xpose.msra.mxu0 0
        %1769 = vmatprep.subr.bf16.mxu0 0
        %1770 = vmatpush1.bf16.xpose.msra.mxu0 0
        %1771 = vmatprep.mubr.bf16.mxu0 0
        %1772 = vmatmul.mubr.bf16.gmra.mrb[0].mxu0 %v1734
        %v1773 = vpop.f32.mrb[0].mxu0
        %v1774 = vadd.f32 %v1384, %v1773
        %v1775 = vpop.f32.mrb[0].mxu0
        %v1776 = vpop.f32.mrb[0].mxu0
        %v1777 = vpop.f32.mrb[0].mxu0
        %1778 = vdwg.mxu0
        %v1779 = vsel %vm1388, %v1774, -inf
        %1780 = vmax.xlane.f32.xlu0 %v1779
        %v1781 = vpop.xlane.xlu0 %1780
        %v1782 = vsub.f32 %v1774, %v1781
        %v1783 = vmul.f32 %v1782, 1.442695
        %v1784 = vpow.pop %v1783
        %v1785 = vsel %vm1388, %v1784, 0.0
        %1786 = vadd.xlane.f32.xlu0 %v1785
        %v1787 = vpop.xlane.xlu0 %1786
        %v1788 = vrcp.pop %v1787
        %v1789 = vmul.f32 %v1784, %v1788
        %v1790 = vpack.c.bf16 %v1789, %v1789
        %1791 = vrot.lane.b32.xlu0 %v1383, 40
        %v1792 = vpop.permute.xlu0 %1791
        %v1794 = vsel %vm1388, %v1790, 0
        %v1797 = vsel %vm1452, %v1792, 0
        %1799 = vmatprep.subr.bf16.mxu0 0
        %1800 = vmatpush1.bf16.msra.mxu0 %v1797
        %1801 = vmatprep.subr.bf16.mxu0 0
        %1802 = vmatpush1.bf16.msra.mxu0 0
        %1803 = vmatprep.subr.bf16.mxu0 0
        %1804 = vmatpush1.bf16.msra.mxu0 0
        %1805 = vmatprep.subr.bf16.mxu0 0
        %1806 = vmatpush1.bf16.msra.mxu0 0
        %1807 = vmatprep.subr.bf16.mxu0 0
        %1808 = vmatpush1.bf16.msra.mxu0 0
        %1809 = vmatprep.subr.bf16.mxu0 0
        %1810 = vmatpush1.bf16.msra.mxu0 0
        %1811 = vmatprep.subr.bf16.mxu0 0
        %1812 = vmatpush1.bf16.msra.mxu0 0
        %1813 = vmatprep.subr.bf16.mxu0 0
        %1814 = vmatpush1.bf16.msra.mxu0 0
        %1815 = vmatprep.subr.bf16.mxu0 0
        %1816 = vmatpush1.bf16.msra.mxu0 0
        %1817 = vmatprep.subr.bf16.mxu0 0
        %1818 = vmatpush1.bf16.msra.mxu0 0
        %1819 = vmatprep.subr.bf16.mxu0 0
        %1820 = vmatpush1.bf16.msra.mxu0 0
        %1821 = vmatprep.subr.bf16.mxu0 0
        %1822 = vmatpush1.bf16.msra.mxu0 0
        %1823 = vmatprep.subr.bf16.mxu0 0
        %1824 = vmatpush1.bf16.msra.mxu0 0
        %1825 = vmatprep.subr.bf16.mxu0 0
        %1826 = vmatpush1.bf16.msra.mxu0 0
        %1827 = vmatprep.subr.bf16.mxu0 0
        %1828 = vmatpush1.bf16.msra.mxu0 0
        %1829 = vmatprep.subr.bf16.mxu0 0
        %1830 = vmatpush1.bf16.msra.mxu0 0
        %1831 = vmatprep.mubr.bf16.mxu0 0
        %1832 = vmatmul.mubr.bf16.gmra.mrb[0].mxu0 %v1794
        %v1833 = vpop.f32.mrb[0].mxu0
        %v1834 = vadd.f32 0.0, %v1833
        %v1835 = vpop.f32.mrb[0].mxu0
        %v1836 = vpop.f32.mrb[0].mxu0
        %v1837 = vpop.f32.mrb[0].mxu0
        %1838 = vdwg.mxu0
        %1840 = vrot.lane.b32.xlu0 %v1834, 24
        %v1841 = vpop.permute.xlu0 %1840
        %vm1843 = vcmask 261312
        %1844 = vst.msk [vmem:[#allocation2] sm:$0xff] %vm1843, %v1841
        %s1845 = scalar_lea.vmem [#allocation8], 8
        %v1846 = vld [vmem:[%s1845] sm:$0xff]
        %v1847 = vrot.slane %v1383, 4
        %1848 = vrot.lane.b32.xlu0 %v1847, 96
        %v1849 = vpop.permute.xlu0 %1848
        %v1851 = vsel %vm1388, %v1847, 0
        %v1854 = vsel %vm1388, %v1849, 0
        %1856 = vmatprep.subr.bf16.mxu0 0
        %1857 = vmatpush1.bf16.xpose.msra.mxu0 %v1854
        %1858 = vmatprep.subr.bf16.mxu0 0
        %1859 = vmatpush1.bf16.xpose.msra.mxu0 0
        %1860 = vmatprep.subr.bf16.mxu0 0
        %1861 = vmatpush1.bf16.xpose.msra.mxu0 0
        %1862 = vmatprep.subr.bf16.mxu0 0
        %1863 = vmatpush1.bf16.xpose.msra.mxu0 0
        %1864 = vmatprep.subr.bf16.mxu0 0
        %1865 = vmatpush1.bf16.xpose.msra.mxu0 0
        %1866 = vmatprep.subr.bf16.mxu0 0
        %1867 = vmatpush1.bf16.xpose.msra.mxu0 0
        %1868 = vmatprep.subr.bf16.mxu0 0
        %1869 = vmatpush1.bf16.xpose.msra.mxu0 0
        %1870 = vmatprep.subr.bf16.mxu0 0
        %1871 = vmatpush1.bf16.xpose.msra.mxu0 0
        %1872 = vmatprep.subr.bf16.mxu0 0
        %1873 = vmatpush1.bf16.xpose.msra.mxu0 0
        %1874 = vmatprep.subr.bf16.mxu0 0
        %1875 = vmatpush1.bf16.xpose.msra.mxu0 0
        %1876 = vmatprep.subr.bf16.mxu0 0
        %1877 = vmatpush1.bf16.xpose.msra.mxu0 0
        %1878 = vmatprep.subr.bf16.mxu0 0
        %1879 = vmatpush1.bf16.xpose.msra.mxu0 0
        %1880 = vmatprep.subr.bf16.mxu0 0
        %1881 = vmatpush1.bf16.xpose.msra.mxu0 0
        %1882 = vmatprep.subr.bf16.mxu0 0
        %1883 = vmatpush1.bf16.xpose.msra.mxu0 0
        %1884 = vmatprep.subr.bf16.mxu0 0
        %1885 = vmatpush1.bf16.xpose.msra.mxu0 0
        %1886 = vmatprep.subr.bf16.mxu0 0
        %1887 = vmatpush1.bf16.xpose.msra.mxu0 0
        %1888 = vmatprep.mubr.bf16.mxu0 0
        %1889 = vmatmul.mubr.bf16.gmra.mrb[0].mxu0 %v1851
        %v1890 = vpop.f32.mrb[0].mxu0
        %v1891 = vadd.f32 %v1846, %v1890
        %v1892 = vpop.f32.mrb[0].mxu0
        %v1893 = vpop.f32.mrb[0].mxu0
        %v1894 = vpop.f32.mrb[0].mxu0
        %1895 = vdwg.mxu0
        %v1896 = vsel %vm1388, %v1891, -inf
        %1897 = vmax.xlane.f32.xlu0 %v1896
        %v1898 = vpop.xlane.xlu0 %1897
        %v1899 = vsub.f32 %v1891, %v1898
        %v1900 = vmul.f32 %v1899, 1.442695
        %v1901 = vpow.pop %v1900
        %v1902 = vsel %vm1388, %v1901, 0.0
        %1903 = vadd.xlane.f32.xlu0 %v1902
        %v1904 = vpop.xlane.xlu0 %1903
        %v1905 = vrcp.pop %v1904
        %v1906 = vmul.f32 %v1901, %v1905
        %v1907 = vpack.c.bf16 %v1906, %v1906
        %1908 = vrot.lane.b32.xlu0 %v1847, 64
        %v1909 = vpop.permute.xlu0 %1908
        %v1911 = vsel %vm1388, %v1907, 0
        %v1914 = vsel %vm1452, %v1909, 0
        %1916 = vmatprep.subr.bf16.mxu0 0
        %1917 = vmatpush1.bf16.msra.mxu0 %v1914
        %1918 = vmatprep.subr.bf16.mxu0 0
        %1919 = vmatpush1.bf16.msra.mxu0 0
        %1920 = vmatprep.subr.bf16.mxu0 0
        %1921 = vmatpush1.bf16.msra.mxu0 0
        %1922 = vmatprep.subr.bf16.mxu0 0
        %1923 = vmatpush1.bf16.msra.mxu0 0
        %1924 = vmatprep.subr.bf16.mxu0 0
        %1925 = vmatpush1.bf16.msra.mxu0 0
        %1926 = vmatprep.subr.bf16.mxu0 0
        %1927 = vmatpush1.bf16.msra.mxu0 0
        %1928 = vmatprep.subr.bf16.mxu0 0
        %1929 = vmatpush1.bf16.msra.mxu0 0
        %1930 = vmatprep.subr.bf16.mxu0 0
        %1931 = vmatpush1.bf16.msra.mxu0 0
        %1932 = vmatprep.subr.bf16.mxu0 0
        %1933 = vmatpush1.bf16.msra.mxu0 0
        %1934 = vmatprep.subr.bf16.mxu0 0
        %1935 = vmatpush1.bf16.msra.mxu0 0
        %1936 = vmatprep.subr.bf16.mxu0 0
        %1937 = vmatpush1.bf16.msra.mxu0 0
        %1938 = vmatprep.subr.bf16.mxu0 0
        %1939 = vmatpush1.bf16.msra.mxu0 0
        %1940 = vmatprep.subr.bf16.mxu0 0
        %1941 = vmatpush1.bf16.msra.mxu0 0
        %1942 = vmatprep.subr.bf16.mxu0 0
        %1943 = vmatpush1.bf16.msra.mxu0 0
        %1944 = vmatprep.subr.bf16.mxu0 0
        %1945 = vmatpush1.bf16.msra.mxu0 0
        %1946 = vmatprep.subr.bf16.mxu0 0
        %1947 = vmatpush1.bf16.msra.mxu0 0
        %1948 = vmatprep.mubr.bf16.mxu0 0
        %1949 = vmatmul.mubr.bf16.gmra.mrb[0].mxu0 %v1911
        %v1950 = vpop.f32.mrb[0].mxu0
        %v1951 = vadd.f32 0.0, %v1950
        %v1952 = vpop.f32.mrb[0].mxu0
        %v1953 = vpop.f32.mrb[0].mxu0
        %v1954 = vpop.f32.mrb[0].mxu0
        %1955 = vdwg.mxu0
        %1956 = vst.msk [vmem:[#allocation2 + $0x8] sm:$0xff] %vm1388, %v1951
        %1957 = vrot.lane.b32.xlu0 %v1847, 120
        %v1958 = vpop.permute.xlu0 %1957
        %1959 = vrot.lane.b32.xlu0 %v1847, 88
        %v1960 = vpop.permute.xlu0 %1959
        %v1962 = vsel %vm1388, %v1958, 0
        %v1965 = vsel %vm1388, %v1960, 0
        %1967 = vmatprep.subr.bf16.mxu0 0
        %1968 = vmatpush1.bf16.xpose.msra.mxu0 %v1965
        %1969 = vmatprep.subr.bf16.mxu0 0
        %1970 = vmatpush1.bf16.xpose.msra.mxu0 0
        %1971 = vmatprep.subr.bf16.mxu0 0
        %1972 = vmatpush1.bf16.xpose.msra.mxu0 0
        %1973 = vmatprep.subr.bf16.mxu0 0
        %1974 = vmatpush1.bf16.xpose.msra.mxu0 0
        %1975 = vmatprep.subr.bf16.mxu0 0
        %1976 = vmatpush1.bf16.xpose.msra.mxu0 0
        %1977 = vmatprep.subr.bf16.mxu0 0
        %1978 = vmatpush1.bf16.xpose.msra.mxu0 0
        %1979 = vmatprep.subr.bf16.mxu0 0
        %1980 = vmatpush1.bf16.xpose.msra.mxu0 0
        %1981 = vmatprep.subr.bf16.mxu0 0
        %1982 = vmatpush1.bf16.xpose.msra.mxu0 0
        %1983 = vmatprep.subr.bf16.mxu0 0
        %1984 = vmatpush1.bf16.xpose.msra.mxu0 0
        %1985 = vmatprep.subr.bf16.mxu0 0
        %1986 = vmatpush1.bf16.xpose.msra.mxu0 0
        %1987 = vmatprep.subr.bf16.mxu0 0
        %1988 = vmatpush1.bf16.xpose.msra.mxu0 0
        %1989 = vmatprep.subr.bf16.mxu0 0
        %1990 = vmatpush1.bf16.xpose.msra.mxu0 0
        %1991 = vmatprep.subr.bf16.mxu0 0
        %1992 = vmatpush1.bf16.xpose.msra.mxu0 0
        %1993 = vmatprep.subr.bf16.mxu0 0
        %1994 = vmatpush1.bf16.xpose.msra.mxu0 0
        %1995 = vmatprep.subr.bf16.mxu0 0
        %1996 = vmatpush1.bf16.xpose.msra.mxu0 0
        %1997 = vmatprep.subr.bf16.mxu0 0
        %1998 = vmatpush1.bf16.xpose.msra.mxu0 0
        %1999 = vmatprep.mubr.bf16.mxu0 0
        %2000 = vmatmul.mubr.bf16.gmra.mrb[0].mxu0 %v1962
        %v2001 = vpop.f32.mrb[0].mxu0
        %v2002 = vadd.f32 %v1846, %v2001
        %v2003 = vpop.f32.mrb[0].mxu0
        %v2004 = vpop.f32.mrb[0].mxu0
        %v2005 = vpop.f32.mrb[0].mxu0
        %2006 = vdwg.mxu0
        %v2007 = vsel %vm1388, %v2002, -inf
        %2008 = vmax.xlane.f32.xlu0 %v2007
        %v2009 = vpop.xlane.xlu0 %2008
        %v2010 = vsub.f32 %v2002, %v2009
        %v2011 = vmul.f32 %v2010, 1.442695
        %v2012 = vpow.pop %v2011
        %v2013 = vsel %vm1388, %v2012, 0.0
        %2014 = vadd.xlane.f32.xlu0 %v2013
        %v2015 = vpop.xlane.xlu0 %2014
        %v2016 = vrcp.pop %v2015
        %v2017 = vmul.f32 %v2012, %v2016
        %v2018 = vpack.c.bf16 %v2017, %v2017
        %2019 = vrot.lane.b32.xlu0 %v1847, 56
        %v2020 = vpop.permute.xlu0 %2019
        %v2022 = vsel %vm1388, %v2018, 0
        %v2025 = vsel %vm1452, %v2020, 0
        %2027 = vmatprep.subr.bf16.mxu0 0
        %2028 = vmatpush1.bf16.msra.mxu0 %v2025
        %2029 = vmatprep.subr.bf16.mxu0 0
        %2030 = vmatpush1.bf16.msra.mxu0 0
        %2031 = vmatprep.subr.bf16.mxu0 0
        %2032 = vmatpush1.bf16.msra.mxu0 0
        %2033 = vmatprep.subr.bf16.mxu0 0
        %2034 = vmatpush1.bf16.msra.mxu0 0
        %2035 = vmatprep.subr.bf16.mxu0 0
        %2036 = vmatpush1.bf16.msra.mxu0 0
        %2037 = vmatprep.subr.bf16.mxu0 0
        %2038 = vmatpush1.bf16.msra.mxu0 0
        %2039 = vmatprep.subr.bf16.mxu0 0
        %2040 = vmatpush1.bf16.msra.mxu0 0
        %2041 = vmatprep.subr.bf16.mxu0 0
        %2042 = vmatpush1.bf16.msra.mxu0 0
        %2043 = vmatprep.subr.bf16.mxu0 0
        %2044 = vmatpush1.bf16.msra.mxu0 0
        %2045 = vmatprep.subr.bf16.mxu0 0
        %2046 = vmatpush1.bf16.msra.mxu0 0
        %2047 = vmatprep.subr.bf16.mxu0 0
        %2048 = vmatpush1.bf16.msra.mxu0 0
        %2049 = vmatprep.subr.bf16.mxu0 0
        %2050 = vmatpush1.bf16.msra.mxu0 0
        %2051 = vmatprep.subr.bf16.mxu0 0
        %2052 = vmatpush1.bf16.msra.mxu0 0
        %2053 = vmatprep.subr.bf16.mxu0 0
        %2054 = vmatpush1.bf16.msra.mxu0 0
        %2055 = vmatprep.subr.bf16.mxu0 0
        %2056 = vmatpush1.bf16.msra.mxu0 0
        %2057 = vmatprep.subr.bf16.mxu0 0
        %2058 = vmatpush1.bf16.msra.mxu0 0
        %2059 = vmatprep.mubr.bf16.mxu0 0
        %2060 = vmatmul.mubr.bf16.gmra.mrb[0].mxu0 %v2022
        %v2061 = vpop.f32.mrb[0].mxu0
        %v2062 = vadd.f32 0.0, %v2061
        %v2063 = vpop.f32.mrb[0].mxu0
        %v2064 = vpop.f32.mrb[0].mxu0
        %v2065 = vpop.f32.mrb[0].mxu0
        %2066 = vdwg.mxu0
        %2068 = vrot.lane.b32.xlu0 %v2062, 8
        %v2069 = vpop.permute.xlu0 %2068
        %2071 = vst.msk [vmem:[#allocation2 + $0x8] sm:$0xff] %vm1611, %v2069
        %2072 = vrot.lane.b32.xlu0 %v1847, 112
        %v2073 = vpop.permute.xlu0 %2072
        %2074 = vrot.lane.b32.xlu0 %v1847, 80
        %v2075 = vpop.permute.xlu0 %2074
        %v2077 = vsel %vm1388, %v2073, 0
        %v2080 = vsel %vm1388, %v2075, 0
        %2082 = vmatprep.subr.bf16.mxu0 0
        %2083 = vmatpush1.bf16.xpose.msra.mxu0 %v2080
        %2084 = vmatprep.subr.bf16.mxu0 0
        %2085 = vmatpush1.bf16.xpose.msra.mxu0 0
        %2086 = vmatprep.subr.bf16.mxu0 0
        %2087 = vmatpush1.bf16.xpose.msra.mxu0 0
        %2088 = vmatprep.subr.bf16.mxu0 0
        %2089 = vmatpush1.bf16.xpose.msra.mxu0 0
        %2090 = vmatprep.subr.bf16.mxu0 0
        %2091 = vmatpush1.bf16.xpose.msra.mxu0 0
        %2092 = vmatprep.subr.bf16.mxu0 0
        %2093 = vmatpush1.bf16.xpose.msra.mxu0 0
        %2094 = vmatprep.subr.bf16.mxu0 0
        %2095 = vmatpush1.bf16.xpose.msra.mxu0 0
        %2096 = vmatprep.subr.bf16.mxu0 0
        %2097 = vmatpush1.bf16.xpose.msra.mxu0 0
        %2098 = vmatprep.subr.bf16.mxu0 0
        %2099 = vmatpush1.bf16.xpose.msra.mxu0 0
        %2100 = vmatprep.subr.bf16.mxu0 0
        %2101 = vmatpush1.bf16.xpose.msra.mxu0 0
        %2102 = vmatprep.subr.bf16.mxu0 0
        %2103 = vmatpush1.bf16.xpose.msra.mxu0 0
        %2104 = vmatprep.subr.bf16.mxu0 0
        %2105 = vmatpush1.bf16.xpose.msra.mxu0 0
        %2106 = vmatprep.subr.bf16.mxu0 0
        %2107 = vmatpush1.bf16.xpose.msra.mxu0 0
        %2108 = vmatprep.subr.bf16.mxu0 0
        %2109 = vmatpush1.bf16.xpose.msra.mxu0 0
        %2110 = vmatprep.subr.bf16.mxu0 0
        %2111 = vmatpush1.bf16.xpose.msra.mxu0 0
        %2112 = vmatprep.subr.bf16.mxu0 0
        %2113 = vmatpush1.bf16.xpose.msra.mxu0 0
        %2114 = vmatprep.mubr.bf16.mxu0 0
        %2115 = vmatmul.mubr.bf16.gmra.mrb[0].mxu0 %v2077
        %v2116 = vpop.f32.mrb[0].mxu0
        %v2117 = vadd.f32 %v1846, %v2116
        %v2118 = vpop.f32.mrb[0].mxu0
        %v2119 = vpop.f32.mrb[0].mxu0
        %v2120 = vpop.f32.mrb[0].mxu0
        %2121 = vdwg.mxu0
        %v2122 = vsel %vm1388, %v2117, -inf
        %2123 = vmax.xlane.f32.xlu0 %v2122
        %v2124 = vpop.xlane.xlu0 %2123
        %v2125 = vsub.f32 %v2117, %v2124
        %v2126 = vmul.f32 %v2125, 1.442695
        %v2127 = vpow.pop %v2126
        %v2128 = vsel %vm1388, %v2127, 0.0
        %2129 = vadd.xlane.f32.xlu0 %v2128
        %v2130 = vpop.xlane.xlu0 %2129
        %v2131 = vrcp.pop %v2130
        %v2132 = vmul.f32 %v2127, %v2131
        %v2133 = vpack.c.bf16 %v2132, %v2132
        %2134 = vrot.lane.b32.xlu0 %v1847, 48
        %v2135 = vpop.permute.xlu0 %2134
        %v2137 = vsel %vm1388, %v2133, 0
        %v2140 = vsel %vm1452, %v2135, 0
        %2142 = vmatprep.subr.bf16.mxu0 0
        %2143 = vmatpush1.bf16.msra.mxu0 %v2140
        %2144 = vmatprep.subr.bf16.mxu0 0
        %2145 = vmatpush1.bf16.msra.mxu0 0
        %2146 = vmatprep.subr.bf16.mxu0 0
        %2147 = vmatpush1.bf16.msra.mxu0 0
        %2148 = vmatprep.subr.bf16.mxu0 0
        %2149 = vmatpush1.bf16.msra.mxu0 0
        %2150 = vmatprep.subr.bf16.mxu0 0
        %2151 = vmatpush1.bf16.msra.mxu0 0
        %2152 = vmatprep.subr.bf16.mxu0 0
        %2153 = vmatpush1.bf16.msra.mxu0 0
        %2154 = vmatprep.subr.bf16.mxu0 0
        %2155 = vmatpush1.bf16.msra.mxu0 0
        %2156 = vmatprep.subr.bf16.mxu0 0
        %2157 = vmatpush1.bf16.msra.mxu0 0
        %2158 = vmatprep.subr.bf16.mxu0 0
        %2159 = vmatpush1.bf16.msra.mxu0 0
        %2160 = vmatprep.subr.bf16.mxu0 0
        %2161 = vmatpush1.bf16.msra.mxu0 0
        %2162 = vmatprep.subr.bf16.mxu0 0
        %2163 = vmatpush1.bf16.msra.mxu0 0
        %2164 = vmatprep.subr.bf16.mxu0 0
        %2165 = vmatpush1.bf16.msra.mxu0 0
        %2166 = vmatprep.subr.bf16.mxu0 0
        %2167 = vmatpush1.bf16.msra.mxu0 0
        %2168 = vmatprep.subr.bf16.mxu0 0
        %2169 = vmatpush1.bf16.msra.mxu0 0
        %2170 = vmatprep.subr.bf16.mxu0 0
        %2171 = vmatpush1.bf16.msra.mxu0 0
        %2172 = vmatprep.subr.bf16.mxu0 0
        %2173 = vmatpush1.bf16.msra.mxu0 0
        %2174 = vmatprep.mubr.bf16.mxu0 0
        %2175 = vmatmul.mubr.bf16.gmra.mrb[0].mxu0 %v2137
        %v2176 = vpop.f32.mrb[0].mxu0
        %v2177 = vadd.f32 0.0, %v2176
        %v2178 = vpop.f32.mrb[0].mxu0
        %v2179 = vpop.f32.mrb[0].mxu0
        %v2180 = vpop.f32.mrb[0].mxu0
        %2181 = vdwg.mxu0
        %2183 = vrot.lane.b32.xlu0 %v2177, 16
        %v2184 = vpop.permute.xlu0 %2183
        %2186 = vst.msk [vmem:[#allocation2 + $0x8] sm:$0xff] %vm1727, %v2184
        %2187 = vrot.lane.b32.xlu0 %v1847, 104
        %v2188 = vpop.permute.xlu0 %2187
        %2189 = vrot.lane.b32.xlu0 %v1847, 72
        %v2190 = vpop.permute.xlu0 %2189
        %v2192 = vsel %vm1388, %v2188, 0
        %v2195 = vsel %vm1388, %v2190, 0
        %2197 = vmatprep.subr.bf16.mxu0 0
        %2198 = vmatpush1.bf16.xpose.msra.mxu0 %v2195
        %2199 = vmatprep.subr.bf16.mxu0 0
        %2200 = vmatpush1.bf16.xpose.msra.mxu0 0
        %2201 = vmatprep.subr.bf16.mxu0 0
        %2202 = vmatpush1.bf16.xpose.msra.mxu0 0
        %2203 = vmatprep.subr.bf16.mxu0 0
        %2204 = vmatpush1.bf16.xpose.msra.mxu0 0
        %2205 = vmatprep.subr.bf16.mxu0 0
        %2206 = vmatpush1.bf16.xpose.msra.mxu0 0
        %2207 = vmatprep.subr.bf16.mxu0 0
        %2208 = vmatpush1.bf16.xpose.msra.mxu0 0
        %2209 = vmatprep.subr.bf16.mxu0 0
        %2210 = vmatpush1.bf16.xpose.msra.mxu0 0
        %2211 = vmatprep.subr.bf16.mxu0 0
        %2212 = vmatpush1.bf16.xpose.msra.mxu0 0
        %2213 = vmatprep.subr.bf16.mxu0 0
        %2214 = vmatpush1.bf16.xpose.msra.mxu0 0
        %2215 = vmatprep.subr.bf16.mxu0 0
        %2216 = vmatpush1.bf16.xpose.msra.mxu0 0
        %2217 = vmatprep.subr.bf16.mxu0 0
        %2218 = vmatpush1.bf16.xpose.msra.mxu0 0
        %2219 = vmatprep.subr.bf16.mxu0 0
        %2220 = vmatpush1.bf16.xpose.msra.mxu0 0
        %2221 = vmatprep.subr.bf16.mxu0 0
        %2222 = vmatpush1.bf16.xpose.msra.mxu0 0
        %2223 = vmatprep.subr.bf16.mxu0 0
        %2224 = vmatpush1.bf16.xpose.msra.mxu0 0
        %2225 = vmatprep.subr.bf16.mxu0 0
        %2226 = vmatpush1.bf16.xpose.msra.mxu0 0
        %2227 = vmatprep.subr.bf16.mxu0 0
        %2228 = vmatpush1.bf16.xpose.msra.mxu0 0
        %2229 = vmatprep.mubr.bf16.mxu0 0
        %2230 = vmatmul.mubr.bf16.gmra.mrb[0].mxu0 %v2192
        %v2231 = vpop.f32.mrb[0].mxu0
        %v2232 = vadd.f32 %v1846, %v2231
        %v2233 = vpop.f32.mrb[0].mxu0
        %v2234 = vpop.f32.mrb[0].mxu0
        %v2235 = vpop.f32.mrb[0].mxu0
        %2236 = vdwg.mxu0
        %v2237 = vsel %vm1388, %v2232, -inf
        %2238 = vmax.xlane.f32.xlu0 %v2237
        %v2239 = vpop.xlane.xlu0 %2238
        %v2240 = vsub.f32 %v2232, %v2239
        %v2241 = vmul.f32 %v2240, 1.442695
        %v2242 = vpow.pop %v2241
        %v2243 = vsel %vm1388, %v2242, 0.0
        %2244 = vadd.xlane.f32.xlu0 %v2243
        %v2245 = vpop.xlane.xlu0 %2244
        %v2246 = vrcp.pop %v2245
        %v2247 = vmul.f32 %v2242, %v2246
        %v2248 = vpack.c.bf16 %v2247, %v2247
        %2249 = vrot.lane.b32.xlu0 %v1847, 40
        %v2250 = vpop.permute.xlu0 %2249
        %v2252 = vsel %vm1388, %v2248, 0
        %v2255 = vsel %vm1452, %v2250, 0
        %2257 = vmatprep.subr.bf16.mxu0 0
        %2258 = vmatpush1.bf16.msra.mxu0 %v2255
        %2259 = vmatprep.subr.bf16.mxu0 0
        %2260 = vmatpush1.bf16.msra.mxu0 0
        %2261 = vmatprep.subr.bf16.mxu0 0
        %2262 = vmatpush1.bf16.msra.mxu0 0
        %2263 = vmatprep.subr.bf16.mxu0 0
        %2264 = vmatpush1.bf16.msra.mxu0 0
        %2265 = vmatprep.subr.bf16.mxu0 0
        %2266 = vmatpush1.bf16.msra.mxu0 0
        %2267 = vmatprep.subr.bf16.mxu0 0
        %2268 = vmatpush1.bf16.msra.mxu0 0
        %2269 = vmatprep.subr.bf16.mxu0 0
        %2270 = vmatpush1.bf16.msra.mxu0 0
        %2271 = vmatprep.subr.bf16.mxu0 0
        %2272 = vmatpush1.bf16.msra.mxu0 0
        %2273 = vmatprep.subr.bf16.mxu0 0
        %2274 = vmatpush1.bf16.msra.mxu0 0
        %2275 = vmatprep.subr.bf16.mxu0 0
        %2276 = vmatpush1.bf16.msra.mxu0 0
        %2277 = vmatprep.subr.bf16.mxu0 0
        %2278 = vmatpush1.bf16.msra.mxu0 0
        %2279 = vmatprep.subr.bf16.mxu0 0
        %2280 = vmatpush1.bf16.msra.mxu0 0
        %2281 = vmatprep.subr.bf16.mxu0 0
        %2282 = vmatpush1.bf16.msra.mxu0 0
        %2283 = vmatprep.subr.bf16.mxu0 0
        %2284 = vmatpush1.bf16.msra.mxu0 0
        %2285 = vmatprep.subr.bf16.mxu0 0
        %2286 = vmatpush1.bf16.msra.mxu0 0
        %2287 = vmatprep.subr.bf16.mxu0 0
        %2288 = vmatpush1.bf16.msra.mxu0 0
        %2289 = vmatprep.mubr.bf16.mxu0 0
        %2290 = vmatmul.mubr.bf16.gmra.mrb[0].mxu0 %v2252
        %v2291 = vpop.f32.mrb[0].mxu0
        %v2292 = vadd.f32 0.0, %v2291
        %v2293 = vpop.f32.mrb[0].mxu0
        %v2294 = vpop.f32.mrb[0].mxu0
        %v2295 = vpop.f32.mrb[0].mxu0
        %2296 = vdwg.mxu0
        %2298 = vrot.lane.b32.xlu0 %v2292, 24
        %v2299 = vpop.permute.xlu0 %2298
        %2301 = vst.msk [vmem:[#allocation2 + $0x8] sm:$0xff] %vm1843, %v2299
        %v2302 = vld [vmem:[#allocation2] sm:$0xff]
        %v2303 = vld [vmem:[#allocation2 + $0x8] sm:$0xff]
        %v2304 = vpack.c.bf16 %v2303, %v2302
        %v2305 = vld [vmem:[%s1270] sm:$0xf]
        %v2306 = vld [vmem:[%s1270 + $0x4] sm:$0xf]
        %v2307 = vld [vmem:[%s1270 + $0x8] sm:$0xf]
        %v2308 = vld [vmem:[%s1270 + $0xc] sm:$0xf]
        %v2309 = vld [vmem:[%s1047] sm:$0x1]
        %v2311 = vlaneseq
        %v2312 = vshrl.u32 %v2311, 7
        %v2313 = vsub.s32 0, %v2312
        %v2314 = vrot.slane %v2309, %v2313
        %v2320 = vunpack.c.l.b16 %v2305
        %v2321 = vunpack.c.l.b16 %v2306
        %v2322 = vunpack.c.l.b16 %v2307
        %v2323 = vunpack.c.l.b16 %v2308
        %v2324 = vpack.c.b16 %v2321, %v2320
        %v2325 = vpack.c.b16 %v2323, %v2322
        %v2329 = vsel %vm1338, %v2304, 0
        %2331 = vmatprep.subr.bf16.mxu0 0
        %2332 = vmatpush1.bf16.msra.mxu0 %v2324
        %2333 = vmatprep.subr.bf16.mxu0 0
        %2334 = vmatpush1.bf16.msra.mxu0 %v2325
        %2335 = vmatprep.subr.bf16.mxu0 0
        %2336 = vmatpush1.bf16.msra.mxu0 0
        %2337 = vmatprep.subr.bf16.mxu0 0
        %2338 = vmatpush1.bf16.msra.mxu0 0
        %2339 = vmatprep.subr.bf16.mxu0 0
        %2340 = vmatpush1.bf16.msra.mxu0 0
        %2341 = vmatprep.subr.bf16.mxu0 0
        %2342 = vmatpush1.bf16.msra.mxu0 0
        %2343 = vmatprep.subr.bf16.mxu0 0
        %2344 = vmatpush1.bf16.msra.mxu0 0
        %2345 = vmatprep.subr.bf16.mxu0 0
        %2346 = vmatpush1.bf16.msra.mxu0 0
        %2347 = vmatprep.subr.bf16.mxu0 0
        %2348 = vmatpush1.bf16.msra.mxu0 0
        %2349 = vmatprep.subr.bf16.mxu0 0
        %2350 = vmatpush1.bf16.msra.mxu0 0
        %2351 = vmatprep.subr.bf16.mxu0 0
        %2352 = vmatpush1.bf16.msra.mxu0 0
        %2353 = vmatprep.subr.bf16.mxu0 0
        %2354 = vmatpush1.bf16.msra.mxu0 0
        %2355 = vmatprep.subr.bf16.mxu0 0
        %2356 = vmatpush1.bf16.msra.mxu0 0
        %2357 = vmatprep.subr.bf16.mxu0 0
        %2358 = vmatpush1.bf16.msra.mxu0 0
        %2359 = vmatprep.subr.bf16.mxu0 0
        %2360 = vmatpush1.bf16.msra.mxu0 0
        %2361 = vmatprep.subr.bf16.mxu0 0
        %2362 = vmatpush1.bf16.msra.mxu0 0
        %2363 = vmatprep.mubr.bf16.mxu0 0
        %2364 = vmatmul.mubr.bf16.gmra.mrb[0].mxu0 %v2329
        %v2365 = vpop.f32.mrb[0].mxu0
        %v2366 = vadd.f32 %v2314, %v2365
        %v2367 = vpop.f32.mrb[0].mxu0
        %v2368 = vpop.f32.mrb[0].mxu0
        %v2369 = vadd.f32 %v2314, %v2368
        %v2370 = vpop.f32.mrb[0].mxu0
        %2371 = vdwg.mxu0
        %v2372 = vadd.f32 %v1309, %v2366
        %v2373 = vadd.f32 %v1310, %v2369
        %v2374 = vsel %vm1338, %v2372, 0.0
        %2375 = vadd.xlane.f32.xlu0 %v2374
        %v2376 = vpop.xlane.xlu0 %2375
        %v2377 = vsel %vm1338, %v2373, 0.0
        %2378 = vadd.xlane.f32.xlu0 %v2377
        %v2379 = vpop.xlane.xlu0 %2378
        %v2380 = vrcp.pop 32.0
        %v2381 = vmul.f32 %v2376, %v2380
        %v2382 = vmul.f32 %v2379, %v2380
        %v2383 = vsub.f32 %v2372, %v2381
        %v2384 = vsub.f32 %v2373, %v2382
        %v2385 = vmul.f32 %v2383, %v2383
        %v2386 = vmul.f32 %v2384, %v2384
        %v2387 = vsel %vm1338, %v2385, 0.0
        %2388 = vadd.xlane.f32.xlu0 %v2387
        %v2389 = vpop.xlane.xlu0 %2388
        %v2390 = vsel %vm1338, %v2386, 0.0
        %2391 = vadd.xlane.f32.xlu0 %v2390
        %v2392 = vpop.xlane.xlu0 %2391
        %v2393 = vmul.f32 %v2389, %v2380
        %v2394 = vmul.f32 %v2392, %v2380
        %v2395 = vadd.f32 %v2393, 1e-05
        %v2396 = vadd.f32 %v2394, 1e-05
        %v2397 = vrsqrt.pop %v2395
        %v2398 = vrsqrt.pop %v2396
        %v2399 = vmul.f32 %v2383, %v2397
        %v2400 = vmul.f32 %v2384, %v2398
        %v2401 = vld [vmem:[%s1088] sm:$0x1]
        %v2403 = vlaneseq
        %v2404 = vshrl.u32 %v2403, 7
        %v2405 = vsub.s32 0, %v2404
        %v2406 = vrot.slane %v2401, %v2405
        %v2408 = vmul.f32 %v2399, %v2406
        %v2409 = vmul.f32 %v2400, %v2406
        %v2410 = vld [vmem:[%s1096] sm:$0x1]
        %v2412 = vlaneseq
        %v2413 = vshrl.u32 %v2412, 7
        %v2414 = vsub.s32 0, %v2413
        %v2415 = vrot.slane %v2410, %v2414
        %v2417 = vadd.f32 %v2408, %v2415
        %v2418 = vadd.f32 %v2409, %v2415
        %v2419 = vpack.c.bf16 %v2418, %v2417
        %v2420 = vld [vmem:[%s1275] sm:$0xf]
        %v2421 = vld [vmem:[%s1275 + $0x4] sm:$0xf]
        %v2422 = vld [vmem:[%s1275 + $0x8] sm:$0xf]
        %v2423 = vld [vmem:[%s1275 + $0xc] sm:$0xf]
        %v2424 = vld [vmem:[%s1055] sm:$0x1]
        %v2426 = vlaneseq
        %v2427 = vshrl.u32 %v2426, 7
        %v2428 = vsub.s32 0, %v2427
        %v2429 = vrot.slane %v2424, %v2428
        %v2435 = vunpack.c.l.b16 %v2420
        %v2436 = vunpack.c.l.b16 %v2421
        %v2437 = vunpack.c.l.b16 %v2422
        %v2438 = vunpack.c.l.b16 %v2423
        %v2439 = vpack.c.b16 %v2436, %v2435
        %v2440 = vpack.c.b16 %v2438, %v2437
        %v2444 = vsel %vm1338, %v2419, 0
        %2446 = vmatprep.subr.bf16.mxu0 0
        %2447 = vmatpush1.bf16.msra.mxu0 %v2439
        %2448 = vmatprep.subr.bf16.mxu0 0
        %2449 = vmatpush1.bf16.msra.mxu0 %v2440
        %2450 = vmatprep.subr.bf16.mxu0 0
        %2451 = vmatpush1.bf16.msra.mxu0 0
        %2452 = vmatprep.subr.bf16.mxu0 0
        %2453 = vmatpush1.bf16.msra.mxu0 0
        %2454 = vmatprep.subr.bf16.mxu0 0
        %2455 = vmatpush1.bf16.msra.mxu0 0
        %2456 = vmatprep.subr.bf16.mxu0 0
        %2457 = vmatpush1.bf16.msra.mxu0 0
        %2458 = vmatprep.subr.bf16.mxu0 0
        %2459 = vmatpush1.bf16.msra.mxu0 0
        %2460 = vmatprep.subr.bf16.mxu0 0
        %2461 = vmatpush1.bf16.msra.mxu0 0
        %2462 = vmatprep.subr.bf16.mxu0 0
        %2463 = vmatpush1.bf16.msra.mxu0 0
        %2464 = vmatprep.subr.bf16.mxu0 0
        %2465 = vmatpush1.bf16.msra.mxu0 0
        %2466 = vmatprep.subr.bf16.mxu0 0
        %2467 = vmatpush1.bf16.msra.mxu0 0
        %2468 = vmatprep.subr.bf16.mxu0 0
        %2469 = vmatpush1.bf16.msra.mxu0 0
        %2470 = vmatprep.subr.bf16.mxu0 0
        %2471 = vmatpush1.bf16.msra.mxu0 0
        %2472 = vmatprep.subr.bf16.mxu0 0
        %2473 = vmatpush1.bf16.msra.mxu0 0
        %2474 = vmatprep.subr.bf16.mxu0 0
        %2475 = vmatpush1.bf16.msra.mxu0 0
        %2476 = vmatprep.subr.bf16.mxu0 0
        %2477 = vmatpush1.bf16.msra.mxu0 0
        %2478 = vmatprep.mubr.bf16.mxu0 0
        %2479 = vmatmul.mubr.bf16.gmra.mrb[0].mxu0 %v2444
        %v2480 = vpop.f32.mrb[0].mxu0
        %v2481 = vadd.f32 %v2429, %v2480
        %v2482 = vpop.f32.mrb[0].mxu0
        %v2483 = vpop.f32.mrb[0].mxu0
        %v2484 = vadd.f32 %v2429, %v2483
        %v2485 = vpop.f32.mrb[0].mxu0
        %2486 = vdwg.mxu0
        %v2487 = vpack.c.bf16 %v2484, %v2481
        %v2488 = vld [vmem:[%s1280] sm:$0xf]
        %v2489 = vld [vmem:[%s1280 + $0x4] sm:$0xf]
        %v2490 = vld [vmem:[%s1280 + $0x8] sm:$0xf]
        %v2491 = vld [vmem:[%s1280 + $0xc] sm:$0xf]
        %v2492 = vld [vmem:[%s1063] sm:$0x1]
        %v2494 = vlaneseq
        %v2495 = vshrl.u32 %v2494, 7
        %v2496 = vsub.s32 0, %v2495
        %v2497 = vrot.slane %v2492, %v2496
        %v2502 = vunpack.c.l.b16 %v1311
        %v2503 = vunpack.c.l.b16 %v1312
        %v2504 = vunpack.c.l.b16 %v1313
        %v2505 = vpack.c.b16 %v2503, %v2502
        %v2506 = vpack.c.b16 %v2504, %v2504
        %v2511 = vunpack.c.l.b16 %v2488
        %v2512 = vunpack.c.l.b16 %v2489
        %v2513 = vunpack.c.l.b16 %v2490
        %v2514 = vunpack.c.l.b16 %v2491
        %v2515 = vpack.c.b16 %v2512, %v2511
        %v2516 = vpack.c.b16 %v2514, %v2513
        %v2520 = vsel %vm1338, %v2505, 0
        %v2523 = vsel %vm1338, %v2506, 0
        %2525 = vmatprep.subr.bf16.mxu0 0
        %2526 = vmatpush1.bf16.msra.mxu0 %v2515
        %2527 = vmatprep.subr.bf16.mxu0 0
        %2528 = vmatpush1.bf16.msra.mxu0 %v2516
        %2529 = vmatprep.subr.bf16.mxu0 0
        %2530 = vmatpush1.bf16.msra.mxu0 0
        %2531 = vmatprep.subr.bf16.mxu0 0
        %2532 = vmatpush1.bf16.msra.mxu0 0
        %2533 = vmatprep.subr.bf16.mxu0 0
        %2534 = vmatpush1.bf16.msra.mxu0 0
        %2535 = vmatprep.subr.bf16.mxu0 0
        %2536 = vmatpush1.bf16.msra.mxu0 0
        %2537 = vmatprep.subr.bf16.mxu0 0
        %2538 = vmatpush1.bf16.msra.mxu0 0
        %2539 = vmatprep.subr.bf16.mxu0 0
        %2540 = vmatpush1.bf16.msra.mxu0 0
        %2541 = vmatprep.subr.bf16.mxu0 0
        %2542 = vmatpush1.bf16.msra.mxu0 0
        %2543 = vmatprep.subr.bf16.mxu0 0
        %2544 = vmatpush1.bf16.msra.mxu0 0
        %2545 = vmatprep.subr.bf16.mxu0 0
        %2546 = vmatpush1.bf16.msra.mxu0 0
        %2547 = vmatprep.subr.bf16.mxu0 0
        %2548 = vmatpush1.bf16.msra.mxu0 0
        %2549 = vmatprep.subr.bf16.mxu0 0
        %2550 = vmatpush1.bf16.msra.mxu0 0
        %2551 = vmatprep.subr.bf16.mxu0 0
        %2552 = vmatpush1.bf16.msra.mxu0 0
        %2553 = vmatprep.subr.bf16.mxu0 0
        %2554 = vmatpush1.bf16.msra.mxu0 0
        %2555 = vmatprep.subr.bf16.mxu0 0
        %2556 = vmatpush1.bf16.msra.mxu0 0
        %2557 = vmatprep.mubr.bf16.mxu0 0
        %2558 = vmatmul.mubr.bf16.gmra.mrb[0].mxu0 %v2520
        %v2559 = vpop.f32.mrb[0].mxu0
        %v2560 = vadd.f32 %v2497, %v2559
        %v2561 = vpop.f32.mrb[0].mxu0
        %v2562 = vpop.f32.mrb[0].mxu0
        %v2563 = vadd.f32 %v2497, %v2562
        %v2564 = vpop.f32.mrb[0].mxu0
        %2565 = vmatprep.mubr.bf16.mxu0 0
        %2566 = vmatmul.mubr.bf16.gmra.mrb[0].mxu0 %v2523
        %v2567 = vpop.f32.mrb[0].mxu0
        %v2568 = vadd.f32 %v2497, %v2567
        %v2569 = vpop.f32.mrb[0].mxu0
        %v2570 = vpop.f32.mrb[0].mxu0
        %v2571 = vpop.f32.mrb[0].mxu0
        %2572 = vdwg.mxu0
        %v2573 = vpack.c.bf16 %v2563, %v2560
        %v2574 = vpack.c.bf16 %v2568, %v2568
        %v2575 = vld [vmem:[#allocation9] sm:$0xff]
        %v2577 = vsel %vm1388, %v2487, 0
        %v2580 = vsel %vm1388, %v2573, 0
        %2582 = vmatprep.subr.bf16.mxu0 0
        %2583 = vmatpush1.bf16.xpose.msra.mxu0 %v2580
        %2584 = vmatprep.subr.bf16.mxu0 0
        %2585 = vmatpush1.bf16.xpose.msra.mxu0 0
        %2586 = vmatprep.subr.bf16.mxu0 0
        %2587 = vmatpush1.bf16.xpose.msra.mxu0 0
        %2588 = vmatprep.subr.bf16.mxu0 0
        %2589 = vmatpush1.bf16.xpose.msra.mxu0 0
        %2590 = vmatprep.subr.bf16.mxu0 0
        %2591 = vmatpush1.bf16.xpose.msra.mxu0 0
        %2592 = vmatprep.subr.bf16.mxu0 0
        %2593 = vmatpush1.bf16.xpose.msra.mxu0 0
        %2594 = vmatprep.subr.bf16.mxu0 0
        %2595 = vmatpush1.bf16.xpose.msra.mxu0 0
        %2596 = vmatprep.subr.bf16.mxu0 0
        %2597 = vmatpush1.bf16.xpose.msra.mxu0 0
        %2598 = vmatprep.subr.bf16.mxu0 0
        %2599 = vmatpush1.bf16.xpose.msra.mxu0 0
        %2600 = vmatprep.subr.bf16.mxu0 0
        %2601 = vmatpush1.bf16.xpose.msra.mxu0 0
        %2602 = vmatprep.subr.bf16.mxu0 0
        %2603 = vmatpush1.bf16.xpose.msra.mxu0 0
        %2604 = vmatprep.subr.bf16.mxu0 0
        %2605 = vmatpush1.bf16.xpose.msra.mxu0 0
        %2606 = vmatprep.subr.bf16.mxu0 0
        %2607 = vmatpush1.bf16.xpose.msra.mxu0 0
        %2608 = vmatprep.subr.bf16.mxu0 0
        %2609 = vmatpush1.bf16.xpose.msra.mxu0 0
        %2610 = vmatprep.subr.bf16.mxu0 0
        %2611 = vmatpush1.bf16.xpose.msra.mxu0 0
        %2612 = vmatprep.subr.bf16.mxu0 0
        %2613 = vmatpush1.bf16.xpose.msra.mxu0 0
        %2614 = vmatprep.mubr.bf16.mxu0 0
        %2615 = vmatmul.mubr.bf16.gmra.mrb[0].mxu0 %v2577
        %v2616 = vpop.f32.mrb[0].mxu0
        %v2617 = vadd.f32 %v2575, %v2616
        %v2618 = vpop.f32.mrb[0].mxu0
        %v2619 = vpop.f32.mrb[0].mxu0
        %v2620 = vpop.f32.mrb[0].mxu0
        %2621 = vdwg.mxu0
        %vm2622 = vcmask 80896
        %v2623 = vsel %vm2622, %v2617, -inf
        %2624 = vmax.xlane.f32.xlu0 %v2623
        %v2625 = vpop.xlane.xlu0 %2624
        %v2626 = vsub.f32 %v2617, %v2625
        %v2627 = vmul.f32 %v2626, 1.442695
        %v2628 = vpow.pop %v2627
        %v2629 = vsel %vm2622, %v2628, 0.0
        %2630 = vadd.xlane.f32.xlu0 %v2629
        %v2631 = vpop.xlane.xlu0 %2630
        %v2632 = vrcp.pop %v2631
        %v2633 = vmul.f32 %v2628, %v2632
        %v2634 = vpack.c.bf16 %v2633, %v2633
        %2636 = vrot.lane.b32.xlu0 %v2573, 96
        %v2637 = vpop.permute.xlu0 %2636
        %v2639 = vsel %vm2622, %v2634, 0
        %vm2641 = vcmask 1044480
        %v2643 = vsel %vm2641, %v2637, 0
        %2645 = vmatprep.subr.bf16.mxu0 0
        %2646 = vmatpush1.bf16.msra.mxu0 %v2643
        %2647 = vmatprep.subr.bf16.mxu0 0
        %2648 = vmatpush1.bf16.msra.mxu0 0
        %2649 = vmatprep.subr.bf16.mxu0 0
        %2650 = vmatpush1.bf16.msra.mxu0 0
        %2651 = vmatprep.subr.bf16.mxu0 0
        %2652 = vmatpush1.bf16.msra.mxu0 0
        %2653 = vmatprep.subr.bf16.mxu0 0
        %2654 = vmatpush1.bf16.msra.mxu0 0
        %2655 = vmatprep.subr.bf16.mxu0 0
        %2656 = vmatpush1.bf16.msra.mxu0 0
        %2657 = vmatprep.subr.bf16.mxu0 0
        %2658 = vmatpush1.bf16.msra.mxu0 0
        %2659 = vmatprep.subr.bf16.mxu0 0
        %2660 = vmatpush1.bf16.msra.mxu0 0
        %2661 = vmatprep.subr.bf16.mxu0 0
        %2662 = vmatpush1.bf16.msra.mxu0 0
        %2663 = vmatprep.subr.bf16.mxu0 0
        %2664 = vmatpush1.bf16.msra.mxu0 0
        %2665 = vmatprep.subr.bf16.mxu0 0
        %2666 = vmatpush1.bf16.msra.mxu0 0
        %2667 = vmatprep.subr.bf16.mxu0 0
        %2668 = vmatpush1.bf16.msra.mxu0 0
        %2669 = vmatprep.subr.bf16.mxu0 0
        %2670 = vmatpush1.bf16.msra.mxu0 0
        %2671 = vmatprep.subr.bf16.mxu0 0
        %2672 = vmatpush1.bf16.msra.mxu0 0
        %2673 = vmatprep.subr.bf16.mxu0 0
        %2674 = vmatpush1.bf16.msra.mxu0 0
        %2675 = vmatprep.subr.bf16.mxu0 0
        %2676 = vmatpush1.bf16.msra.mxu0 0
        %2677 = vmatprep.mubr.bf16.mxu0 0
        %2678 = vmatmul.mubr.bf16.gmra.mrb[0].mxu0 %v2639
        %v2679 = vpop.f32.mrb[0].mxu0
        %v2680 = vadd.f32 0.0, %v2679
        %v2681 = vpop.f32.mrb[0].mxu0
        %v2682 = vpop.f32.mrb[0].mxu0
        %v2683 = vpop.f32.mrb[0].mxu0
        %2684 = vdwg.mxu0
        %2685 = vst.msk [vmem:[#allocation2] sm:$0xff] %vm1388, %v2680
        // Predicated region
        $region181: #{tpu_custom_call.1} parent=115 // pred_check
          %p2686 = pneg %p1299
        $region182: #{tpu_custom_call.1} parent=115 // pred_check_branch
          %2688 = sbr.rel (%p2686) target = $region184
        $region183: #{tpu_custom_call.1} parent=115 // pred_region
          %2689 = vst.msk [vmem:[#allocation23] sm:$0xff] %vm2622, %v2633
        $region184: #{tpu_custom_call.1} parent=115 // pred_fallthru
          _
        %2691 = vrot.lane.b32.xlu0 %v2487, 120
        %v2692 = vpop.permute.xlu0 %2691
        %2693 = vrot.lane.b32.xlu0 %v2573, 120
        %v2694 = vpop.permute.xlu0 %2693
        %v2696 = vsel %vm1388, %v2692, 0
        %v2699 = vsel %vm1388, %v2694, 0
        %2701 = vmatprep.subr.bf16.mxu0 0
        %2702 = vmatpush1.bf16.xpose.msra.mxu0 %v2699
        %2703 = vmatprep.subr.bf16.mxu0 0
        %2704 = vmatpush1.bf16.xpose.msra.mxu0 0
        %2705 = vmatprep.subr.bf16.mxu0 0
        %2706 = vmatpush1.bf16.xpose.msra.mxu0 0
        %2707 = vmatprep.subr.bf16.mxu0 0
        %2708 = vmatpush1.bf16.xpose.msra.mxu0 0
        %2709 = vmatprep.subr.bf16.mxu0 0
        %2710 = vmatpush1.bf16.xpose.msra.mxu0 0
        %2711 = vmatprep.subr.bf16.mxu0 0
        %2712 = vmatpush1.bf16.xpose.msra.mxu0 0
        %2713 = vmatprep.subr.bf16.mxu0 0
        %2714 = vmatpush1.bf16.xpose.msra.mxu0 0
        %2715 = vmatprep.subr.bf16.mxu0 0
        %2716 = vmatpush1.bf16.xpose.msra.mxu0 0
        %2717 = vmatprep.subr.bf16.mxu0 0
        %2718 = vmatpush1.bf16.xpose.msra.mxu0 0
        %2719 = vmatprep.subr.bf16.mxu0 0
        %2720 = vmatpush1.bf16.xpose.msra.mxu0 0
        %2721 = vmatprep.subr.bf16.mxu0 0
        %2722 = vmatpush1.bf16.xpose.msra.mxu0 0
        %2723 = vmatprep.subr.bf16.mxu0 0
        %2724 = vmatpush1.bf16.xpose.msra.mxu0 0
        %2725 = vmatprep.subr.bf16.mxu0 0
        %2726 = vmatpush1.bf16.xpose.msra.mxu0 0
        %2727 = vmatprep.subr.bf16.mxu0 0
        %2728 = vmatpush1.bf16.xpose.msra.mxu0 0
        %2729 = vmatprep.subr.bf16.mxu0 0
        %2730 = vmatpush1.bf16.xpose.msra.mxu0 0
        %2731 = vmatprep.subr.bf16.mxu0 0
        %2732 = vmatpush1.bf16.xpose.msra.mxu0 0
        %2733 = vmatprep.mubr.bf16.mxu0 0
        %2734 = vmatmul.mubr.bf16.gmra.mrb[0].mxu0 %v2696
        %v2735 = vpop.f32.mrb[0].mxu0
        %v2736 = vadd.f32 %v2575, %v2735
        %v2737 = vpop.f32.mrb[0].mxu0
        %v2738 = vpop.f32.mrb[0].mxu0
        %v2739 = vpop.f32.mrb[0].mxu0
        %2740 = vdwg.mxu0
        %v2741 = vsel %vm2622, %v2736, -inf
        %2742 = vmax.xlane.f32.xlu0 %v2741
        %v2743 = vpop.xlane.xlu0 %2742
        %v2744 = vsub.f32 %v2736, %v2743
        %v2745 = vmul.f32 %v2744, 1.442695
        %v2746 = vpow.pop %v2745
        %v2747 = vsel %vm2622, %v2746, 0.0
        %2748 = vadd.xlane.f32.xlu0 %v2747
        %v2749 = vpop.xlane.xlu0 %2748
        %v2750 = vrcp.pop %v2749
        %v2751 = vmul.f32 %v2746, %v2750
        %v2752 = vpack.c.bf16 %v2751, %v2751
        %2753 = vrot.lane.b32.xlu0 %v2573, 88
        %v2754 = vpop.permute.xlu0 %2753
        %v2756 = vsel %vm2622, %v2752, 0
        %v2759 = vsel %vm2641, %v2754, 0
        %2761 = vmatprep.subr.bf16.mxu0 0
        %2762 = vmatpush1.bf16.msra.mxu0 %v2759
        %2763 = vmatprep.subr.bf16.mxu0 0
        %2764 = vmatpush1.bf16.msra.mxu0 0
        %2765 = vmatprep.subr.bf16.mxu0 0
        %2766 = vmatpush1.bf16.msra.mxu0 0
        %2767 = vmatprep.subr.bf16.mxu0 0
        %2768 = vmatpush1.bf16.msra.mxu0 0
        %2769 = vmatprep.subr.bf16.mxu0 0
        %2770 = vmatpush1.bf16.msra.mxu0 0
        %2771 = vmatprep.subr.bf16.mxu0 0
        %2772 = vmatpush1.bf16.msra.mxu0 0
        %2773 = vmatprep.subr.bf16.mxu0 0
        %2774 = vmatpush1.bf16.msra.mxu0 0
        %2775 = vmatprep.subr.bf16.mxu0 0
        %2776 = vmatpush1.bf16.msra.mxu0 0
        %2777 = vmatprep.subr.bf16.mxu0 0
        %2778 = vmatpush1.bf16.msra.mxu0 0
        %2779 = vmatprep.subr.bf16.mxu0 0
        %2780 = vmatpush1.bf16.msra.mxu0 0
        %2781 = vmatprep.subr.bf16.mxu0 0
        %2782 = vmatpush1.bf16.msra.mxu0 0
        %2783 = vmatprep.subr.bf16.mxu0 0
        %2784 = vmatpush1.bf16.msra.mxu0 0
        %2785 = vmatprep.subr.bf16.mxu0 0
        %2786 = vmatpush1.bf16.msra.mxu0 0
        %2787 = vmatprep.subr.bf16.mxu0 0
        %2788 = vmatpush1.bf16.msra.mxu0 0
        %2789 = vmatprep.subr.bf16.mxu0 0
        %2790 = vmatpush1.bf16.msra.mxu0 0
        %2791 = vmatprep.subr.bf16.mxu0 0
        %2792 = vmatpush1.bf16.msra.mxu0 0
        %2793 = vmatprep.mubr.bf16.mxu0 0
        %2794 = vmatmul.mubr.bf16.gmra.mrb[0].mxu0 %v2756
        %v2795 = vpop.f32.mrb[0].mxu0
        %v2796 = vadd.f32 0.0, %v2795
        %v2797 = vpop.f32.mrb[0].mxu0
        %v2798 = vpop.f32.mrb[0].mxu0
        %v2799 = vpop.f32.mrb[0].mxu0
        %2800 = vdwg.mxu0
        %2802 = vrot.lane.b32.xlu0 %v2796, 8
        %v2803 = vpop.permute.xlu0 %2802
        %2805 = vst.msk [vmem:[#allocation2] sm:$0xff] %vm1611, %v2803
        // Predicated region
        $region185: #{tpu_custom_call.1} parent=115 // pred_check
          %p2806 = pneg %p1299
        $region186: #{tpu_custom_call.1} parent=115 // pred_check_branch
          %2808 = sbr.rel (%p2806) target = $region188
        $region187: #{tpu_custom_call.1} parent=115 // pred_region
          %s2809 = scalar_lea.vmem [#allocation23], 8
          %2810 = vst.msk [vmem:[%s2809] sm:$0xff] %vm2622, %v2751
        $region188: #{tpu_custom_call.1} parent=115 // pred_fallthru
          _
        %2811 = vrot.lane.b32.xlu0 %v2487, 112
        %v2812 = vpop.permute.xlu0 %2811
        %2813 = vrot.lane.b32.xlu0 %v2573, 112
        %v2814 = vpop.permute.xlu0 %2813
        %v2816 = vsel %vm1388, %v2812, 0
        %v2819 = vsel %vm1388, %v2814, 0
        %2821 = vmatprep.subr.bf16.mxu0 0
        %2822 = vmatpush1.bf16.xpose.msra.mxu0 %v2819
        %2823 = vmatprep.subr.bf16.mxu0 0
        %2824 = vmatpush1.bf16.xpose.msra.mxu0 0
        %2825 = vmatprep.subr.bf16.mxu0 0
        %2826 = vmatpush1.bf16.xpose.msra.mxu0 0
        %2827 = vmatprep.subr.bf16.mxu0 0
        %2828 = vmatpush1.bf16.xpose.msra.mxu0 0
        %2829 = vmatprep.subr.bf16.mxu0 0
        %2830 = vmatpush1.bf16.xpose.msra.mxu0 0
        %2831 = vmatprep.subr.bf16.mxu0 0
        %2832 = vmatpush1.bf16.xpose.msra.mxu0 0
        %2833 = vmatprep.subr.bf16.mxu0 0
        %2834 = vmatpush1.bf16.xpose.msra.mxu0 0
        %2835 = vmatprep.subr.bf16.mxu0 0
        %2836 = vmatpush1.bf16.xpose.msra.mxu0 0
        %2837 = vmatprep.subr.bf16.mxu0 0
        %2838 = vmatpush1.bf16.xpose.msra.mxu0 0
        %2839 = vmatprep.subr.bf16.mxu0 0
        %2840 = vmatpush1.bf16.xpose.msra.mxu0 0
        %2841 = vmatprep.subr.bf16.mxu0 0
        %2842 = vmatpush1.bf16.xpose.msra.mxu0 0
        %2843 = vmatprep.subr.bf16.mxu0 0
        %2844 = vmatpush1.bf16.xpose.msra.mxu0 0
        %2845 = vmatprep.subr.bf16.mxu0 0
        %2846 = vmatpush1.bf16.xpose.msra.mxu0 0
        %2847 = vmatprep.subr.bf16.mxu0 0
        %2848 = vmatpush1.bf16.xpose.msra.mxu0 0
        %2849 = vmatprep.subr.bf16.mxu0 0
        %2850 = vmatpush1.bf16.xpose.msra.mxu0 0
        %2851 = vmatprep.subr.bf16.mxu0 0
        %2852 = vmatpush1.bf16.xpose.msra.mxu0 0
        %2853 = vmatprep.mubr.bf16.mxu0 0
        %2854 = vmatmul.mubr.bf16.gmra.mrb[0].mxu0 %v2816
        %v2855 = vpop.f32.mrb[0].mxu0
        %v2856 = vadd.f32 %v2575, %v2855
        %v2857 = vpop.f32.mrb[0].mxu0
        %v2858 = vpop.f32.mrb[0].mxu0
        %v2859 = vpop.f32.mrb[0].mxu0
        %2860 = vdwg.mxu0
        %v2861 = vsel %vm2622, %v2856, -inf
        %2862 = vmax.xlane.f32.xlu0 %v2861
        %v2863 = vpop.xlane.xlu0 %2862
        %v2864 = vsub.f32 %v2856, %v2863
        %v2865 = vmul.f32 %v2864, 1.442695
        %v2866 = vpow.pop %v2865
        %v2867 = vsel %vm2622, %v2866, 0.0
        %2868 = vadd.xlane.f32.xlu0 %v2867
        %v2869 = vpop.xlane.xlu0 %2868
        %v2870 = vrcp.pop %v2869
        %v2871 = vmul.f32 %v2866, %v2870
        %v2872 = vpack.c.bf16 %v2871, %v2871
        %2873 = vrot.lane.b32.xlu0 %v2573, 80
        %v2874 = vpop.permute.xlu0 %2873
        %v2876 = vsel %vm2622, %v2872, 0
        %v2879 = vsel %vm2641, %v2874, 0
        %2881 = vmatprep.subr.bf16.mxu0 0
        %2882 = vmatpush1.bf16.msra.mxu0 %v2879
        %2883 = vmatprep.subr.bf16.mxu0 0
        %2884 = vmatpush1.bf16.msra.mxu0 0
        %2885 = vmatprep.subr.bf16.mxu0 0
        %2886 = vmatpush1.bf16.msra.mxu0 0
        %2887 = vmatprep.subr.bf16.mxu0 0
        %2888 = vmatpush1.bf16.msra.mxu0 0
        %2889 = vmatprep.subr.bf16.mxu0 0
        %2890 = vmatpush1.bf16.msra.mxu0 0
        %2891 = vmatprep.subr.bf16.mxu0 0
        %2892 = vmatpush1.bf16.msra.mxu0 0
        %2893 = vmatprep.subr.bf16.mxu0 0
        %2894 = vmatpush1.bf16.msra.mxu0 0
        %2895 = vmatprep.subr.bf16.mxu0 0
        %2896 = vmatpush1.bf16.msra.mxu0 0
        %2897 = vmatprep.subr.bf16.mxu0 0
        %2898 = vmatpush1.bf16.msra.mxu0 0
        %2899 = vmatprep.subr.bf16.mxu0 0
        %2900 = vmatpush1.bf16.msra.mxu0 0
        %2901 = vmatprep.subr.bf16.mxu0 0
        %2902 = vmatpush1.bf16.msra.mxu0 0
        %2903 = vmatprep.subr.bf16.mxu0 0
        %2904 = vmatpush1.bf16.msra.mxu0 0
        %2905 = vmatprep.subr.bf16.mxu0 0
        %2906 = vmatpush1.bf16.msra.mxu0 0
        %2907 = vmatprep.subr.bf16.mxu0 0
        %2908 = vmatpush1.bf16.msra.mxu0 0
        %2909 = vmatprep.subr.bf16.mxu0 0
        %2910 = vmatpush1.bf16.msra.mxu0 0
        %2911 = vmatprep.subr.bf16.mxu0 0
        %2912 = vmatpush1.bf16.msra.mxu0 0
        %2913 = vmatprep.mubr.bf16.mxu0 0
        %2914 = vmatmul.mubr.bf16.gmra.mrb[0].mxu0 %v2876
        %v2915 = vpop.f32.mrb[0].mxu0
        %v2916 = vadd.f32 0.0, %v2915
        %v2917 = vpop.f32.mrb[0].mxu0
        %v2918 = vpop.f32.mrb[0].mxu0
        %v2919 = vpop.f32.mrb[0].mxu0
        %2920 = vdwg.mxu0
        %2922 = vrot.lane.b32.xlu0 %v2916, 16
        %v2923 = vpop.permute.xlu0 %2922
        %2925 = vst.msk [vmem:[#allocation2] sm:$0xff] %vm1727, %v2923
        // Predicated region
        $region189: #{tpu_custom_call.1} parent=115 // pred_check
          %p2926 = pneg %p1299
        $region190: #{tpu_custom_call.1} parent=115 // pred_check_branch
          %2928 = sbr.rel (%p2926) target = $region192
        $region191: #{tpu_custom_call.1} parent=115 // pred_region
          %s2929 = scalar_lea.vmem [#allocation23], 16
          %2930 = vst.msk [vmem:[%s2929] sm:$0xff] %vm2622, %v2871
        $region192: #{tpu_custom_call.1} parent=115 // pred_fallthru
          _
        %2931 = vrot.lane.b32.xlu0 %v2487, 104
        %v2932 = vpop.permute.xlu0 %2931
        %2933 = vrot.lane.b32.xlu0 %v2573, 104
        %v2934 = vpop.permute.xlu0 %2933
        %v2936 = vsel %vm1388, %v2932, 0
        %v2939 = vsel %vm1388, %v2934, 0
        %2941 = vmatprep.subr.bf16.mxu0 0
        %2942 = vmatpush1.bf16.xpose.msra.mxu0 %v2939
        %2943 = vmatprep.subr.bf16.mxu0 0
        %2944 = vmatpush1.bf16.xpose.msra.mxu0 0
        %2945 = vmatprep.subr.bf16.mxu0 0
        %2946 = vmatpush1.bf16.xpose.msra.mxu0 0
        %2947 = vmatprep.subr.bf16.mxu0 0
        %2948 = vmatpush1.bf16.xpose.msra.mxu0 0
        %2949 = vmatprep.subr.bf16.mxu0 0
        %2950 = vmatpush1.bf16.xpose.msra.mxu0 0
        %2951 = vmatprep.subr.bf16.mxu0 0
        %2952 = vmatpush1.bf16.xpose.msra.mxu0 0
        %2953 = vmatprep.subr.bf16.mxu0 0
        %2954 = vmatpush1.bf16.xpose.msra.mxu0 0
        %2955 = vmatprep.subr.bf16.mxu0 0
        %2956 = vmatpush1.bf16.xpose.msra.mxu0 0
        %2957 = vmatprep.subr.bf16.mxu0 0
        %2958 = vmatpush1.bf16.xpose.msra.mxu0 0
        %2959 = vmatprep.subr.bf16.mxu0 0
        %2960 = vmatpush1.bf16.xpose.msra.mxu0 0
        %2961 = vmatprep.subr.bf16.mxu0 0
        %2962 = vmatpush1.bf16.xpose.msra.mxu0 0
        %2963 = vmatprep.subr.bf16.mxu0 0
        %2964 = vmatpush1.bf16.xpose.msra.mxu0 0
        %2965 = vmatprep.subr.bf16.mxu0 0
        %2966 = vmatpush1.bf16.xpose.msra.mxu0 0
        %2967 = vmatprep.subr.bf16.mxu0 0
        %2968 = vmatpush1.bf16.xpose.msra.mxu0 0
        %2969 = vmatprep.subr.bf16.mxu0 0
        %2970 = vmatpush1.bf16.xpose.msra.mxu0 0
        %2971 = vmatprep.subr.bf16.mxu0 0
        %2972 = vmatpush1.bf16.xpose.msra.mxu0 0
        %2973 = vmatprep.mubr.bf16.mxu0 0
        %2974 = vmatmul.mubr.bf16.gmra.mrb[0].mxu0 %v2936
        %v2975 = vpop.f32.mrb[0].mxu0
        %v2976 = vadd.f32 %v2575, %v2975
        %v2977 = vpop.f32.mrb[0].mxu0
        %v2978 = vpop.f32.mrb[0].mxu0
        %v2979 = vpop.f32.mrb[0].mxu0
        %2980 = vdwg.mxu0
        %v2981 = vsel %vm2622, %v2976, -inf
        %2982 = vmax.xlane.f32.xlu0 %v2981
        %v2983 = vpop.xlane.xlu0 %2982
        %v2984 = vsub.f32 %v2976, %v2983
        %v2985 = vmul.f32 %v2984, 1.442695
        %v2986 = vpow.pop %v2985
        %v2987 = vsel %vm2622, %v2986, 0.0
        %2988 = vadd.xlane.f32.xlu0 %v2987
        %v2989 = vpop.xlane.xlu0 %2988
        %v2990 = vrcp.pop %v2989
        %v2991 = vmul.f32 %v2986, %v2990
        %v2992 = vpack.c.bf16 %v2991, %v2991
        %2993 = vrot.lane.b32.xlu0 %v2573, 72
        %v2994 = vpop.permute.xlu0 %2993
        %v2996 = vsel %vm2622, %v2992, 0
        %v2999 = vsel %vm2641, %v2994, 0
        %3001 = vmatprep.subr.bf16.mxu0 0
        %3002 = vmatpush1.bf16.msra.mxu0 %v2999
        %3003 = vmatprep.subr.bf16.mxu0 0
        %3004 = vmatpush1.bf16.msra.mxu0 0
        %3005 = vmatprep.subr.bf16.mxu0 0
        %3006 = vmatpush1.bf16.msra.mxu0 0
        %3007 = vmatprep.subr.bf16.mxu0 0
        %3008 = vmatpush1.bf16.msra.mxu0 0
        %3009 = vmatprep.subr.bf16.mxu0 0
        %3010 = vmatpush1.bf16.msra.mxu0 0
        %3011 = vmatprep.subr.bf16.mxu0 0
        %3012 = vmatpush1.bf16.msra.mxu0 0
        %3013 = vmatprep.subr.bf16.mxu0 0
        %3014 = vmatpush1.bf16.msra.mxu0 0
        %3015 = vmatprep.subr.bf16.mxu0 0
        %3016 = vmatpush1.bf16.msra.mxu0 0
        %3017 = vmatprep.subr.bf16.mxu0 0
        %3018 = vmatpush1.bf16.msra.mxu0 0
        %3019 = vmatprep.subr.bf16.mxu0 0
        %3020 = vmatpush1.bf16.msra.mxu0 0
        %3021 = vmatprep.subr.bf16.mxu0 0
        %3022 = vmatpush1.bf16.msra.mxu0 0
        %3023 = vmatprep.subr.bf16.mxu0 0
        %3024 = vmatpush1.bf16.msra.mxu0 0
        %3025 = vmatprep.subr.bf16.mxu0 0
        %3026 = vmatpush1.bf16.msra.mxu0 0
        %3027 = vmatprep.subr.bf16.mxu0 0
        %3028 = vmatpush1.bf16.msra.mxu0 0
        %3029 = vmatprep.subr.bf16.mxu0 0
        %3030 = vmatpush1.bf16.msra.mxu0 0
        %3031 = vmatprep.subr.bf16.mxu0 0
        %3032 = vmatpush1.bf16.msra.mxu0 0
        %3033 = vmatprep.mubr.bf16.mxu0 0
        %3034 = vmatmul.mubr.bf16.gmra.mrb[0].mxu0 %v2996
        %v3035 = vpop.f32.mrb[0].mxu0
        %v3036 = vadd.f32 0.0, %v3035
        %v3037 = vpop.f32.mrb[0].mxu0
        %v3038 = vpop.f32.mrb[0].mxu0
        %v3039 = vpop.f32.mrb[0].mxu0
        %3040 = vdwg.mxu0
        %3042 = vrot.lane.b32.xlu0 %v3036, 24
        %v3043 = vpop.permute.xlu0 %3042
        %3045 = vst.msk [vmem:[#allocation2] sm:$0xff] %vm1843, %v3043
        // Predicated region
        $region193: #{tpu_custom_call.1} parent=115 // pred_check
          %p3046 = pneg %p1299
        $region194: #{tpu_custom_call.1} parent=115 // pred_check_branch
          %3048 = sbr.rel (%p3046) target = $region196
        $region195: #{tpu_custom_call.1} parent=115 // pred_region
          %s3049 = scalar_lea.vmem [#allocation23], 24
          %3050 = vst.msk [vmem:[%s3049] sm:$0xff] %vm2622, %v2991
        $region196: #{tpu_custom_call.1} parent=115 // pred_fallthru
          _
        %s3051 = scalar_lea.vmem [#allocation9], 8
        %v3052 = vld [vmem:[%s3051] sm:$0xff]
        %v3053 = vrot.slane %v2487, 4
        %vm3055 = vcmask 1042432
        %v3056 = vrot.slane %v2573, 5
        %v3057 = vrot.slane %v2574, 5
        %v3058 = vsel %vm3055, %v3056, %v3057
        %v3060 = vsel %vm1388, %v3053, 0
        %v3063 = vsel %vm1388, %v3058, 0
        %3065 = vmatprep.subr.bf16.mxu0 0
        %3066 = vmatpush1.bf16.xpose.msra.mxu0 %v3063
        %3067 = vmatprep.subr.bf16.mxu0 0
        %3068 = vmatpush1.bf16.xpose.msra.mxu0 0
        %3069 = vmatprep.subr.bf16.mxu0 0
        %3070 = vmatpush1.bf16.xpose.msra.mxu0 0
        %3071 = vmatprep.subr.bf16.mxu0 0
        %3072 = vmatpush1.bf16.xpose.msra.mxu0 0
        %3073 = vmatprep.subr.bf16.mxu0 0
        %3074 = vmatpush1.bf16.xpose.msra.mxu0 0
        %3075 = vmatprep.subr.bf16.mxu0 0
        %3076 = vmatpush1.bf16.xpose.msra.mxu0 0
        %3077 = vmatprep.subr.bf16.mxu0 0
        %3078 = vmatpush1.bf16.xpose.msra.mxu0 0
        %3079 = vmatprep.subr.bf16.mxu0 0
        %3080 = vmatpush1.bf16.xpose.msra.mxu0 0
        %3081 = vmatprep.subr.bf16.mxu0 0
        %3082 = vmatpush1.bf16.xpose.msra.mxu0 0
        %3083 = vmatprep.subr.bf16.mxu0 0
        %3084 = vmatpush1.bf16.xpose.msra.mxu0 0
        %3085 = vmatprep.subr.bf16.mxu0 0
        %3086 = vmatpush1.bf16.xpose.msra.mxu0 0
        %3087 = vmatprep.subr.bf16.mxu0 0
        %3088 = vmatpush1.bf16.xpose.msra.mxu0 0
        %3089 = vmatprep.subr.bf16.mxu0 0
        %3090 = vmatpush1.bf16.xpose.msra.mxu0 0
        %3091 = vmatprep.subr.bf16.mxu0 0
        %3092 = vmatpush1.bf16.xpose.msra.mxu0 0
        %3093 = vmatprep.subr.bf16.mxu0 0
        %3094 = vmatpush1.bf16.xpose.msra.mxu0 0
        %3095 = vmatprep.subr.bf16.mxu0 0
        %3096 = vmatpush1.bf16.xpose.msra.mxu0 0
        %3097 = vmatprep.mubr.bf16.mxu0 0
        %3098 = vmatmul.mubr.bf16.gmra.mrb[0].mxu0 %v3060
        %v3099 = vpop.f32.mrb[0].mxu0
        %v3100 = vadd.f32 %v3052, %v3099
        %v3101 = vpop.f32.mrb[0].mxu0
        %v3102 = vpop.f32.mrb[0].mxu0
        %v3103 = vpop.f32.mrb[0].mxu0
        %3104 = vdwg.mxu0
        %v3105 = vsel %vm2622, %v3100, -inf
        %3106 = vmax.xlane.f32.xlu0 %v3105
        %v3107 = vpop.xlane.xlu0 %3106
        %v3108 = vsub.f32 %v3100, %v3107
        %v3109 = vmul.f32 %v3108, 1.442695
        %v3110 = vpow.pop %v3109
        %v3111 = vsel %vm2622, %v3110, 0.0
        %3112 = vadd.xlane.f32.xlu0 %v3111
        %v3113 = vpop.xlane.xlu0 %3112
        %v3114 = vrcp.pop %v3113
        %v3115 = vmul.f32 %v3110, %v3114
        %v3116 = vpack.c.bf16 %v3115, %v3115
        %3117 = vrot.lane.b32.xlu0 %v3058, 96
        %v3118 = vpop.permute.xlu0 %3117
        %v3120 = vsel %vm2622, %v3116, 0
        %v3123 = vsel %vm2641, %v3118, 0
        %3125 = vmatprep.subr.bf16.mxu0 0
        %3126 = vmatpush1.bf16.msra.mxu0 %v3123
        %3127 = vmatprep.subr.bf16.mxu0 0
        %3128 = vmatpush1.bf16.msra.mxu0 0
        %3129 = vmatprep.subr.bf16.mxu0 0
        %3130 = vmatpush1.bf16.msra.mxu0 0
        %3131 = vmatprep.subr.bf16.mxu0 0
        %3132 = vmatpush1.bf16.msra.mxu0 0
        %3133 = vmatprep.subr.bf16.mxu0 0
        %3134 = vmatpush1.bf16.msra.mxu0 0
        %3135 = vmatprep.subr.bf16.mxu0 0
        %3136 = vmatpush1.bf16.msra.mxu0 0
        %3137 = vmatprep.subr.bf16.mxu0 0
        %3138 = vmatpush1.bf16.msra.mxu0 0
        %3139 = vmatprep.subr.bf16.mxu0 0
        %3140 = vmatpush1.bf16.msra.mxu0 0
        %3141 = vmatprep.subr.bf16.mxu0 0
        %3142 = vmatpush1.bf16.msra.mxu0 0
        %3143 = vmatprep.subr.bf16.mxu0 0
        %3144 = vmatpush1.bf16.msra.mxu0 0
        %3145 = vmatprep.subr.bf16.mxu0 0
        %3146 = vmatpush1.bf16.msra.mxu0 0
        %3147 = vmatprep.subr.bf16.mxu0 0
        %3148 = vmatpush1.bf16.msra.mxu0 0
        %3149 = vmatprep.subr.bf16.mxu0 0
        %3150 = vmatpush1.bf16.msra.mxu0 0
        %3151 = vmatprep.subr.bf16.mxu0 0
        %3152 = vmatpush1.bf16.msra.mxu0 0
        %3153 = vmatprep.subr.bf16.mxu0 0
        %3154 = vmatpush1.bf16.msra.mxu0 0
        %3155 = vmatprep.subr.bf16.mxu0 0
        %3156 = vmatpush1.bf16.msra.mxu0 0
        %3157 = vmatprep.mubr.bf16.mxu0 0
        %3158 = vmatmul.mubr.bf16.gmra.mrb[0].mxu0 %v3120
        %v3159 = vpop.f32.mrb[0].mxu0
        %v3160 = vadd.f32 0.0, %v3159
        %v3161 = vpop.f32.mrb[0].mxu0
        %v3162 = vpop.f32.mrb[0].mxu0
        %v3163 = vpop.f32.mrb[0].mxu0
        %3164 = vdwg.mxu0
        %3165 = vst.msk [vmem:[#allocation2 + $0x8] sm:$0xff] %vm1388, %v3160
        // Predicated region
        $region197: #{tpu_custom_call.1} parent=115 // pred_check
          %p3166 = pneg %p1299
        $region198: #{tpu_custom_call.1} parent=115 // pred_check_branch
          %3168 = sbr.rel (%p3166) target = $region200
        $region199: #{tpu_custom_call.1} parent=115 // pred_region
          %s3169 = scalar_lea.vmem [#allocation23], 32
          %3170 = vst.msk [vmem:[%s3169] sm:$0xff] %vm2622, %v3115
        $region200: #{tpu_custom_call.1} parent=115 // pred_fallthru
          _
        %3171 = vrot.lane.b32.xlu0 %v3053, 120
        %v3172 = vpop.permute.xlu0 %3171
        %3173 = vrot.lane.b32.xlu0 %v3058, 120
        %v3174 = vpop.permute.xlu0 %3173
        %v3176 = vsel %vm1388, %v3172, 0
        %v3179 = vsel %vm1388, %v3174, 0
        %3181 = vmatprep.subr.bf16.mxu0 0
        %3182 = vmatpush1.bf16.xpose.msra.mxu0 %v3179
        %3183 = vmatprep.subr.bf16.mxu0 0
        %3184 = vmatpush1.bf16.xpose.msra.mxu0 0
        %3185 = vmatprep.subr.bf16.mxu0 0
        %3186 = vmatpush1.bf16.xpose.msra.mxu0 0
        %3187 = vmatprep.subr.bf16.mxu0 0
        %3188 = vmatpush1.bf16.xpose.msra.mxu0 0
        %3189 = vmatprep.subr.bf16.mxu0 0
        %3190 = vmatpush1.bf16.xpose.msra.mxu0 0
        %3191 = vmatprep.subr.bf16.mxu0 0
        %3192 = vmatpush1.bf16.xpose.msra.mxu0 0
        %3193 = vmatprep.subr.bf16.mxu0 0
        %3194 = vmatpush1.bf16.xpose.msra.mxu0 0
        %3195 = vmatprep.subr.bf16.mxu0 0
        %3196 = vmatpush1.bf16.xpose.msra.mxu0 0
        %3197 = vmatprep.subr.bf16.mxu0 0
        %3198 = vmatpush1.bf16.xpose.msra.mxu0 0
        %3199 = vmatprep.subr.bf16.mxu0 0
        %3200 = vmatpush1.bf16.xpose.msra.mxu0 0
        %3201 = vmatprep.subr.bf16.mxu0 0
        %3202 = vmatpush1.bf16.xpose.msra.mxu0 0
        %3203 = vmatprep.subr.bf16.mxu0 0
        %3204 = vmatpush1.bf16.xpose.msra.mxu0 0
        %3205 = vmatprep.subr.bf16.mxu0 0
        %3206 = vmatpush1.bf16.xpose.msra.mxu0 0
        %3207 = vmatprep.subr.bf16.mxu0 0
        %3208 = vmatpush1.bf16.xpose.msra.mxu0 0
        %3209 = vmatprep.subr.bf16.mxu0 0
        %3210 = vmatpush1.bf16.xpose.msra.mxu0 0
        %3211 = vmatprep.subr.bf16.mxu0 0
        %3212 = vmatpush1.bf16.xpose.msra.mxu0 0
        %3213 = vmatprep.mubr.bf16.mxu0 0
        %3214 = vmatmul.mubr.bf16.gmra.mrb[0].mxu0 %v3176
        %v3215 = vpop.f32.mrb[0].mxu0
        %v3216 = vadd.f32 %v3052, %v3215
        %v3217 = vpop.f32.mrb[0].mxu0
        %v3218 = vpop.f32.mrb[0].mxu0
        %v3219 = vpop.f32.mrb[0].mxu0
        %3220 = vdwg.mxu0
        %v3221 = vsel %vm2622, %v3216, -inf
        %3222 = vmax.xlane.f32.xlu0 %v3221
        %v3223 = vpop.xlane.xlu0 %3222
        %v3224 = vsub.f32 %v3216, %v3223
        %v3225 = vmul.f32 %v3224, 1.442695
        %v3226 = vpow.pop %v3225
        %v3227 = vsel %vm2622, %v3226, 0.0
        %3228 = vadd.xlane.f32.xlu0 %v3227
        %v3229 = vpop.xlane.xlu0 %3228
        %v3230 = vrcp.pop %v3229
        %v3231 = vmul.f32 %v3226, %v3230
        %v3232 = vpack.c.bf16 %v3231, %v3231
        %3233 = vrot.lane.b32.xlu0 %v3058, 88
        %v3234 = vpop.permute.xlu0 %3233
        %v3236 = vsel %vm2622, %v3232, 0
        %v3239 = vsel %vm2641, %v3234, 0
        %3241 = vmatprep.subr.bf16.mxu0 0
        %3242 = vmatpush1.bf16.msra.mxu0 %v3239
        %3243 = vmatprep.subr.bf16.mxu0 0
        %3244 = vmatpush1.bf16.msra.mxu0 0
        %3245 = vmatprep.subr.bf16.mxu0 0
        %3246 = vmatpush1.bf16.msra.mxu0 0
        %3247 = vmatprep.subr.bf16.mxu0 0
        %3248 = vmatpush1.bf16.msra.mxu0 0
        %3249 = vmatprep.subr.bf16.mxu0 0
        %3250 = vmatpush1.bf16.msra.mxu0 0
        %3251 = vmatprep.subr.bf16.mxu0 0
        %3252 = vmatpush1.bf16.msra.mxu0 0
        %3253 = vmatprep.subr.bf16.mxu0 0
        %3254 = vmatpush1.bf16.msra.mxu0 0
        %3255 = vmatprep.subr.bf16.mxu0 0
        %3256 = vmatpush1.bf16.msra.mxu0 0
        %3257 = vmatprep.subr.bf16.mxu0 0
        %3258 = vmatpush1.bf16.msra.mxu0 0
        %3259 = vmatprep.subr.bf16.mxu0 0
        %3260 = vmatpush1.bf16.msra.mxu0 0
        %3261 = vmatprep.subr.bf16.mxu0 0
        %3262 = vmatpush1.bf16.msra.mxu0 0
        %3263 = vmatprep.subr.bf16.mxu0 0
        %3264 = vmatpush1.bf16.msra.mxu0 0
        %3265 = vmatprep.subr.bf16.mxu0 0
        %3266 = vmatpush1.bf16.msra.mxu0 0
        %3267 = vmatprep.subr.bf16.mxu0 0
        %3268 = vmatpush1.bf16.msra.mxu0 0
        %3269 = vmatprep.subr.bf16.mxu0 0
        %3270 = vmatpush1.bf16.msra.mxu0 0
        %3271 = vmatprep.subr.bf16.mxu0 0
        %3272 = vmatpush1.bf16.msra.mxu0 0
        %3273 = vmatprep.mubr.bf16.mxu0 0
        %3274 = vmatmul.mubr.bf16.gmra.mrb[0].mxu0 %v3236
        %v3275 = vpop.f32.mrb[0].mxu0
        %v3276 = vadd.f32 0.0, %v3275
        %v3277 = vpop.f32.mrb[0].mxu0
        %v3278 = vpop.f32.mrb[0].mxu0
        %v3279 = vpop.f32.mrb[0].mxu0
        %3280 = vdwg.mxu0
        %3282 = vrot.lane.b32.xlu0 %v3276, 8
        %v3283 = vpop.permute.xlu0 %3282
        %3285 = vst.msk [vmem:[#allocation2 + $0x8] sm:$0xff] %vm1611, %v3283
        // Predicated region
        $region201: #{tpu_custom_call.1} parent=115 // pred_check
          %p3286 = pneg %p1299
        $region202: #{tpu_custom_call.1} parent=115 // pred_check_branch
          %3288 = sbr.rel (%p3286) target = $region204
        $region203: #{tpu_custom_call.1} parent=115 // pred_region
          %s3289 = scalar_lea.vmem [#allocation23], 40
          %3290 = vst.msk [vmem:[%s3289] sm:$0xff] %vm2622, %v3231
        $region204: #{tpu_custom_call.1} parent=115 // pred_fallthru
          _
        %3291 = vrot.lane.b32.xlu0 %v3053, 112
        %v3292 = vpop.permute.xlu0 %3291
        %3293 = vrot.lane.b32.xlu0 %v3058, 112
        %v3294 = vpop.permute.xlu0 %3293
        %v3296 = vsel %vm1388, %v3292, 0
        %v3299 = vsel %vm1388, %v3294, 0
        %3301 = vmatprep.subr.bf16.mxu0 0
        %3302 = vmatpush1.bf16.xpose.msra.mxu0 %v3299
        %3303 = vmatprep.subr.bf16.mxu0 0
        %3304 = vmatpush1.bf16.xpose.msra.mxu0 0
        %3305 = vmatprep.subr.bf16.mxu0 0
        %3306 = vmatpush1.bf16.xpose.msra.mxu0 0
        %3307 = vmatprep.subr.bf16.mxu0 0
        %3308 = vmatpush1.bf16.xpose.msra.mxu0 0
        %3309 = vmatprep.subr.bf16.mxu0 0
        %3310 = vmatpush1.bf16.xpose.msra.mxu0 0
        %3311 = vmatprep.subr.bf16.mxu0 0
        %3312 = vmatpush1.bf16.xpose.msra.mxu0 0
        %3313 = vmatprep.subr.bf16.mxu0 0
        %3314 = vmatpush1.bf16.xpose.msra.mxu0 0
        %3315 = vmatprep.subr.bf16.mxu0 0
        %3316 = vmatpush1.bf16.xpose.msra.mxu0 0
        %3317 = vmatprep.subr.bf16.mxu0 0
        %3318 = vmatpush1.bf16.xpose.msra.mxu0 0
        %3319 = vmatprep.subr.bf16.mxu0 0
        %3320 = vmatpush1.bf16.xpose.msra.mxu0 0
        %3321 = vmatprep.subr.bf16.mxu0 0
        %3322 = vmatpush1.bf16.xpose.msra.mxu0 0
        %3323 = vmatprep.subr.bf16.mxu0 0
        %3324 = vmatpush1.bf16.xpose.msra.mxu0 0
        %3325 = vmatprep.subr.bf16.mxu0 0
        %3326 = vmatpush1.bf16.xpose.msra.mxu0 0
        %3327 = vmatprep.subr.bf16.mxu0 0
        %3328 = vmatpush1.bf16.xpose.msra.mxu0 0
        %3329 = vmatprep.subr.bf16.mxu0 0
        %3330 = vmatpush1.bf16.xpose.msra.mxu0 0
        %3331 = vmatprep.subr.bf16.mxu0 0
        %3332 = vmatpush1.bf16.xpose.msra.mxu0 0
        %3333 = vmatprep.mubr.bf16.mxu0 0
        %3334 = vmatmul.mubr.bf16.gmra.mrb[0].mxu0 %v3296
        %v3335 = vpop.f32.mrb[0].mxu0
        %v3336 = vadd.f32 %v3052, %v3335
        %v3337 = vpop.f32.mrb[0].mxu0
        %v3338 = vpop.f32.mrb[0].mxu0
        %v3339 = vpop.f32.mrb[0].mxu0
        %3340 = vdwg.mxu0
        %v3341 = vsel %vm2622, %v3336, -inf
        %3342 = vmax.xlane.f32.xlu0 %v3341
        %v3343 = vpop.xlane.xlu0 %3342
        %v3344 = vsub.f32 %v3336, %v3343
        %v3345 = vmul.f32 %v3344, 1.442695
        %v3346 = vpow.pop %v3345
        %v3347 = vsel %vm2622, %v3346, 0.0
        %3348 = vadd.xlane.f32.xlu0 %v3347
        %v3349 = vpop.xlane.xlu0 %3348
        %v3350 = vrcp.pop %v3349
        %v3351 = vmul.f32 %v3346, %v3350
        %v3352 = vpack.c.bf16 %v3351, %v3351
        %3353 = vrot.lane.b32.xlu0 %v3058, 80
        %v3354 = vpop.permute.xlu0 %3353
        %v3356 = vsel %vm2622, %v3352, 0
        %v3359 = vsel %vm2641, %v3354, 0
        %3361 = vmatprep.subr.bf16.mxu0 0
        %3362 = vmatpush1.bf16.msra.mxu0 %v3359
        %3363 = vmatprep.subr.bf16.mxu0 0
        %3364 = vmatpush1.bf16.msra.mxu0 0
        %3365 = vmatprep.subr.bf16.mxu0 0
        %3366 = vmatpush1.bf16.msra.mxu0 0
        %3367 = vmatprep.subr.bf16.mxu0 0
        %3368 = vmatpush1.bf16.msra.mxu0 0
        %3369 = vmatprep.subr.bf16.mxu0 0
        %3370 = vmatpush1.bf16.msra.mxu0 0
        %3371 = vmatprep.subr.bf16.mxu0 0
        %3372 = vmatpush1.bf16.msra.mxu0 0
        %3373 = vmatprep.subr.bf16.mxu0 0
        %3374 = vmatpush1.bf16.msra.mxu0 0
        %3375 = vmatprep.subr.bf16.mxu0 0
        %3376 = vmatpush1.bf16.msra.mxu0 0
        %3377 = vmatprep.subr.bf16.mxu0 0
        %3378 = vmatpush1.bf16.msra.mxu0 0
        %3379 = vmatprep.subr.bf16.mxu0 0
        %3380 = vmatpush1.bf16.msra.mxu0 0
        %3381 = vmatprep.subr.bf16.mxu0 0
        %3382 = vmatpush1.bf16.msra.mxu0 0
        %3383 = vmatprep.subr.bf16.mxu0 0
        %3384 = vmatpush1.bf16.msra.mxu0 0
        %3385 = vmatprep.subr.bf16.mxu0 0
        %3386 = vmatpush1.bf16.msra.mxu0 0
        %3387 = vmatprep.subr.bf16.mxu0 0
        %3388 = vmatpush1.bf16.msra.mxu0 0
        %3389 = vmatprep.subr.bf16.mxu0 0
        %3390 = vmatpush1.bf16.msra.mxu0 0
        %3391 = vmatprep.subr.bf16.mxu0 0
        %3392 = vmatpush1.bf16.msra.mxu0 0
        %3393 = vmatprep.mubr.bf16.mxu0 0
        %3394 = vmatmul.mubr.bf16.gmra.mrb[0].mxu0 %v3356
        %v3395 = vpop.f32.mrb[0].mxu0
        %v3396 = vadd.f32 0.0, %v3395
        %v3397 = vpop.f32.mrb[0].mxu0
        %v3398 = vpop.f32.mrb[0].mxu0
        %v3399 = vpop.f32.mrb[0].mxu0
        %3400 = vdwg.mxu0
        %3402 = vrot.lane.b32.xlu0 %v3396, 16
        %v3403 = vpop.permute.xlu0 %3402
        %3405 = vst.msk [vmem:[#allocation2 + $0x8] sm:$0xff] %vm1727, %v3403
        // Predicated region
        $region205: #{tpu_custom_call.1} parent=115 // pred_check
          %p3406 = pneg %p1299
        $region206: #{tpu_custom_call.1} parent=115 // pred_check_branch
          %3408 = sbr.rel (%p3406) target = $region208
        $region207: #{tpu_custom_call.1} parent=115 // pred_region
          %s3409 = scalar_lea.vmem [#allocation23], 48
          %3410 = vst.msk [vmem:[%s3409] sm:$0xff] %vm2622, %v3351
        $region208: #{tpu_custom_call.1} parent=115 // pred_fallthru
          _
        %3411 = vrot.lane.b32.xlu0 %v3053, 104
        %v3412 = vpop.permute.xlu0 %3411
        %3413 = vrot.lane.b32.xlu0 %v3058, 104
        %v3414 = vpop.permute.xlu0 %3413
        %v3416 = vsel %vm1388, %v3412, 0
        %v3419 = vsel %vm1388, %v3414, 0
        %3421 = vmatprep.subr.bf16.mxu0 0
        %3422 = vmatpush1.bf16.xpose.msra.mxu0 %v3419
        %3423 = vmatprep.subr.bf16.mxu0 0
        %3424 = vmatpush1.bf16.xpose.msra.mxu0 0
        %3425 = vmatprep.subr.bf16.mxu0 0
        %3426 = vmatpush1.bf16.xpose.msra.mxu0 0
        %3427 = vmatprep.subr.bf16.mxu0 0
        %3428 = vmatpush1.bf16.xpose.msra.mxu0 0
        %3429 = vmatprep.subr.bf16.mxu0 0
        %3430 = vmatpush1.bf16.xpose.msra.mxu0 0
        %3431 = vmatprep.subr.bf16.mxu0 0
        %3432 = vmatpush1.bf16.xpose.msra.mxu0 0
        %3433 = vmatprep.subr.bf16.mxu0 0
        %3434 = vmatpush1.bf16.xpose.msra.mxu0 0
        %3435 = vmatprep.subr.bf16.mxu0 0
        %3436 = vmatpush1.bf16.xpose.msra.mxu0 0
        %3437 = vmatprep.subr.bf16.mxu0 0
        %3438 = vmatpush1.bf16.xpose.msra.mxu0 0
        %3439 = vmatprep.subr.bf16.mxu0 0
        %3440 = vmatpush1.bf16.xpose.msra.mxu0 0
        %3441 = vmatprep.subr.bf16.mxu0 0
        %3442 = vmatpush1.bf16.xpose.msra.mxu0 0
        %3443 = vmatprep.subr.bf16.mxu0 0
        %3444 = vmatpush1.bf16.xpose.msra.mxu0 0
        %3445 = vmatprep.subr.bf16.mxu0 0
        %3446 = vmatpush1.bf16.xpose.msra.mxu0 0
        %3447 = vmatprep.subr.bf16.mxu0 0
        %3448 = vmatpush1.bf16.xpose.msra.mxu0 0
        %3449 = vmatprep.subr.bf16.mxu0 0
        %3450 = vmatpush1.bf16.xpose.msra.mxu0 0
        %3451 = vmatprep.subr.bf16.mxu0 0
        %3452 = vmatpush1.bf16.xpose.msra.mxu0 0
        %3453 = vmatprep.mubr.bf16.mxu0 0
        %3454 = vmatmul.mubr.bf16.gmra.mrb[0].mxu0 %v3416
        %v3455 = vpop.f32.mrb[0].mxu0
        %v3456 = vadd.f32 %v3052, %v3455
        %v3457 = vpop.f32.mrb[0].mxu0
        %v3458 = vpop.f32.mrb[0].mxu0
        %v3459 = vpop.f32.mrb[0].mxu0
        %3460 = vdwg.mxu0
        %v3461 = vsel %vm2622, %v3456, -inf
        %3462 = vmax.xlane.f32.xlu0 %v3461
        %v3463 = vpop.xlane.xlu0 %3462
        %v3464 = vsub.f32 %v3456, %v3463
        %v3465 = vmul.f32 %v3464, 1.442695
        %v3466 = vpow.pop %v3465
        %v3467 = vsel %vm2622, %v3466, 0.0
        %3468 = vadd.xlane.f32.xlu0 %v3467
        %v3469 = vpop.xlane.xlu0 %3468
        %v3470 = vrcp.pop %v3469
        %v3471 = vmul.f32 %v3466, %v3470
        %v3472 = vpack.c.bf16 %v3471, %v3471
        %3473 = vrot.lane.b32.xlu0 %v3058, 72
        %v3474 = vpop.permute.xlu0 %3473
        %v3476 = vsel %vm2622, %v3472, 0
        %v3479 = vsel %vm2641, %v3474, 0
        %3481 = vmatprep.subr.bf16.mxu0 0
        %3482 = vmatpush1.bf16.msra.mxu0 %v3479
        %3483 = vmatprep.subr.bf16.mxu0 0
        %3484 = vmatpush1.bf16.msra.mxu0 0
        %3485 = vmatprep.subr.bf16.mxu0 0
        %3486 = vmatpush1.bf16.msra.mxu0 0
        %3487 = vmatprep.subr.bf16.mxu0 0
        %3488 = vmatpush1.bf16.msra.mxu0 0
        %3489 = vmatprep.subr.bf16.mxu0 0
        %3490 = vmatpush1.bf16.msra.mxu0 0
        %3491 = vmatprep.subr.bf16.mxu0 0
        %3492 = vmatpush1.bf16.msra.mxu0 0
        %3493 = vmatprep.subr.bf16.mxu0 0
        %3494 = vmatpush1.bf16.msra.mxu0 0
        %3495 = vmatprep.subr.bf16.mxu0 0
        %3496 = vmatpush1.bf16.msra.mxu0 0
        %3497 = vmatprep.subr.bf16.mxu0 0
        %3498 = vmatpush1.bf16.msra.mxu0 0
        %3499 = vmatprep.subr.bf16.mxu0 0
        %3500 = vmatpush1.bf16.msra.mxu0 0
        %3501 = vmatprep.subr.bf16.mxu0 0
        %3502 = vmatpush1.bf16.msra.mxu0 0
        %3503 = vmatprep.subr.bf16.mxu0 0
        %3504 = vmatpush1.bf16.msra.mxu0 0
        %3505 = vmatprep.subr.bf16.mxu0 0
        %3506 = vmatpush1.bf16.msra.mxu0 0
        %3507 = vmatprep.subr.bf16.mxu0 0
        %3508 = vmatpush1.bf16.msra.mxu0 0
        %3509 = vmatprep.subr.bf16.mxu0 0
        %3510 = vmatpush1.bf16.msra.mxu0 0
        %3511 = vmatprep.subr.bf16.mxu0 0
        %3512 = vmatpush1.bf16.msra.mxu0 0
        %3513 = vmatprep.mubr.bf16.mxu0 0
        %3514 = vmatmul.mubr.bf16.gmra.mrb[0].mxu0 %v3476
        %v3515 = vpop.f32.mrb[0].mxu0
        %v3516 = vadd.f32 0.0, %v3515
        %v3517 = vpop.f32.mrb[0].mxu0
        %v3518 = vpop.f32.mrb[0].mxu0
        %v3519 = vpop.f32.mrb[0].mxu0
        %3520 = vdwg.mxu0
        %3522 = vrot.lane.b32.xlu0 %v3516, 24
        %v3523 = vpop.permute.xlu0 %3522
        %3525 = vst.msk [vmem:[#allocation2 + $0x8] sm:$0xff] %vm1843, %v3523
        // Predicated region
        $region209: #{tpu_custom_call.1} parent=115 // pred_check
          %p3526 = pneg %p1299
        $region210: #{tpu_custom_call.1} parent=115 // pred_check_branch
          %3528 = sbr.rel (%p3526) target = $region212
        $region211: #{tpu_custom_call.1} parent=115 // pred_region
          %s3529 = scalar_lea.vmem [#allocation23], 56
          %3530 = vst.msk [vmem:[%s3529] sm:$0xff] %vm2622, %v3471
        $region212: #{tpu_custom_call.1} parent=115 // pred_fallthru
          _
        %v3531 = vld [vmem:[#allocation2] sm:$0xff]
        %v3532 = vld [vmem:[#allocation2 + $0x8] sm:$0xff]
        %v3533 = vpack.c.bf16 %v3532, %v3531
        %v3534 = vld [vmem:[%s1072] sm:$0xf]
        %v3535 = vld [vmem:[%s1072 + $0x4] sm:$0xf]
        %v3536 = vld [vmem:[%s1072 + $0x8] sm:$0xf]
        %v3537 = vld [vmem:[%s1072 + $0xc] sm:$0xf]
        %v3538 = vld [vmem:[%s1080] sm:$0x1]
        %v3540 = vlaneseq
        %v3541 = vshrl.u32 %v3540, 7
        %v3542 = vsub.s32 0, %v3541
        %v3543 = vrot.slane %v3538, %v3542
        %v3549 = vunpack.c.l.b16 %v3534
        %v3550 = vunpack.c.l.b16 %v3535
        %v3551 = vunpack.c.l.b16 %v3536
        %v3552 = vunpack.c.l.b16 %v3537
        %v3553 = vpack.c.b16 %v3550, %v3549
        %v3554 = vpack.c.b16 %v3552, %v3551
        %v3558 = vsel %vm1338, %v3533, 0
        %3560 = vmatprep.subr.bf16.mxu0 0
        %3561 = vmatpush1.bf16.msra.mxu0 %v3553
        %3562 = vmatprep.subr.bf16.mxu0 0
        %3563 = vmatpush1.bf16.msra.mxu0 %v3554
        %3564 = vmatprep.subr.bf16.mxu0 0
        %3565 = vmatpush1.bf16.msra.mxu0 0
        %3566 = vmatprep.subr.bf16.mxu0 0
        %3567 = vmatpush1.bf16.msra.mxu0 0
        %3568 = vmatprep.subr.bf16.mxu0 0
        %3569 = vmatpush1.bf16.msra.mxu0 0
        %3570 = vmatprep.subr.bf16.mxu0 0
        %3571 = vmatpush1.bf16.msra.mxu0 0
        %3572 = vmatprep.subr.bf16.mxu0 0
        %3573 = vmatpush1.bf16.msra.mxu0 0
        %3574 = vmatprep.subr.bf16.mxu0 0
        %3575 = vmatpush1.bf16.msra.mxu0 0
        %3576 = vmatprep.subr.bf16.mxu0 0
        %3577 = vmatpush1.bf16.msra.mxu0 0
        %3578 = vmatprep.subr.bf16.mxu0 0
        %3579 = vmatpush1.bf16.msra.mxu0 0
        %3580 = vmatprep.subr.bf16.mxu0 0
        %3581 = vmatpush1.bf16.msra.mxu0 0
        %3582 = vmatprep.subr.bf16.mxu0 0
        %3583 = vmatpush1.bf16.msra.mxu0 0
        %3584 = vmatprep.subr.bf16.mxu0 0
        %3585 = vmatpush1.bf16.msra.mxu0 0
        %3586 = vmatprep.subr.bf16.mxu0 0
        %3587 = vmatpush1.bf16.msra.mxu0 0
        %3588 = vmatprep.subr.bf16.mxu0 0
        %3589 = vmatpush1.bf16.msra.mxu0 0
        %3590 = vmatprep.subr.bf16.mxu0 0
        %3591 = vmatpush1.bf16.msra.mxu0 0
        %3592 = vmatprep.mubr.bf16.mxu0 0
        %3593 = vmatmul.mubr.bf16.gmra.mrb[0].mxu0 %v3558
        %v3594 = vpop.f32.mrb[0].mxu0
        %v3595 = vadd.f32 %v3543, %v3594
        %v3596 = vpop.f32.mrb[0].mxu0
        %v3597 = vpop.f32.mrb[0].mxu0
        %v3598 = vadd.f32 %v3543, %v3597
        %v3599 = vpop.f32.mrb[0].mxu0
        %3600 = vdwg.mxu0
        %v3601 = vadd.f32 %v2417, %v3595
        %v3602 = vadd.f32 %v2418, %v3598
        %v3603 = vsel %vm1338, %v3601, 0.0
        %3604 = vadd.xlane.f32.xlu0 %v3603
        %v3605 = vpop.xlane.xlu0 %3604
        %v3606 = vsel %vm1338, %v3602, 0.0
        %3607 = vadd.xlane.f32.xlu0 %v3606
        %v3608 = vpop.xlane.xlu0 %3607
        %v3609 = vmul.f32 %v3605, %v2380
        %v3610 = vmul.f32 %v3608, %v2380
        %v3611 = vsub.f32 %v3601, %v3609
        %v3612 = vsub.f32 %v3602, %v3610
        %v3613 = vmul.f32 %v3611, %v3611
        %v3614 = vmul.f32 %v3612, %v3612
        %v3615 = vsel %vm1338, %v3613, 0.0
        %3616 = vadd.xlane.f32.xlu0 %v3615
        %v3617 = vpop.xlane.xlu0 %3616
        %v3618 = vsel %vm1338, %v3614, 0.0
        %3619 = vadd.xlane.f32.xlu0 %v3618
        %v3620 = vpop.xlane.xlu0 %3619
        %v3621 = vmul.f32 %v3617, %v2380
        %v3622 = vmul.f32 %v3620, %v2380
        %v3623 = vadd.f32 %v3621, 1e-05
        %v3624 = vadd.f32 %v3622, 1e-05
        %v3625 = vrsqrt.pop %v3623
        %v3626 = vrsqrt.pop %v3624
        %v3627 = vmul.f32 %v3611, %v3625
        %v3628 = vmul.f32 %v3612, %v3626
        %v3629 = vld [vmem:[%s1104] sm:$0x1]
        %v3631 = vlaneseq
        %v3632 = vshrl.u32 %v3631, 7
        %v3633 = vsub.s32 0, %v3632
        %v3634 = vrot.slane %v3629, %v3633
        %v3636 = vmul.f32 %v3627, %v3634
        %v3637 = vmul.f32 %v3628, %v3634
        %v3638 = vld [vmem:[%s1112] sm:$0x1]
        %v3640 = vlaneseq
        %v3641 = vshrl.u32 %v3640, 7
        %v3642 = vsub.s32 0, %v3641
        %v3643 = vrot.slane %v3638, %v3642
        %v3645 = vadd.f32 %v3636, %v3643
        %v3646 = vadd.f32 %v3637, %v3643
        %v3647 = vpack.c.bf16 %v3646, %v3645
        %v3648 = vld [vmem:[%s1121] sm:$0xf]
        %v3649 = vld [vmem:[%s1121 + $0x4] sm:$0xf]
        %v3650 = vld [vmem:[%s1121 + $0x8] sm:$0xf]
        %v3651 = vld [vmem:[%s1121 + $0xc] sm:$0xf]
        %v3652 = vld [vmem:[%s1289] sm:$0x1]
        %v3654 = vlaneseq
        %v3655 = vshrl.u32 %v3654, 7
        %v3656 = vsub.s32 0, %v3655
        %v3657 = vrot.slane %v3652, %v3656
        %v3663 = vunpack.c.l.b16 %v3648
        %v3664 = vunpack.c.l.b16 %v3649
        %v3665 = vunpack.c.l.b16 %v3650
        %v3666 = vunpack.c.l.b16 %v3651
        %v3667 = vpack.c.b16 %v3664, %v3663
        %v3668 = vpack.c.b16 %v3666, %v3665
        %v3672 = vsel %vm1338, %v3647, 0
        %3674 = vmatprep.subr.bf16.mxu0 0
        %3675 = vmatpush1.bf16.msra.mxu0 %v3667
        %3676 = vmatprep.subr.bf16.mxu0 0
        %3677 = vmatpush1.bf16.msra.mxu0 %v3668
        %3678 = vmatprep.subr.bf16.mxu0 0
        %3679 = vmatpush1.bf16.msra.mxu0 0
        %3680 = vmatprep.subr.bf16.mxu0 0
        %3681 = vmatpush1.bf16.msra.mxu0 0
        %3682 = vmatprep.subr.bf16.mxu0 0
        %3683 = vmatpush1.bf16.msra.mxu0 0
        %3684 = vmatprep.subr.bf16.mxu0 0
        %3685 = vmatpush1.bf16.msra.mxu0 0
        %3686 = vmatprep.subr.bf16.mxu0 0
        %3687 = vmatpush1.bf16.msra.mxu0 0
        %3688 = vmatprep.subr.bf16.mxu0 0
        %3689 = vmatpush1.bf16.msra.mxu0 0
        %3690 = vmatprep.subr.bf16.mxu0 0
        %3691 = vmatpush1.bf16.msra.mxu0 0
        %3692 = vmatprep.subr.bf16.mxu0 0
        %3693 = vmatpush1.bf16.msra.mxu0 0
        %3694 = vmatprep.subr.bf16.mxu0 0
        %3695 = vmatpush1.bf16.msra.mxu0 0
        %3696 = vmatprep.subr.bf16.mxu0 0
        %3697 = vmatpush1.bf16.msra.mxu0 0
        %3698 = vmatprep.subr.bf16.mxu0 0
        %3699 = vmatpush1.bf16.msra.mxu0 0
        %3700 = vmatprep.subr.bf16.mxu0 0
        %3701 = vmatpush1.bf16.msra.mxu0 0
        %3702 = vmatprep.subr.bf16.mxu0 0
        %3703 = vmatpush1.bf16.msra.mxu0 0
        %3704 = vmatprep.subr.bf16.mxu0 0
        %3705 = vmatpush1.bf16.msra.mxu0 0
        %3706 = vmatprep.mubr.bf16.mxu0 0
        %3707 = vmatmul.mubr.bf16.gmra.mrb[0].mxu0 %v3672
        %v3708 = vpop.f32.mrb[0].mxu0
        %v3709 = vadd.f32 %v3657, %v3708
        %v3710 = vpop.f32.mrb[0].mxu0
        %v3711 = vpop.f32.mrb[0].mxu0
        %v3712 = vadd.f32 %v3657, %v3711
        %v3713 = vpop.f32.mrb[0].mxu0
        %3714 = vdwg.mxu0
        %v3715 = vmax.f32 %v3709, 0.0
        %v3716 = vmax.f32 %v3712, 0.0
        %v3717 = vpack.c.bf16 %v3716, %v3715
        %v3718 = vld [vmem:[%s1294] sm:$0xf]
        %v3719 = vld [vmem:[%s1294 + $0x4] sm:$0xf]
        %v3720 = vld [vmem:[%s1294 + $0x8] sm:$0xf]
        %v3721 = vld [vmem:[%s1294 + $0xc] sm:$0xf]
        %v3722 = vld [vmem:[%s1294 + $0x10] sm:$0xf]
        %v3723 = vld [vmem:[%s1294 + $0x14] sm:$0xf]
        %v3724 = vld [vmem:[%s1294 + $0x18] sm:$0xf]
        %v3725 = vld [vmem:[%s1294 + $0x1c] sm:$0xf]
        %v3726 = vld [vmem:[%s1297] sm:$0x1]
        %v3728 = vlaneseq
        %v3729 = vshrl.u32 %v3728, 7
        %v3730 = vsub.s32 0, %v3729
        %v3731 = vrot.slane %v3726, %v3730
        %v3741 = vunpack.c.l.b16 %v3718
        %v3742 = vunpack.c.l.b16 %v3719
        %v3743 = vunpack.c.l.b16 %v3720
        %v3744 = vunpack.c.l.b16 %v3721
        %v3745 = vunpack.c.l.b16 %v3722
        %v3746 = vunpack.c.l.b16 %v3723
        %v3747 = vunpack.c.l.b16 %v3724
        %v3748 = vunpack.c.l.b16 %v3725
        %v3749 = vpack.c.b16 %v3742, %v3741
        %v3750 = vpack.c.b16 %v3744, %v3743
        %v3751 = vpack.c.b16 %v3746, %v3745
        %v3752 = vpack.c.b16 %v3748, %v3747
        %vm3757 = vcmask 523264
        %v3759 = vsel %vm3757, %v3717, 0
        %3761 = vmatprep.subr.bf16.mxu0 0
        %3762 = vmatpush1.bf16.msra.mxu0 %v3749
        %3763 = vmatprep.subr.bf16.mxu0 0
        %3764 = vmatpush1.bf16.msra.mxu0 %v3750
        %3765 = vmatprep.subr.bf16.mxu0 0
        %3766 = vmatpush1.bf16.msra.mxu0 %v3751
        %3767 = vmatprep.subr.bf16.mxu0 0
        %3768 = vmatpush1.bf16.msra.mxu0 %v3752
        %3769 = vmatprep.subr.bf16.mxu0 0
        %3770 = vmatpush1.bf16.msra.mxu0 0
        %3771 = vmatprep.subr.bf16.mxu0 0
        %3772 = vmatpush1.bf16.msra.mxu0 0
        %3773 = vmatprep.subr.bf16.mxu0 0
        %3774 = vmatpush1.bf16.msra.mxu0 0
        %3775 = vmatprep.subr.bf16.mxu0 0
        %3776 = vmatpush1.bf16.msra.mxu0 0
        %3777 = vmatprep.subr.bf16.mxu0 0
        %3778 = vmatpush1.bf16.msra.mxu0 0
        %3779 = vmatprep.subr.bf16.mxu0 0
        %3780 = vmatpush1.bf16.msra.mxu0 0
        %3781 = vmatprep.subr.bf16.mxu0 0
        %3782 = vmatpush1.bf16.msra.mxu0 0
        %3783 = vmatprep.subr.bf16.mxu0 0
        %3784 = vmatpush1.bf16.msra.mxu0 0
        %3785 = vmatprep.subr.bf16.mxu0 0
        %3786 = vmatpush1.bf16.msra.mxu0 0
        %3787 = vmatprep.subr.bf16.mxu0 0
        %3788 = vmatpush1.bf16.msra.mxu0 0
        %3789 = vmatprep.subr.bf16.mxu0 0
        %3790 = vmatpush1.bf16.msra.mxu0 0
        %3791 = vmatprep.subr.bf16.mxu0 0
        %3792 = vmatpush1.bf16.msra.mxu0 0
        %3793 = vmatprep.mubr.bf16.mxu0 0
        %3794 = vmatmul.mubr.bf16.gmra.mrb[0].mxu0 %v3759
        %v3795 = vpop.f32.mrb[0].mxu0
        %v3796 = vadd.f32 %v3731, %v3795
        %v3797 = vpop.f32.mrb[0].mxu0
        %v3798 = vpop.f32.mrb[0].mxu0
        %v3799 = vadd.f32 %v3731, %v3798
        %v3800 = vpop.f32.mrb[0].mxu0
        %3801 = vdwg.mxu0
        %v3802 = vadd.f32 %v3645, %v3796
        %v3803 = vadd.f32 %v3646, %v3799
        %v3804 = vsel %vm1338, %v3802, 0.0
        %3805 = vadd.xlane.f32.xlu0 %v3804
        %v3806 = vpop.xlane.xlu0 %3805
        %v3807 = vsel %vm1338, %v3803, 0.0
        %3808 = vadd.xlane.f32.xlu0 %v3807
        %v3809 = vpop.xlane.xlu0 %3808
        %v3810 = vmul.f32 %v3806, %v2380
        %v3811 = vmul.f32 %v3809, %v2380
        %v3812 = vsub.f32 %v3802, %v3810
        %v3813 = vsub.f32 %v3803, %v3811
        %v3814 = vmul.f32 %v3812, %v3812
        %v3815 = vmul.f32 %v3813, %v3813
        %v3816 = vsel %vm1338, %v3814, 0.0
        %3817 = vadd.xlane.f32.xlu0 %v3816
        %v3818 = vpop.xlane.xlu0 %3817
        %v3819 = vsel %vm1338, %v3815, 0.0
        %3820 = vadd.xlane.f32.xlu0 %v3819
        %v3821 = vpop.xlane.xlu0 %3820
        %v3822 = vmul.f32 %v3818, %v2380
        %v3823 = vmul.f32 %v3821, %v2380
        %v3824 = vadd.f32 %v3822, 1e-05
        %v3825 = vadd.f32 %v3823, 1e-05
        %v3826 = vrsqrt.pop %v3824
        %v3827 = vrsqrt.pop %v3825
        %v3828 = vmul.f32 %v3812, %v3826
        %v3829 = vmul.f32 %v3813, %v3827
        %v3830 = vld [vmem:[%s1283] sm:$0x1]
        %v3832 = vlaneseq
        %v3833 = vshrl.u32 %v3832, 7
        %v3834 = vsub.s32 0, %v3833
        %v3835 = vrot.slane %v3830, %v3834
        %v3837 = vmul.f32 %v3828, %v3835
        %v3838 = vmul.f32 %v3829, %v3835
        %v3839 = vld [vmem:[%s1286] sm:$0x1]
        %v3841 = vlaneseq
        %v3842 = vshrl.u32 %v3841, 7
        %v3843 = vsub.s32 0, %v3842
        %v3844 = vrot.slane %v3839, %v3843
        %v3846 = vadd.f32 %v3837, %v3844
        %v3847 = vadd.f32 %v3838, %v3844
        %3848 = vst.msk [vmem:[#allocation22] sm:$0xff] %vm1338, %v3846
        %3849 = vst.msk [vmem:[#allocation22 + $0x8] sm:$0xff] %vm1338, %v3847
        // Predicated region
        $region213: #{tpu_custom_call.1} parent=115 // pred_check
          %p3850 = pneg %p659
        $region214: #{tpu_custom_call.1} parent=115 // pred_check_branch
          %3852 = sbr.rel (%p3850) target = $region216
        $region215: #{tpu_custom_call.1} parent=115 // pred_region
          %s3854 = ssub.s32 256, 256
          %3855 = vsyncadd [#allocation5], %s3854
          %s3856 = sshll.u32 [#allocation22], 4
          %s3857 = int_to_ptr.vmem [resolvable:$true] %s3856
          %3862 = dma.vmem_to_hbm [thread:$0]  %s3857, 256, %s24, [#allocation5], 128, 128, 8
        $region216: #{tpu_custom_call.1} parent=115 // pred_fallthru
          _
        // Predicated region
        $region217: #{tpu_custom_call.1} parent=115 // pred_check
          %p3863 = pneg %p680
        $region218: #{tpu_custom_call.1} parent=115 // pred_check_branch
          %3865 = sbr.rel (%p3863) target = $region220
        $region219: #{tpu_custom_call.1} parent=115 // pred_region
          %s3867 = ssub.s32 1024, 1024
          %3868 = vsyncadd [#allocation24], %s3867
          %s3869 = sshll.u32 [#allocation23], 4
          %s3870 = int_to_ptr.vmem [resolvable:$true] %s3869
          %3875 = dma.vmem_to_hbm [thread:$0]  %s3870, 1024, %s25, [#allocation24], 128, 128, 8
        $region220: #{tpu_custom_call.1} parent=115 // pred_fallthru
          _
        // Predicated region
        $region221: #{tpu_custom_call.1} parent=115 // pred_check
          %p3876 = pneg %p659
        $region222: #{tpu_custom_call.1} parent=115 // pred_check_branch
          %3878 = sbr.rel (%p3876) target = $region224
        $region223: #{tpu_custom_call.1} parent=115 // pred_region
          %3879 = dma.done [#allocation5], 256
        $region224: #{tpu_custom_call.1} parent=115 // pred_fallthru
          _
        // Predicated region
        $region225: #{tpu_custom_call.1} parent=115 // pred_check
          %p3880 = pneg %p680
        $region226: #{tpu_custom_call.1} parent=115 // pred_check_branch
          %3882 = sbr.rel (%p3880) target = $region228
        $region227: #{tpu_custom_call.1} parent=115 // pred_region
          %3883 = dma.done [#allocation24], 1024
        $region228: #{tpu_custom_call.1} parent=115 // pred_fallthru
          _
      $region116: #{tpu_custom_call.1} parent=5 // pred_fallthru
        _
      %p3884 = scmp.le.s32.totalorder 2, %s37
      // Predicated region
      $region229: #{tpu_custom_call.1} parent=5 // pred_check
        %p3885 = pneg %p3884
      $region230: #{tpu_custom_call.1} parent=5 // pred_check_branch
        %3887 = sbr.rel (%p3885) target = $region232
      $region231: #{tpu_custom_call.1} parent=5 // pred_region
        %s3888 = ssub.s32 %s37, 2
      $region232: #{tpu_custom_call.1} parent=5 // pred_fallthru
        _
    $region6: #{tpu_custom_call.1} parent=1 // loop_footer
      %s41 = sadd.s32 1, %s37
    $region7: #{tpu_custom_call.1} parent=1 // loop_footer_branch
      %36 = sbr.rel target = $region3
    $region8: #{tpu_custom_call.1} parent=1 // loop_exit
      _
    %3889 = vsyncpa [#allocation4], 1
    %s3890 = scalar_lea.sflag [#allocation4], 1
    %3891 = vsyncpa %s3890, 1
    %3892 = vsyncpa [#allocation7], 1
    %3893 = vsyncpa [#allocation10], 1
    %3894 = vsyncpa [#allocation5], 1
    %s3895 = scalar_lea.sflag [#allocation5], 1
    %3896 = vsyncpa %s3895, 1
    %3897 = vsyncpa [#allocation24], 1

</llo_original>
